<compile_context>
chip_gen: v7x
topology: tpu7x:2x2x1
jax: 0.10.0
libtpu: 0.0.40
codegen_flags: <defaults>
</compile_context>

<pallas_src>
import jax
import jax.numpy as jnp
from jax.experimental import pallas as pl
from jax.experimental.pallas import tpu as pltpu


def _generic_block_kernel(
    x_ref,
    w1_ref, b1_ref,
    w2_ref, b2_ref,
    w3_ref, b3_ref,
    w4_ref, b4_ref,
    w5_ref, b5_ref,
    wh_ref, bh_ref,
    out_ref,
):
    h = x_ref[...]  # (TILE_B, seq_len) f32

    def fc_relu(h, w_ref, b_ref):
        # bf16 weights on the MXU, f32 accumulation; bias-add/ReLU stay f32 (VPU).
        y = jnp.dot(h.astype(jnp.bfloat16), w_ref[...],
                    preferred_element_type=jnp.float32)
        return jnp.maximum(y + b_ref[...], 0.0)

    h = fc_relu(h, w1_ref, b1_ref)
    h = fc_relu(h, w2_ref, b2_ref)
    h = fc_relu(h, w3_ref, b3_ref)
    h = fc_relu(h, w4_ref, b4_ref)
    h = fc_relu(h, w5_ref, b5_ref)

    # Fused theta->head projection: one MXU pass, one lane-dense output slab.
    out = jnp.dot(h.astype(jnp.bfloat16), wh_ref[...],
                  preferred_element_type=jnp.float32) + bh_ref[...]
    out_ref[...] = out.astype(out_ref.dtype)


def generic_block_forward(x, params, *, tile_b=128):
    """x: (B, seq_len) float32. params: f32 weights stored (in, out), biases (1, out)."""
    B, seq_len = x.shape
    pred_len = params["wfc"].shape[1]

    # ---- offline fusion of theta projections into the heads (no nonlinearity) ----
    #   backcast = (h @ wtb) @ wbc + bbc ;  forecast = (h @ wtf) @ wfc + bfc
    w_bc_eff = params["wtb"] @ params["wbc"]              # (units, seq_len)  f32
    w_fc_eff = params["wtf"] @ params["wfc"]              # (units, pred_len) f32
    w_head = jnp.concatenate([w_bc_eff, w_fc_eff], axis=1).astype(jnp.bfloat16)
    b_head = jnp.concatenate([params["bbc"], params["bfc"]], axis=1)  # f32

    bf = lambda w: w.astype(jnp.bfloat16)
    weights = (
        bf(params["w1"]), params["b1"],
        bf(params["w2"]), params["b2"],
        bf(params["w3"]), params["b3"],
        bf(params["w4"]), params["b4"],
        bf(params["w5"]), params["b5"],
        w_head, b_head,
    )

    # ---- batch tiling: pad B up to a multiple of the batch tile ----
    tb = min(tile_b, max(8, -(-B // 8) * 8))
    b_pad = -(-B // tb) * tb
    x_p = jnp.pad(x, ((0, b_pad - B), (0, 0))) if b_pad != B else x

    n_out = seq_len + pred_len
    grid = (b_pad // tb,)

    def resident(a):
        # Constant index_map: block fetched once, stays VMEM-resident across grid steps.
        return pl.BlockSpec(a.shape, lambda i, _nd=a.ndim: (0,) * _nd)

    in_specs = [pl.BlockSpec((tb, seq_len), lambda i: (i, 0))]
    in_specs += [resident(a) for a in weights]

    out = pl.pallas_call(
        _generic_block_kernel,
        out_shape=jax.ShapeDtypeStruct((b_pad, n_out), jnp.float32),
        grid=grid,
        in_specs=in_specs,
        out_specs=pl.BlockSpec((tb, n_out), lambda i: (i, 0)),
        compiler_params=pltpu.CompilerParams(
            dimension_semantics=("parallel",),
        ),
    )(x_p, *weights)

    backcast = out[:B, :seq_len]
    forecast = out[:B, seq_len:]
    return backcast, forecast


def init_params(key, seq_len, pred_len, thetas_dim, units=512):
    """Deterministic synthetic parameters. Linear weights stored as (in, out), f32."""
    keys = jax.random.split(key, 16)

    def w(k, fan_in, fan_out):
        bound = 1.0 / jnp.sqrt(jnp.float32(fan_in))
        return jax.random.uniform(k, (fan_in, fan_out), jnp.float32, -bound, bound)

    def b(k, fan_in, fan_out):
        bound = 1.0 / jnp.sqrt(jnp.float32(fan_in))
        return jax.random.uniform(k, (1, fan_out), jnp.float32, -bound, bound)

    return {
        "w1": w(keys[0], seq_len, units), "b1": b(keys[1], seq_len, units),
        "w2": w(keys[2], units, units),   "b2": b(keys[3], units, units),
        "w3": w(keys[4], units, units),   "b3": b(keys[5], units, units),
        "w4": w(keys[6], units, units),   "b4": b(keys[7], units, units),
        "w5": w(keys[8], units, units),   "b5": b(keys[9], units, units),
        "wtb": w(keys[10], units, thetas_dim),
        "wtf": w(keys[11], units, thetas_dim),
        "wbc": w(keys[12], thetas_dim, seq_len), "bbc": b(keys[13], thetas_dim, seq_len),
        "wfc": w(keys[14], thetas_dim, pred_len), "bfc": b(keys[15], thetas_dim, pred_len),
    }


if __name__ == "__main__":
    # Small, forward-consistent shapes.
    B, seq_len, pred_len, thetas_dim = 8, 16, 8, 8

    key = jax.random.PRNGKey(0)
    k_x, k_p = jax.random.split(key)
    x = jax.random.normal(k_x, (B, seq_len), jnp.float32)
    params = init_params(k_p, seq_len, pred_len, thetas_dim, units=512)

    backcast, forecast = generic_block_forward(x, params)
    jax.block_until_ready((backcast, forecast))

    # Reference 1: mirrors kernel arithmetic (bf16 weights, f32 accumulation, fused head).
    def ref_bf16(x, p):
        h = x
        for i in (1, 2, 3, 4, 5):
            w = p[f"w{i}"].astype(jnp.bfloat16)
            h = jnp.maximum(
                jnp.dot(h.astype(jnp.bfloat16), w,
                        preferred_element_type=jnp.float32) + p[f"b{i}"], 0.0)
        w_bc = (p["wtb"] @ p["wbc"]).astype(jnp.bfloat16)
        w_fc = (p["wtf"] @ p["wfc"]).astype(jnp.bfloat16)
        bc = jnp.dot(h.astype(jnp.bfloat16), w_bc,
                     preferred_element_type=jnp.float32) + p["bbc"]
        fc = jnp.dot(h.astype(jnp.bfloat16), w_fc,
                     preferred_element_type=jnp.float32) + p["bfc"]
        return bc, fc

    rb16, rf16 = ref_bf16(x, params)
    assert jnp.allclose(backcast, rb16, atol=2e-3, rtol=2e-3)
    assert jnp.allclose(forecast, rf16, atol=2e-3, rtol=2e-3)

    # Reference 2: pure f32 unfused PyTorch-equivalent math (loose tolerance due to
    # bf16 weight storage and fused-head rounding order).
    def ref_f32(x, p):
        h = x
        for i in (1, 2, 3, 4, 5):
            h = jnp.maximum(h @ p[f"w{i}"] + p[f"b{i}"], 0.0)
        tb = h @ p["wtb"]
        tf_ = h @ p["wtf"]
        return tb @ p["wbc"] + p["bbc"], tf_ @ p["wfc"] + p["bfc"]

    rb, rf = ref_f32(x, params)
    assert jnp.allclose(backcast, rb, atol=5e-2, rtol=5e-2)
    assert jnp.allclose(forecast, rf, atol=5e-2, rtol=5e-2)
    assert backcast.shape == (B, seq_len) and forecast.shape == (B, pred_len)

    print("KERNEL_OK")
</pallas_src>

<mosaic_0001>
module attributes {stable_mosaic.version = 11 : i64} {
  func.func @_generic_block_kernel(%arg0: i32, %arg1: memref<8x16xf32, #tpu.memory_space<vmem>>, %arg2: memref<16x512xbf16, #tpu.memory_space<vmem>>, %arg3: memref<1x512xf32, #tpu.memory_space<vmem>>, %arg4: memref<512x512xbf16, #tpu.memory_space<vmem>>, %arg5: memref<1x512xf32, #tpu.memory_space<vmem>>, %arg6: memref<512x512xbf16, #tpu.memory_space<vmem>>, %arg7: memref<1x512xf32, #tpu.memory_space<vmem>>, %arg8: memref<512x512xbf16, #tpu.memory_space<vmem>>, %arg9: memref<1x512xf32, #tpu.memory_space<vmem>>, %arg10: memref<512x512xbf16, #tpu.memory_space<vmem>>, %arg11: memref<1x512xf32, #tpu.memory_space<vmem>>, %arg12: memref<512x24xbf16, #tpu.memory_space<vmem>>, %arg13: memref<1x24xf32, #tpu.memory_space<vmem>>, %arg14: memref<8x24xf32, #tpu.memory_space<vmem>>) attributes {dimension_semantics = [#tpu.dimension_semantics<parallel>], iteration_bounds = array<i64: 1>, scalar_prefetch = 0 : i64, scratch_operands = 0 : i64, tpu.core_type = #tpu.core_type<tc>, window_params = [{transform_indices = @transform_0, window_bounds = array<i64: 8, 16>}, {pipeline_mode = #tpu.pipeline_mode<synchronous>, transform_indices = @transform_1, window_bounds = array<i64: 16, 512>}, {pipeline_mode = #tpu.pipeline_mode<synchronous>, transform_indices = @transform_2, window_bounds = array<i64: 1, 512>}, {pipeline_mode = #tpu.pipeline_mode<synchronous>, transform_indices = @transform_3, window_bounds = array<i64: 512, 512>}, {pipeline_mode = #tpu.pipeline_mode<synchronous>, transform_indices = @transform_4, window_bounds = array<i64: 1, 512>}, {pipeline_mode = #tpu.pipeline_mode<synchronous>, transform_indices = @transform_5, window_bounds = array<i64: 512, 512>}, {pipeline_mode = #tpu.pipeline_mode<synchronous>, transform_indices = @transform_6, window_bounds = array<i64: 1, 512>}, {pipeline_mode = #tpu.pipeline_mode<synchronous>, transform_indices = @transform_7, window_bounds = array<i64: 512, 512>}, {pipeline_mode = #tpu.pipeline_mode<synchronous>, transform_indices = @transform_8, window_bounds = array<i64: 1, 512>}, {pipeline_mode = #tpu.pipeline_mode<synchronous>, transform_indices = @transform_9, window_bounds = array<i64: 512, 512>}, {pipeline_mode = #tpu.pipeline_mode<synchronous>, transform_indices = @transform_10, window_bounds = array<i64: 1, 512>}, {pipeline_mode = #tpu.pipeline_mode<synchronous>, transform_indices = @transform_11, window_bounds = array<i64: 512, 24>}, {pipeline_mode = #tpu.pipeline_mode<synchronous>, transform_indices = @transform_12, window_bounds = array<i64: 1, 24>}, {transform_indices = @transform_13, window_bounds = array<i64: 8, 24>}]} {
    %c0 = arith.constant 0 : index
    %c0_0 = arith.constant 0 : index
    %0 = vector.load %arg1[%c0, %c0_0] : memref<8x16xf32, #tpu.memory_space<vmem>>, vector<8x16xf32>
    %1 = arith.truncf %0 : vector<8x16xf32> to vector<8x16xbf16>
    %c0_1 = arith.constant 0 : index
    %c0_2 = arith.constant 0 : index
    %2 = vector.load %arg2[%c0_1, %c0_2] : memref<16x512xbf16, #tpu.memory_space<vmem>>, vector<16x512xbf16>
    %cst = arith.constant dense<0.000000e+00> : vector<8x512xf32>
    %3 = tpu.matmul %1, %2, %cst {dimension_numbers = #tpu.dot_dimension_numbers<[1], [0], [0], [1], [0, 0, 1, 1], [], []>} : vector<8x16xbf16>, vector<16x512xbf16>, vector<8x512xf32> -> vector<8x512xf32>
    %c0_3 = arith.constant 0 : index
    %c0_4 = arith.constant 0 : index
    %4 = vector.load %arg3[%c0_3, %c0_4] : memref<1x512xf32, #tpu.memory_space<vmem>>, vector<1x512xf32>
    %5 = vector.broadcast %4 : vector<1x512xf32> to vector<8x512xf32>
    %6 = arith.addf %3, %5 : vector<8x512xf32>
    %cst_5 = arith.constant 0.000000e+00 : f32
    %7 = vector.broadcast %cst_5 : f32 to vector<8x512xf32>
    %8 = arith.maximumf %6, %7 : vector<8x512xf32>
    %9 = arith.truncf %8 : vector<8x512xf32> to vector<8x512xbf16>
    %c0_6 = arith.constant 0 : index
    %c0_7 = arith.constant 0 : index
    %10 = vector.load %arg4[%c0_6, %c0_7] : memref<512x512xbf16, #tpu.memory_space<vmem>>, vector<512x512xbf16>
    %cst_8 = arith.constant dense<0.000000e+00> : vector<8x512xf32>
    %11 = tpu.matmul %9, %10, %cst_8 {dimension_numbers = #tpu.dot_dimension_numbers<[1], [0], [0], [1], [0, 0, 1, 1], [], []>} : vector<8x512xbf16>, vector<512x512xbf16>, vector<8x512xf32> -> vector<8x512xf32>
    %c0_9 = arith.constant 0 : index
    %c0_10 = arith.constant 0 : index
    %12 = vector.load %arg5[%c0_9, %c0_10] : memref<1x512xf32, #tpu.memory_space<vmem>>, vector<1x512xf32>
    %13 = vector.broadcast %12 : vector<1x512xf32> to vector<8x512xf32>
    %14 = arith.addf %11, %13 : vector<8x512xf32>
    %cst_11 = arith.constant 0.000000e+00 : f32
    %15 = vector.broadcast %cst_11 : f32 to vector<8x512xf32>
    %16 = arith.maximumf %14, %15 : vector<8x512xf32>
    %17 = arith.truncf %16 : vector<8x512xf32> to vector<8x512xbf16>
    %c0_12 = arith.constant 0 : index
    %c0_13 = arith.constant 0 : index
    %18 = vector.load %arg6[%c0_12, %c0_13] : memref<512x512xbf16, #tpu.memory_space<vmem>>, vector<512x512xbf16>
    %cst_14 = arith.constant dense<0.000000e+00> : vector<8x512xf32>
    %19 = tpu.matmul %17, %18, %cst_14 {dimension_numbers = #tpu.dot_dimension_numbers<[1], [0], [0], [1], [0, 0, 1, 1], [], []>} : vector<8x512xbf16>, vector<512x512xbf16>, vector<8x512xf32> -> vector<8x512xf32>
    %c0_15 = arith.constant 0 : index
    %c0_16 = arith.constant 0 : index
    %20 = vector.load %arg7[%c0_15, %c0_16] : memref<1x512xf32, #tpu.memory_space<vmem>>, vector<1x512xf32>
    %21 = vector.broadcast %20 : vector<1x512xf32> to vector<8x512xf32>
    %22 = arith.addf %19, %21 : vector<8x512xf32>
    %cst_17 = arith.constant 0.000000e+00 : f32
    %23 = vector.broadcast %cst_17 : f32 to vector<8x512xf32>
    %24 = arith.maximumf %22, %23 : vector<8x512xf32>
    %25 = arith.truncf %24 : vector<8x512xf32> to vector<8x512xbf16>
    %c0_18 = arith.constant 0 : index
    %c0_19 = arith.constant 0 : index
    %26 = vector.load %arg8[%c0_18, %c0_19] : memref<512x512xbf16, #tpu.memory_space<vmem>>, vector<512x512xbf16>
    %cst_20 = arith.constant dense<0.000000e+00> : vector<8x512xf32>
    %27 = tpu.matmul %25, %26, %cst_20 {dimension_numbers = #tpu.dot_dimension_numbers<[1], [0], [0], [1], [0, 0, 1, 1], [], []>} : vector<8x512xbf16>, vector<512x512xbf16>, vector<8x512xf32> -> vector<8x512xf32>
    %c0_21 = arith.constant 0 : index
    %c0_22 = arith.constant 0 : index
    %28 = vector.load %arg9[%c0_21, %c0_22] : memref<1x512xf32, #tpu.memory_space<vmem>>, vector<1x512xf32>
    %29 = vector.broadcast %28 : vector<1x512xf32> to vector<8x512xf32>
    %30 = arith.addf %27, %29 : vector<8x512xf32>
    %cst_23 = arith.constant 0.000000e+00 : f32
    %31 = vector.broadcast %cst_23 : f32 to vector<8x512xf32>
    %32 = arith.maximumf %30, %31 : vector<8x512xf32>
    %33 = arith.truncf %32 : vector<8x512xf32> to vector<8x512xbf16>
    %c0_24 = arith.constant 0 : index
    %c0_25 = arith.constant 0 : index
    %34 = vector.load %arg10[%c0_24, %c0_25] : memref<512x512xbf16, #tpu.memory_space<vmem>>, vector<512x512xbf16>
    %cst_26 = arith.constant dense<0.000000e+00> : vector<8x512xf32>
    %35 = tpu.matmul %33, %34, %cst_26 {dimension_numbers = #tpu.dot_dimension_numbers<[1], [0], [0], [1], [0, 0, 1, 1], [], []>} : vector<8x512xbf16>, vector<512x512xbf16>, vector<8x512xf32> -> vector<8x512xf32>
    %c0_27 = arith.constant 0 : index
    %c0_28 = arith.constant 0 : index
    %36 = vector.load %arg11[%c0_27, %c0_28] : memref<1x512xf32, #tpu.memory_space<vmem>>, vector<1x512xf32>
    %37 = vector.broadcast %36 : vector<1x512xf32> to vector<8x512xf32>
    %38 = arith.addf %35, %37 : vector<8x512xf32>
    %cst_29 = arith.constant 0.000000e+00 : f32
    %39 = vector.broadcast %cst_29 : f32 to vector<8x512xf32>
    %40 = arith.maximumf %38, %39 : vector<8x512xf32>
    %41 = arith.truncf %40 : vector<8x512xf32> to vector<8x512xbf16>
    %c0_30 = arith.constant 0 : index
    %c0_31 = arith.constant 0 : index
    %42 = vector.load %arg12[%c0_30, %c0_31] : memref<512x24xbf16, #tpu.memory_space<vmem>>, vector<512x24xbf16>
    %cst_32 = arith.constant dense<0.000000e+00> : vector<8x24xf32>
    %43 = tpu.matmul %41, %42, %cst_32 {dimension_numbers = #tpu.dot_dimension_numbers<[1], [0], [0], [1], [0, 0, 1, 1], [], []>} : vector<8x512xbf16>, vector<512x24xbf16>, vector<8x24xf32> -> vector<8x24xf32>
    %c0_33 = arith.constant 0 : index
    %c0_34 = arith.constant 0 : index
    %44 = vector.load %arg13[%c0_33, %c0_34] : memref<1x24xf32, #tpu.memory_space<vmem>>, vector<1x24xf32>
    %45 = vector.broadcast %44 : vector<1x24xf32> to vector<8x24xf32>
    %46 = arith.addf %43, %45 : vector<8x24xf32>
    %c0_35 = arith.constant 0 : index
    %c0_36 = arith.constant 0 : index
    %47 = vector.load %arg14[%c0_35, %c0_36] : memref<8x24xf32, #tpu.memory_space<vmem>>, vector<8x24xf32>
    tpu.vector_store %arg14[%c0_35, %c0_36], %46 {strides = array<i32>} : memref<8x24xf32, #tpu.memory_space<vmem>>, vector<8x24xf32>,
    return
  }
  func.func @transform_0(%arg0: i32) -> (i32, i32) {
    %c0_i32 = arith.constant 0 : i32
    %c0_i32_0 = arith.constant 0 : i32
    return %arg0, %c0_i32 : i32, i32
  }
  func.func @transform_1(%arg0: i32) -> (i32, i32) {
    %c0_i32 = arith.constant 0 : i32
    %c0_i32_0 = arith.constant 0 : i32
    %c0_i32_1 = arith.constant 0 : i32
    return %c0_i32, %c0_i32_0 : i32, i32
  }
  func.func @transform_2(%arg0: i32) -> (i32, i32) {
    %c0_i32 = arith.constant 0 : i32
    %c0_i32_0 = arith.constant 0 : i32
    %c0_i32_1 = arith.constant 0 : i32
    return %c0_i32, %c0_i32_0 : i32, i32
  }
  func.func @transform_3(%arg0: i32) -> (i32, i32) {
    %c0_i32 = arith.constant 0 : i32
    %c0_i32_0 = arith.constant 0 : i32
    %c0_i32_1 = arith.constant 0 : i32
    return %c0_i32, %c0_i32_0 : i32, i32
  }
  func.func @transform_4(%arg0: i32) -> (i32, i32) {
    %c0_i32 = arith.constant 0 : i32
    %c0_i32_0 = arith.constant 0 : i32
    %c0_i32_1 = arith.constant 0 : i32
    return %c0_i32, %c0_i32_0 : i32, i32
  }
  func.func @transform_5(%arg0: i32) -> (i32, i32) {
    %c0_i32 = arith.constant 0 : i32
    %c0_i32_0 = arith.constant 0 : i32
    %c0_i32_1 = arith.constant 0 : i32
    return %c0_i32, %c0_i32_0 : i32, i32
  }
  func.func @transform_6(%arg0: i32) -> (i32, i32) {
    %c0_i32 = arith.constant 0 : i32
    %c0_i32_0 = arith.constant 0 : i32
    %c0_i32_1 = arith.constant 0 : i32
    return %c0_i32, %c0_i32_0 : i32, i32
  }
  func.func @transform_7(%arg0: i32) -> (i32, i32) {
    %c0_i32 = arith.constant 0 : i32
    %c0_i32_0 = arith.constant 0 : i32
    %c0_i32_1 = arith.constant 0 : i32
    return %c0_i32, %c0_i32_0 : i32, i32
  }
  func.func @transform_8(%arg0: i32) -> (i32, i32) {
    %c0_i32 = arith.constant 0 : i32
    %c0_i32_0 = arith.constant 0 : i32
    %c0_i32_1 = arith.constant 0 : i32
    return %c0_i32, %c0_i32_0 : i32, i32
  }
  func.func @transform_9(%arg0: i32) -> (i32, i32) {
    %c0_i32 = arith.constant 0 : i32
    %c0_i32_0 = arith.constant 0 : i32
    %c0_i32_1 = arith.constant 0 : i32
    return %c0_i32, %c0_i32_0 : i32, i32
  }
  func.func @transform_10(%arg0: i32) -> (i32, i32) {
    %c0_i32 = arith.constant 0 : i32
    %c0_i32_0 = arith.constant 0 : i32
    %c0_i32_1 = arith.constant 0 : i32
    return %c0_i32, %c0_i32_0 : i32, i32
  }
  func.func @transform_11(%arg0: i32) -> (i32, i32) {
    %c0_i32 = arith.constant 0 : i32
    %c0_i32_0 = arith.constant 0 : i32
    %c0_i32_1 = arith.constant 0 : i32
    return %c0_i32, %c0_i32_0 : i32, i32
  }
  func.func @transform_12(%arg0: i32) -> (i32, i32) {
    %c0_i32 = arith.constant 0 : i32
    %c0_i32_0 = arith.constant 0 : i32
    %c0_i32_1 = arith.constant 0 : i32
    return %c0_i32, %c0_i32_0 : i32, i32
  }
  func.func @transform_13(%arg0: i32) -> (i32, i32) {
    %c0_i32 = arith.constant 0 : i32
    %c0_i32_0 = arith.constant 0 : i32
    return %arg0, %c0_i32 : i32, i32
  }
}

</mosaic_0001>

<llo_original>
// kernel: tpu_custom_call.1
$region0: #{tpu_custom_call.1}
  #allocation0 [shape = 'u32[]', space=smem, size = 0x4, offset = 0x4, fixed_abs, tag = 'smem constant byte address 0x4 - core index']
  #allocation1 [shape = 'u32[144,128]{1,0:T(1,128)}', space=vmem, size = 0x12000, scoped, tag = 'internal scratch']
  %s0 = inlined_call_operand.vmem [shape: f32[8,16], index: 0, kind: input, shape index: {}]
  %s1 = inlined_call_operand.vmem [shape: bf16[16,512], index: 1, kind: input, shape index: {}]
  %s2 = inlined_call_operand.vmem [shape: f32[1,512], index: 2, kind: input, shape index: {}]
  %s3 = inlined_call_operand.hbm [shape: bf16[512,512], index: 3, kind: input, shape index: {}]
  %s4 = inlined_call_operand.vmem [shape: f32[1,512], index: 4, kind: input, shape index: {}]
  %s5 = inlined_call_operand.hbm [shape: bf16[512,512], index: 5, kind: input, shape index: {}]
  %s6 = inlined_call_operand.vmem [shape: f32[1,512], index: 6, kind: input, shape index: {}]
  %s7 = inlined_call_operand.hbm [shape: bf16[512,512], index: 7, kind: input, shape index: {}]
  %s8 = inlined_call_operand.vmem [shape: f32[1,512], index: 8, kind: input, shape index: {}]
  %s9 = inlined_call_operand.hbm [shape: bf16[512,512], index: 9, kind: input, shape index: {}]
  %s10 = inlined_call_operand.vmem [shape: f32[1,512], index: 10, kind: input, shape index: {}]
  %s11 = inlined_call_operand.vmem [shape: bf16[512,24], index: 11, kind: input, shape index: {}]
  %s12 = inlined_call_operand.vmem [shape: f32[1,24], index: 12, kind: input, shape index: {}]
  %s13 = inlined_call_operand.hbm [shape: f32[8,24], index: 13, kind: output, shape index: {}]
  %s14 = sld [smem:[#allocation0]]
  $region78: #{tpu_custom_call.1} parent=0
    _
  %s16 = ssub.s32 1, %s14
  %s17 = scalar_select 0, %s16, %s14
  $region1: #{tpu_custom_call.1} parent=0
    #allocation2 [shape = 'u8[524288]{0}', space=vmem, size = 0x80000, scoped, tag = 'input window, operand 3, single buffered']
    #allocation3 [shape = 's32[1]{0}', space=sflag, size = 0x4, scoped, tag = 'scoped memory for tpu_custom_call.1']
    #allocation4 [shape = 's32[1]{0}', space=sflag, size = 0x4, scoped, tag = 'scoped memory for tpu_custom_call.1']
    #allocation5 [shape = 'u8[524288]{0}', space=vmem, size = 0x80000, scoped, tag = 'input window, operand 5, single buffered']
    #allocation6 [shape = 's32[1]{0}', space=sflag, size = 0x4, scoped, tag = 'scoped memory for tpu_custom_call.1']
    #allocation7 [shape = 'u8[524288]{0}', space=vmem, size = 0x80000, scoped, tag = 'input window, operand 7, single buffered']
    #allocation8 [shape = 'u8[524288]{0}', space=vmem, size = 0x80000, scoped, tag = 'input window, operand 9, single buffered']
    #allocation9 [shape = 's32[1]{0}', space=sflag, size = 0x4, scoped, tag = 'scoped memory for tpu_custom_call.1']
    #allocation10 [shape = 'u8[4096]{0}', space=vmem, size = 0x1000, scoped, tag = 'output window, operand 0, single buffered']
    %18 = vsyncpa [#allocation3], 0
    %19 = vsyncpa [#allocation6], 0
    %20 = vsyncpa [#allocation9], 0
    %21 = vsyncpa [#allocation4], 0
    // Predicated region
    $region2: #{tpu_custom_call.1} parent=1 // pred_check
      _
    $region3: #{tpu_custom_call.1} parent=1 // pred_check_branch
      %23 = sbr.rel (0) target = $region5
    $region4: #{tpu_custom_call.1} parent=1 // pred_region
      _
    $region5: #{tpu_custom_call.1} parent=1 // pred_fallthru
      _
    // Predicated region
    $region6: #{tpu_custom_call.1} parent=1 // pred_check
      _
    $region7: #{tpu_custom_call.1} parent=1 // pred_check_branch
      %25 = sbr.rel (0) target = $region9
    $region8: #{tpu_custom_call.1} parent=1 // pred_region
      _
    $region9: #{tpu_custom_call.1} parent=1 // pred_fallthru
      _
    // Predicated region
    $region10: #{tpu_custom_call.1} parent=1 // pred_check
      _
    $region11: #{tpu_custom_call.1} parent=1 // pred_check_branch
      %27 = sbr.rel (0) target = $region13
    $region12: #{tpu_custom_call.1} parent=1 // pred_region
      _
    $region13: #{tpu_custom_call.1} parent=1 // pred_fallthru
      _
    // Predicated region
    $region14: #{tpu_custom_call.1} parent=1 // pred_check
      _
    $region15: #{tpu_custom_call.1} parent=1 // pred_check_branch
      %29 = sbr.rel (0) target = $region17
    $region16: #{tpu_custom_call.1} parent=1 // pred_region
      %s31 = ssub.s32 16384, 16384
      %32 = vsyncadd [#allocation3], %s31
      %s33 = sshll.u32 [#allocation2], 4
      %s34 = int_to_ptr.vmem [resolvable:$true] %s33
      %39 = dma.hbm_to_vmem [thread:$0]  %s3, 16384, %s34, [#allocation3], 256, 256, 16
    $region17: #{tpu_custom_call.1} parent=1 // pred_fallthru
      _
    // Predicated region
    $region18: #{tpu_custom_call.1} parent=1 // pred_check
      _
    $region19: #{tpu_custom_call.1} parent=1 // pred_check_branch
      %41 = sbr.rel (0) target = $region21
    $region20: #{tpu_custom_call.1} parent=1 // pred_region
      _
    $region21: #{tpu_custom_call.1} parent=1 // pred_fallthru
      _
    // Predicated region
    $region22: #{tpu_custom_call.1} parent=1 // pred_check
      _
    $region23: #{tpu_custom_call.1} parent=1 // pred_check_branch
      %43 = sbr.rel (0) target = $region25
    $region24: #{tpu_custom_call.1} parent=1 // pred_region
      %s45 = ssub.s32 16384, 16384
      %46 = vsyncadd [#allocation6], %s45
      %s47 = sshll.u32 [#allocation5], 4
      %s48 = int_to_ptr.vmem [resolvable:$true] %s47
      %53 = dma.hbm_to_vmem [thread:$0]  %s5, 16384, %s48, [#allocation6], 256, 256, 16
    $region25: #{tpu_custom_call.1} parent=1 // pred_fallthru
      _
    // Predicated region
    $region26: #{tpu_custom_call.1} parent=1 // pred_check
      _
    $region27: #{tpu_custom_call.1} parent=1 // pred_check_branch
      %55 = sbr.rel (0) target = $region29
    $region28: #{tpu_custom_call.1} parent=1 // pred_region
      _
    $region29: #{tpu_custom_call.1} parent=1 // pred_fallthru
      _
    // Predicated region
    $region30: #{tpu_custom_call.1} parent=1 // pred_check
      _
    $region31: #{tpu_custom_call.1} parent=1 // pred_check_branch
      %57 = sbr.rel (0) target = $region33
    $region32: #{tpu_custom_call.1} parent=1 // pred_region
      %s59 = ssub.s32 16384, 16384
      %60 = vsyncadd [#allocation6], %s59
      %s61 = sshll.u32 [#allocation7], 4
      %s62 = int_to_ptr.vmem [resolvable:$true] %s61
      %67 = dma.hbm_to_vmem [thread:$0]  %s7, 16384, %s62, [#allocation6], 256, 256, 16
    $region33: #{tpu_custom_call.1} parent=1 // pred_fallthru
      _
    // Predicated region
    $region34: #{tpu_custom_call.1} parent=1 // pred_check
      _
    $region35: #{tpu_custom_call.1} parent=1 // pred_check_branch
      %69 = sbr.rel (0) target = $region37
    $region36: #{tpu_custom_call.1} parent=1 // pred_region
      _
    $region37: #{tpu_custom_call.1} parent=1 // pred_fallthru
      _
    // Predicated region
    $region38: #{tpu_custom_call.1} parent=1 // pred_check
      _
    $region39: #{tpu_custom_call.1} parent=1 // pred_check_branch
      %71 = sbr.rel (0) target = $region41
    $region40: #{tpu_custom_call.1} parent=1 // pred_region
      %s73 = ssub.s32 16384, 16384
      %74 = vsyncadd [#allocation9], %s73
      %s75 = sshll.u32 [#allocation8], 4
      %s76 = int_to_ptr.vmem [resolvable:$true] %s75
      %81 = dma.hbm_to_vmem [thread:$0]  %s9, 16384, %s76, [#allocation9], 256, 256, 16
    $region41: #{tpu_custom_call.1} parent=1 // pred_fallthru
      _
    // Predicated region
    $region42: #{tpu_custom_call.1} parent=1 // pred_check
      _
    $region43: #{tpu_custom_call.1} parent=1 // pred_check_branch
      %83 = sbr.rel (0) target = $region45
    $region44: #{tpu_custom_call.1} parent=1 // pred_region
      _
    $region45: #{tpu_custom_call.1} parent=1 // pred_fallthru
      _
    // Predicated region
    $region46: #{tpu_custom_call.1} parent=1 // pred_check
      _
    $region47: #{tpu_custom_call.1} parent=1 // pred_check_branch
      %85 = sbr.rel (0) target = $region49
    $region48: #{tpu_custom_call.1} parent=1 // pred_region
      _
    $region49: #{tpu_custom_call.1} parent=1 // pred_fallthru
      _
    // Predicated region
    $region50: #{tpu_custom_call.1} parent=1 // pred_check
      _
    $region51: #{tpu_custom_call.1} parent=1 // pred_check_branch
      %87 = sbr.rel (0) target = $region53
    $region52: #{tpu_custom_call.1} parent=1 // pred_region
      _
    $region53: #{tpu_custom_call.1} parent=1 // pred_fallthru
      _
    // Predicated region
    $region54: #{tpu_custom_call.1} parent=1 // pred_check
      _
    $region55: #{tpu_custom_call.1} parent=1 // pred_check_branch
      %89 = sbr.rel (0) target = $region57
    $region56: #{tpu_custom_call.1} parent=1 // pred_region
      %90 = dma.done [#allocation3], 16384
    $region57: #{tpu_custom_call.1} parent=1 // pred_fallthru
      _
    // Predicated region
    $region58: #{tpu_custom_call.1} parent=1 // pred_check
      _
    $region59: #{tpu_custom_call.1} parent=1 // pred_check_branch
      %92 = sbr.rel (0) target = $region61
    $region60: #{tpu_custom_call.1} parent=1 // pred_region
      %93 = dma.done [#allocation6], 16384
    $region61: #{tpu_custom_call.1} parent=1 // pred_fallthru
      _
    // Predicated region
    $region62: #{tpu_custom_call.1} parent=1 // pred_check
      _
    $region63: #{tpu_custom_call.1} parent=1 // pred_check_branch
      %95 = sbr.rel (0) target = $region65
    $region64: #{tpu_custom_call.1} parent=1 // pred_region
      %96 = dma.done [#allocation6], 16384
    $region65: #{tpu_custom_call.1} parent=1 // pred_fallthru
      _
    // Predicated region
    $region66: #{tpu_custom_call.1} parent=1 // pred_check
      _
    $region67: #{tpu_custom_call.1} parent=1 // pred_check_branch
      %98 = sbr.rel (0) target = $region69
    $region68: #{tpu_custom_call.1} parent=1 // pred_region
      %99 = dma.done [#allocation9], 16384
    $region69: #{tpu_custom_call.1} parent=1 // pred_fallthru
      _
    %v101 = vld [vmem:[%s0] sm:$0xff]
    %v102 = vpack.c.bf16 %v101, %v101
    %v103 = vld [vmem:[%s1] sm:$0xff]
    %v104 = vld [vmem:[%s1 + $0x8] sm:$0xff]
    %v105 = vld [vmem:[%s1 + $0x10] sm:$0xff]
    %v106 = vld [vmem:[%s1 + $0x18] sm:$0xff]
    %v107 = vld [vmem:[%s2] sm:$0xf]
    %v109 = vlaneseq
    %v110 = vshrl.u32 %v109, 7
    %v111 = vsub.s32 0, %v110
    %v112 = vrot.slane %v107, %v111
    %v113 = vlaneseq
    %v114 = vshrl.u32 %v113, 7
    %v115 = vsub.s32 1, %v114
    %v116 = vrot.slane %v107, %v115
    %v117 = vlaneseq
    %v118 = vshrl.u32 %v117, 7
    %v119 = vsub.s32 2, %v118
    %v120 = vrot.slane %v107, %v119
    %v121 = vlaneseq
    %v122 = vshrl.u32 %v121, 7
    %v123 = vsub.s32 3, %v122
    %v124 = vrot.slane %v107, %v123
    %v133 = vunpack.c.l.b16 %v103
    %v134 = vunpack.c.h.b16 %v103
    %v135 = vunpack.c.l.b16 %v104
    %v136 = vunpack.c.h.b16 %v104
    %v137 = vunpack.c.l.b16 %v105
    %v138 = vunpack.c.h.b16 %v105
    %v139 = vunpack.c.l.b16 %v106
    %v140 = vunpack.c.h.b16 %v106
    %v141 = vpack.c.b16 %v137, %v133
    %v142 = vpack.c.b16 %v138, %v134
    %v143 = vpack.c.b16 %v139, %v135
    %v144 = vpack.c.b16 %v140, %v136
    %vm149 = vcmask 130048
    %v151 = vsel %vm149, %v102, 0
    %153 = vmatprep.subr.bf16.mxu0 %v142
    %154 = vmatpush1.bf16.msra.mxu0 %v141
    %155 = vmatprep.subr.bf16.mxu0 0
    %156 = vmatpush1.bf16.msra.mxu0 0
    %157 = vmatprep.subr.bf16.mxu0 0
    %158 = vmatpush1.bf16.msra.mxu0 0
    %159 = vmatprep.subr.bf16.mxu0 0
    %160 = vmatpush1.bf16.msra.mxu0 0
    %161 = vmatprep.subr.bf16.mxu0 0
    %162 = vmatpush1.bf16.msra.mxu0 0
    %163 = vmatprep.subr.bf16.mxu0 0
    %164 = vmatpush1.bf16.msra.mxu0 0
    %165 = vmatprep.subr.bf16.mxu0 0
    %166 = vmatpush1.bf16.msra.mxu0 0
    %167 = vmatprep.subr.bf16.mxu0 0
    %168 = vmatpush1.bf16.msra.mxu0 0
    %169 = vmatprep.subr.bf16.mxu0 0
    %170 = vmatpush1.bf16.msra.mxu0 0
    %171 = vmatprep.subr.bf16.mxu0 0
    %172 = vmatpush1.bf16.msra.mxu0 0
    %173 = vmatprep.subr.bf16.mxu0 0
    %174 = vmatpush1.bf16.msra.mxu0 0
    %175 = vmatprep.subr.bf16.mxu0 0
    %176 = vmatpush1.bf16.msra.mxu0 0
    %177 = vmatprep.subr.bf16.mxu0 0
    %178 = vmatpush1.bf16.msra.mxu0 0
    %179 = vmatprep.subr.bf16.mxu0 0
    %180 = vmatpush1.bf16.msra.mxu0 0
    %181 = vmatprep.subr.bf16.mxu0 0
    %182 = vmatpush1.bf16.msra.mxu0 0
    %183 = vmatprep.subr.bf16.mxu0 0
    %184 = vmatpush1.bf16.msra.mxu0 0
    %185 = vmatprep.mubr.bf16.mxu0 0
    %186 = vmatmul.mubr.bf16.gmra.mrb[0].mxu0 %v151
    %v187 = vpop.f32.mrb[0].mxu0
    %v188 = vadd.f32 %v112, %v187
    %v189 = vpop.f32.mrb[0].mxu0
    %v190 = vadd.f32 %v116, %v189
    %v191 = vpop.f32.mrb[0].mxu0
    %v192 = vpop.f32.mrb[0].mxu0
    %193 = vdwg.mxu0
    %194 = vmatprep.subr.bf16.mxu0 %v144
    %195 = vmatpush1.bf16.msra.mxu0 %v143
    %196 = vmatprep.subr.bf16.mxu0 0
    %197 = vmatpush1.bf16.msra.mxu0 0
    %198 = vmatprep.subr.bf16.mxu0 0
    %199 = vmatpush1.bf16.msra.mxu0 0
    %200 = vmatprep.subr.bf16.mxu0 0
    %201 = vmatpush1.bf16.msra.mxu0 0
    %202 = vmatprep.subr.bf16.mxu0 0
    %203 = vmatpush1.bf16.msra.mxu0 0
    %204 = vmatprep.subr.bf16.mxu0 0
    %205 = vmatpush1.bf16.msra.mxu0 0
    %206 = vmatprep.subr.bf16.mxu0 0
    %207 = vmatpush1.bf16.msra.mxu0 0
    %208 = vmatprep.subr.bf16.mxu0 0
    %209 = vmatpush1.bf16.msra.mxu0 0
    %210 = vmatprep.subr.bf16.mxu0 0
    %211 = vmatpush1.bf16.msra.mxu0 0
    %212 = vmatprep.subr.bf16.mxu0 0
    %213 = vmatpush1.bf16.msra.mxu0 0
    %214 = vmatprep.subr.bf16.mxu0 0
    %215 = vmatpush1.bf16.msra.mxu0 0
    %216 = vmatprep.subr.bf16.mxu0 0
    %217 = vmatpush1.bf16.msra.mxu0 0
    %218 = vmatprep.subr.bf16.mxu0 0
    %219 = vmatpush1.bf16.msra.mxu0 0
    %220 = vmatprep.subr.bf16.mxu0 0
    %221 = vmatpush1.bf16.msra.mxu0 0
    %222 = vmatprep.subr.bf16.mxu0 0
    %223 = vmatpush1.bf16.msra.mxu0 0
    %224 = vmatprep.subr.bf16.mxu0 0
    %225 = vmatpush1.bf16.msra.mxu0 0
    %226 = vmatprep.mubr.bf16.mxu0 0
    %227 = vmatmul.mubr.bf16.gmra.mrb[0].mxu0 %v151
    %v228 = vpop.f32.mrb[0].mxu0
    %v229 = vadd.f32 %v120, %v228
    %v230 = vpop.f32.mrb[0].mxu0
    %v231 = vadd.f32 %v124, %v230
    %v232 = vpop.f32.mrb[0].mxu0
    %v233 = vpop.f32.mrb[0].mxu0
    %234 = vdwg.mxu0
    %v235 = vmax.f32 %v188, 0.0
    %v236 = vmax.f32 %v190, 0.0
    %v237 = vmax.f32 %v229, 0.0
    %v238 = vmax.f32 %v231, 0.0
    %v239 = vpack.c.bf16 %v235, %v235
    %v240 = vpack.c.bf16 %v236, %v236
    %v241 = vpack.c.bf16 %v237, %v237
    %v242 = vpack.c.bf16 %v238, %v238
    %v243 = vld [vmem:[#allocation2] sm:$0xff]
    %v244 = vld [vmem:[#allocation2 + $0x8] sm:$0xff]
    %v245 = vld [vmem:[#allocation2 + $0x10] sm:$0xff]
    %v246 = vld [vmem:[#allocation2 + $0x18] sm:$0xff]
    %v247 = vld [vmem:[#allocation2 + $0x20] sm:$0xff]
    %v248 = vld [vmem:[#allocation2 + $0x28] sm:$0xff]
    %v249 = vld [vmem:[#allocation2 + $0x30] sm:$0xff]
    %v250 = vld [vmem:[#allocation2 + $0x38] sm:$0xff]
    %v251 = vld [vmem:[#allocation2 + $0x40] sm:$0xff]
    %v252 = vld [vmem:[#allocation2 + $0x48] sm:$0xff]
    %v253 = vld [vmem:[#allocation2 + $0x50] sm:$0xff]
    %v254 = vld [vmem:[#allocation2 + $0x58] sm:$0xff]
    %v255 = vld [vmem:[#allocation2 + $0x60] sm:$0xff]
    %v256 = vld [vmem:[#allocation2 + $0x68] sm:$0xff]
    %v257 = vld [vmem:[#allocation2 + $0x70] sm:$0xff]
    %v258 = vld [vmem:[#allocation2 + $0x78] sm:$0xff]
    %v259 = vld [vmem:[#allocation2 + $0x80] sm:$0xff]
    %v260 = vld [vmem:[#allocation2 + $0x88] sm:$0xff]
    %v261 = vld [vmem:[#allocation2 + $0x90] sm:$0xff]
    %v262 = vld [vmem:[#allocation2 + $0x98] sm:$0xff]
    %v263 = vld [vmem:[#allocation2 + $0xa0] sm:$0xff]
    %v264 = vld [vmem:[#allocation2 + $0xa8] sm:$0xff]
    %v265 = vld [vmem:[#allocation2 + $0xb0] sm:$0xff]
    %v266 = vld [vmem:[#allocation2 + $0xb8] sm:$0xff]
    %v267 = vld [vmem:[#allocation2 + $0xc0] sm:$0xff]
    %v268 = vld [vmem:[#allocation2 + $0xc8] sm:$0xff]
    %v269 = vld [vmem:[#allocation2 + $0xd0] sm:$0xff]
    %v270 = vld [vmem:[#allocation2 + $0xd8] sm:$0xff]
    %v271 = vld [vmem:[#allocation2 + $0xe0] sm:$0xff]
    %v272 = vld [vmem:[#allocation2 + $0xe8] sm:$0xff]
    %v273 = vld [vmem:[#allocation2 + $0xf0] sm:$0xff]
    %v274 = vld [vmem:[#allocation2 + $0xf8] sm:$0xff]
    %v275 = vld [vmem:[#allocation2 + $0x100] sm:$0xff]
    %v276 = vld [vmem:[#allocation2 + $0x108] sm:$0xff]
    %v277 = vld [vmem:[#allocation2 + $0x110] sm:$0xff]
    %v278 = vld [vmem:[#allocation2 + $0x118] sm:$0xff]
    %v279 = vld [vmem:[#allocation2 + $0x120] sm:$0xff]
    %v280 = vld [vmem:[#allocation2 + $0x128] sm:$0xff]
    %v281 = vld [vmem:[#allocation2 + $0x130] sm:$0xff]
    %v282 = vld [vmem:[#allocation2 + $0x138] sm:$0xff]
    %v283 = vld [vmem:[#allocation2 + $0x140] sm:$0xff]
    %v284 = vld [vmem:[#allocation2 + $0x148] sm:$0xff]
    %v285 = vld [vmem:[#allocation2 + $0x150] sm:$0xff]
    %v286 = vld [vmem:[#allocation2 + $0x158] sm:$0xff]
    %v287 = vld [vmem:[#allocation2 + $0x160] sm:$0xff]
    %v288 = vld [vmem:[#allocation2 + $0x168] sm:$0xff]
    %v289 = vld [vmem:[#allocation2 + $0x170] sm:$0xff]
    %v290 = vld [vmem:[#allocation2 + $0x178] sm:$0xff]
    %v291 = vld [vmem:[#allocation2 + $0x180] sm:$0xff]
    %v292 = vld [vmem:[#allocation2 + $0x188] sm:$0xff]
    %v293 = vld [vmem:[#allocation2 + $0x190] sm:$0xff]
    %v294 = vld [vmem:[#allocation2 + $0x198] sm:$0xff]
    %v295 = vld [vmem:[#allocation2 + $0x1a0] sm:$0xff]
    %v296 = vld [vmem:[#allocation2 + $0x1a8] sm:$0xff]
    %v297 = vld [vmem:[#allocation2 + $0x1b0] sm:$0xff]
    %v298 = vld [vmem:[#allocation2 + $0x1b8] sm:$0xff]
    %v299 = vld [vmem:[#allocation2 + $0x1c0] sm:$0xff]
    %v300 = vld [vmem:[#allocation2 + $0x1c8] sm:$0xff]
    %v301 = vld [vmem:[#allocation2 + $0x1d0] sm:$0xff]
    %v302 = vld [vmem:[#allocation2 + $0x1d8] sm:$0xff]
    %v303 = vld [vmem:[#allocation2 + $0x1e0] sm:$0xff]
    %v304 = vld [vmem:[#allocation2 + $0x1e8] sm:$0xff]
    %v305 = vld [vmem:[#allocation2 + $0x1f0] sm:$0xff]
    %v306 = vld [vmem:[#allocation2 + $0x1f8] sm:$0xff]
    %v307 = vld [vmem:[#allocation2 + $0x200] sm:$0xff]
    %v308 = vld [vmem:[#allocation2 + $0x208] sm:$0xff]
    %v309 = vld [vmem:[#allocation2 + $0x210] sm:$0xff]
    %v310 = vld [vmem:[#allocation2 + $0x218] sm:$0xff]
    %v311 = vld [vmem:[#allocation2 + $0x220] sm:$0xff]
    %v312 = vld [vmem:[#allocation2 + $0x228] sm:$0xff]
    %v313 = vld [vmem:[#allocation2 + $0x230] sm:$0xff]
    %v314 = vld [vmem:[#allocation2 + $0x238] sm:$0xff]
    %v315 = vld [vmem:[#allocation2 + $0x240] sm:$0xff]
    %v316 = vld [vmem:[#allocation2 + $0x248] sm:$0xff]
    %v317 = vld [vmem:[#allocation2 + $0x250] sm:$0xff]
    %v318 = vld [vmem:[#allocation2 + $0x258] sm:$0xff]
    %v319 = vld [vmem:[#allocation2 + $0x260] sm:$0xff]
    %v320 = vld [vmem:[#allocation2 + $0x268] sm:$0xff]
    %v321 = vld [vmem:[#allocation2 + $0x270] sm:$0xff]
    %v322 = vld [vmem:[#allocation2 + $0x278] sm:$0xff]
    %v323 = vld [vmem:[#allocation2 + $0x280] sm:$0xff]
    %v324 = vld [vmem:[#allocation2 + $0x288] sm:$0xff]
    %v325 = vld [vmem:[#allocation2 + $0x290] sm:$0xff]
    %v326 = vld [vmem:[#allocation2 + $0x298] sm:$0xff]
    %v327 = vld [vmem:[#allocation2 + $0x2a0] sm:$0xff]
    %v328 = vld [vmem:[#allocation2 + $0x2a8] sm:$0xff]
    %v329 = vld [vmem:[#allocation2 + $0x2b0] sm:$0xff]
    %v330 = vld [vmem:[#allocation2 + $0x2b8] sm:$0xff]
    %v331 = vld [vmem:[#allocation2 + $0x2c0] sm:$0xff]
    %v332 = vld [vmem:[#allocation2 + $0x2c8] sm:$0xff]
    %v333 = vld [vmem:[#allocation2 + $0x2d0] sm:$0xff]
    %v334 = vld [vmem:[#allocation2 + $0x2d8] sm:$0xff]
    %v335 = vld [vmem:[#allocation2 + $0x2e0] sm:$0xff]
    %v336 = vld [vmem:[#allocation2 + $0x2e8] sm:$0xff]
    %v337 = vld [vmem:[#allocation2 + $0x2f0] sm:$0xff]
    %v338 = vld [vmem:[#allocation2 + $0x2f8] sm:$0xff]
    %v339 = vld [vmem:[#allocation2 + $0x300] sm:$0xff]
    %v340 = vld [vmem:[#allocation2 + $0x308] sm:$0xff]
    %v341 = vld [vmem:[#allocation2 + $0x310] sm:$0xff]
    %v342 = vld [vmem:[#allocation2 + $0x318] sm:$0xff]
    %v343 = vld [vmem:[#allocation2 + $0x320] sm:$0xff]
    %v344 = vld [vmem:[#allocation2 + $0x328] sm:$0xff]
    %v345 = vld [vmem:[#allocation2 + $0x330] sm:$0xff]
    %v346 = vld [vmem:[#allocation2 + $0x338] sm:$0xff]
    %v347 = vld [vmem:[#allocation2 + $0x340] sm:$0xff]
    %v348 = vld [vmem:[#allocation2 + $0x348] sm:$0xff]
    %v349 = vld [vmem:[#allocation2 + $0x350] sm:$0xff]
    %v350 = vld [vmem:[#allocation2 + $0x358] sm:$0xff]
    %v351 = vld [vmem:[#allocation2 + $0x360] sm:$0xff]
    %v352 = vld [vmem:[#allocation2 + $0x368] sm:$0xff]
    %v353 = vld [vmem:[#allocation2 + $0x370] sm:$0xff]
    %v354 = vld [vmem:[#allocation2 + $0x378] sm:$0xff]
    %v355 = vld [vmem:[#allocation2 + $0x380] sm:$0xff]
    %v356 = vld [vmem:[#allocation2 + $0x388] sm:$0xff]
    %v357 = vld [vmem:[#allocation2 + $0x390] sm:$0xff]
    %v358 = vld [vmem:[#allocation2 + $0x398] sm:$0xff]
    %v359 = vld [vmem:[#allocation2 + $0x3a0] sm:$0xff]
    %v360 = vld [vmem:[#allocation2 + $0x3a8] sm:$0xff]
    %v361 = vld [vmem:[#allocation2 + $0x3b0] sm:$0xff]
    %v362 = vld [vmem:[#allocation2 + $0x3b8] sm:$0xff]
    %v363 = vld [vmem:[#allocation2 + $0x3c0] sm:$0xff]
    %v364 = vld [vmem:[#allocation2 + $0x3c8] sm:$0xff]
    %v365 = vld [vmem:[#allocation2 + $0x3d0] sm:$0xff]
    %v366 = vld [vmem:[#allocation2 + $0x3d8] sm:$0xff]
    %v367 = vld [vmem:[#allocation2 + $0x3e0] sm:$0xff]
    %v368 = vld [vmem:[#allocation2 + $0x3e8] sm:$0xff]
    %v369 = vld [vmem:[#allocation2 + $0x3f0] sm:$0xff]
    %v370 = vld [vmem:[#allocation2 + $0x3f8] sm:$0xff]
    %v371 = vld [vmem:[%s4] sm:$0xf]
    %v373 = vlaneseq
    %v374 = vshrl.u32 %v373, 7
    %v375 = vsub.s32 0, %v374
    %v376 = vrot.slane %v371, %v375
    %v377 = vlaneseq
    %v378 = vshrl.u32 %v377, 7
    %v379 = vsub.s32 1, %v378
    %v380 = vrot.slane %v371, %v379
    %v381 = vlaneseq
    %v382 = vshrl.u32 %v381, 7
    %v383 = vsub.s32 2, %v382
    %v384 = vrot.slane %v371, %v383
    %v385 = vlaneseq
    %v386 = vshrl.u32 %v385, 7
    %v387 = vsub.s32 3, %v386
    %v388 = vrot.slane %v371, %v387
    %v521 = vunpack.c.l.b16 %v243
    %v522 = vunpack.c.h.b16 %v243
    %v523 = vunpack.c.l.b16 %v244
    %v524 = vunpack.c.h.b16 %v244
    %v525 = vunpack.c.l.b16 %v245
    %v526 = vunpack.c.h.b16 %v245
    %v527 = vunpack.c.l.b16 %v246
    %v528 = vunpack.c.h.b16 %v246
    %v529 = vunpack.c.l.b16 %v247
    %v530 = vunpack.c.h.b16 %v247
    %v531 = vunpack.c.l.b16 %v248
    %v532 = vunpack.c.h.b16 %v248
    %v533 = vunpack.c.l.b16 %v249
    %v534 = vunpack.c.h.b16 %v249
    %v535 = vunpack.c.l.b16 %v250
    %v536 = vunpack.c.h.b16 %v250
    %v537 = vunpack.c.l.b16 %v251
    %v538 = vunpack.c.h.b16 %v251
    %v539 = vunpack.c.l.b16 %v252
    %v540 = vunpack.c.h.b16 %v252
    %v541 = vunpack.c.l.b16 %v253
    %v542 = vunpack.c.h.b16 %v253
    %v543 = vunpack.c.l.b16 %v254
    %v544 = vunpack.c.h.b16 %v254
    %v545 = vunpack.c.l.b16 %v255
    %v546 = vunpack.c.h.b16 %v255
    %v547 = vunpack.c.l.b16 %v256
    %v548 = vunpack.c.h.b16 %v256
    %v549 = vunpack.c.l.b16 %v257
    %v550 = vunpack.c.h.b16 %v257
    %v551 = vunpack.c.l.b16 %v258
    %v552 = vunpack.c.h.b16 %v258
    %v553 = vunpack.c.l.b16 %v259
    %v554 = vunpack.c.h.b16 %v259
    %v555 = vunpack.c.l.b16 %v260
    %v556 = vunpack.c.h.b16 %v260
    %v557 = vunpack.c.l.b16 %v261
    %v558 = vunpack.c.h.b16 %v261
    %v559 = vunpack.c.l.b16 %v262
    %v560 = vunpack.c.h.b16 %v262
    %v561 = vunpack.c.l.b16 %v263
    %v562 = vunpack.c.h.b16 %v263
    %v563 = vunpack.c.l.b16 %v264
    %v564 = vunpack.c.h.b16 %v264
    %v565 = vunpack.c.l.b16 %v265
    %v566 = vunpack.c.h.b16 %v265
    %v567 = vunpack.c.l.b16 %v266
    %v568 = vunpack.c.h.b16 %v266
    %v569 = vunpack.c.l.b16 %v267
    %v570 = vunpack.c.h.b16 %v267
    %v571 = vunpack.c.l.b16 %v268
    %v572 = vunpack.c.h.b16 %v268
    %v573 = vunpack.c.l.b16 %v269
    %v574 = vunpack.c.h.b16 %v269
    %v575 = vunpack.c.l.b16 %v270
    %v576 = vunpack.c.h.b16 %v270
    %v577 = vunpack.c.l.b16 %v271
    %v578 = vunpack.c.h.b16 %v271
    %v579 = vunpack.c.l.b16 %v272
    %v580 = vunpack.c.h.b16 %v272
    %v581 = vunpack.c.l.b16 %v273
    %v582 = vunpack.c.h.b16 %v273
    %v583 = vunpack.c.l.b16 %v274
    %v584 = vunpack.c.h.b16 %v274
    %v585 = vunpack.c.l.b16 %v275
    %v586 = vunpack.c.h.b16 %v275
    %v587 = vunpack.c.l.b16 %v276
    %v588 = vunpack.c.h.b16 %v276
    %v589 = vunpack.c.l.b16 %v277
    %v590 = vunpack.c.h.b16 %v277
    %v591 = vunpack.c.l.b16 %v278
    %v592 = vunpack.c.h.b16 %v278
    %v593 = vunpack.c.l.b16 %v279
    %v594 = vunpack.c.h.b16 %v279
    %v595 = vunpack.c.l.b16 %v280
    %v596 = vunpack.c.h.b16 %v280
    %v597 = vunpack.c.l.b16 %v281
    %v598 = vunpack.c.h.b16 %v281
    %v599 = vunpack.c.l.b16 %v282
    %v600 = vunpack.c.h.b16 %v282
    %v601 = vunpack.c.l.b16 %v283
    %v602 = vunpack.c.h.b16 %v283
    %v603 = vunpack.c.l.b16 %v284
    %v604 = vunpack.c.h.b16 %v284
    %v605 = vunpack.c.l.b16 %v285
    %v606 = vunpack.c.h.b16 %v285
    %v607 = vunpack.c.l.b16 %v286
    %v608 = vunpack.c.h.b16 %v286
    %v609 = vunpack.c.l.b16 %v287
    %v610 = vunpack.c.h.b16 %v287
    %v611 = vunpack.c.l.b16 %v288
    %v612 = vunpack.c.h.b16 %v288
    %v613 = vunpack.c.l.b16 %v289
    %v614 = vunpack.c.h.b16 %v289
    %v615 = vunpack.c.l.b16 %v290
    %v616 = vunpack.c.h.b16 %v290
    %v617 = vunpack.c.l.b16 %v291
    %v618 = vunpack.c.h.b16 %v291
    %v619 = vunpack.c.l.b16 %v292
    %v620 = vunpack.c.h.b16 %v292
    %v621 = vunpack.c.l.b16 %v293
    %v622 = vunpack.c.h.b16 %v293
    %v623 = vunpack.c.l.b16 %v294
    %v624 = vunpack.c.h.b16 %v294
    %v625 = vunpack.c.l.b16 %v295
    %v626 = vunpack.c.h.b16 %v295
    %v627 = vunpack.c.l.b16 %v296
    %v628 = vunpack.c.h.b16 %v296
    %v629 = vunpack.c.l.b16 %v297
    %v630 = vunpack.c.h.b16 %v297
    %v631 = vunpack.c.l.b16 %v298
    %v632 = vunpack.c.h.b16 %v298
    %v633 = vunpack.c.l.b16 %v299
    %v634 = vunpack.c.h.b16 %v299
    %v635 = vunpack.c.l.b16 %v300
    %v636 = vunpack.c.h.b16 %v300
    %v637 = vunpack.c.l.b16 %v301
    %v638 = vunpack.c.h.b16 %v301
    %v639 = vunpack.c.l.b16 %v302
    %v640 = vunpack.c.h.b16 %v302
    %v641 = vunpack.c.l.b16 %v303
    %v642 = vunpack.c.h.b16 %v303
    %v643 = vunpack.c.l.b16 %v304
    %v644 = vunpack.c.h.b16 %v304
    %v645 = vunpack.c.l.b16 %v305
    %v646 = vunpack.c.h.b16 %v305
    %v647 = vunpack.c.l.b16 %v306
    %v648 = vunpack.c.h.b16 %v306
    %v649 = vunpack.c.l.b16 %v307
    %v650 = vunpack.c.h.b16 %v307
    %v651 = vunpack.c.l.b16 %v308
    %v652 = vunpack.c.h.b16 %v308
    %v653 = vunpack.c.l.b16 %v309
    %v654 = vunpack.c.h.b16 %v309
    %v655 = vunpack.c.l.b16 %v310
    %v656 = vunpack.c.h.b16 %v310
    %v657 = vunpack.c.l.b16 %v311
    %v658 = vunpack.c.h.b16 %v311
    %v659 = vunpack.c.l.b16 %v312
    %v660 = vunpack.c.h.b16 %v312
    %v661 = vunpack.c.l.b16 %v313
    %v662 = vunpack.c.h.b16 %v313
    %v663 = vunpack.c.l.b16 %v314
    %v664 = vunpack.c.h.b16 %v314
    %v665 = vunpack.c.l.b16 %v315
    %v666 = vunpack.c.h.b16 %v315
    %v667 = vunpack.c.l.b16 %v316
    %v668 = vunpack.c.h.b16 %v316
    %v669 = vunpack.c.l.b16 %v317
    %v670 = vunpack.c.h.b16 %v317
    %v671 = vunpack.c.l.b16 %v318
    %v672 = vunpack.c.h.b16 %v318
    %v673 = vunpack.c.l.b16 %v319
    %v674 = vunpack.c.h.b16 %v319
    %v675 = vunpack.c.l.b16 %v320
    %v676 = vunpack.c.h.b16 %v320
    %v677 = vunpack.c.l.b16 %v321
    %v678 = vunpack.c.h.b16 %v321
    %v679 = vunpack.c.l.b16 %v322
    %v680 = vunpack.c.h.b16 %v322
    %v681 = vunpack.c.l.b16 %v323
    %v682 = vunpack.c.h.b16 %v323
    %v683 = vunpack.c.l.b16 %v324
    %v684 = vunpack.c.h.b16 %v324
    %v685 = vunpack.c.l.b16 %v325
    %v686 = vunpack.c.h.b16 %v325
    %v687 = vunpack.c.l.b16 %v326
    %v688 = vunpack.c.h.b16 %v326
    %v689 = vunpack.c.l.b16 %v327
    %v690 = vunpack.c.h.b16 %v327
    %v691 = vunpack.c.l.b16 %v328
    %v692 = vunpack.c.h.b16 %v328
    %v693 = vunpack.c.l.b16 %v329
    %v694 = vunpack.c.h.b16 %v329
    %v695 = vunpack.c.l.b16 %v330
    %v696 = vunpack.c.h.b16 %v330
    %v697 = vunpack.c.l.b16 %v331
    %v698 = vunpack.c.h.b16 %v331
    %v699 = vunpack.c.l.b16 %v332
    %v700 = vunpack.c.h.b16 %v332
    %v701 = vunpack.c.l.b16 %v333
    %v702 = vunpack.c.h.b16 %v333
    %v703 = vunpack.c.l.b16 %v334
    %v704 = vunpack.c.h.b16 %v334
    %v705 = vunpack.c.l.b16 %v335
    %v706 = vunpack.c.h.b16 %v335
    %v707 = vunpack.c.l.b16 %v336
    %v708 = vunpack.c.h.b16 %v336
    %v709 = vunpack.c.l.b16 %v337
    %v710 = vunpack.c.h.b16 %v337
    %v711 = vunpack.c.l.b16 %v338
    %v712 = vunpack.c.h.b16 %v338
    %v713 = vunpack.c.l.b16 %v339
    %v714 = vunpack.c.h.b16 %v339
    %v715 = vunpack.c.l.b16 %v340
    %v716 = vunpack.c.h.b16 %v340
    %v717 = vunpack.c.l.b16 %v341
    %v718 = vunpack.c.h.b16 %v341
    %v719 = vunpack.c.l.b16 %v342
    %v720 = vunpack.c.h.b16 %v342
    %v721 = vunpack.c.l.b16 %v343
    %v722 = vunpack.c.h.b16 %v343
    %v723 = vunpack.c.l.b16 %v344
    %v724 = vunpack.c.h.b16 %v344
    %v725 = vunpack.c.l.b16 %v345
    %v726 = vunpack.c.h.b16 %v345
    %v727 = vunpack.c.l.b16 %v346
    %v728 = vunpack.c.h.b16 %v346
    %v729 = vunpack.c.l.b16 %v347
    %v730 = vunpack.c.h.b16 %v347
    %v731 = vunpack.c.l.b16 %v348
    %v732 = vunpack.c.h.b16 %v348
    %v733 = vunpack.c.l.b16 %v349
    %v734 = vunpack.c.h.b16 %v349
    %v735 = vunpack.c.l.b16 %v350
    %v736 = vunpack.c.h.b16 %v350
    %v737 = vunpack.c.l.b16 %v351
    %v738 = vunpack.c.h.b16 %v351
    %v739 = vunpack.c.l.b16 %v352
    %v740 = vunpack.c.h.b16 %v352
    %v741 = vunpack.c.l.b16 %v353
    %v742 = vunpack.c.h.b16 %v353
    %v743 = vunpack.c.l.b16 %v354
    %v744 = vunpack.c.h.b16 %v354
    %v745 = vunpack.c.l.b16 %v355
    %v746 = vunpack.c.h.b16 %v355
    %v747 = vunpack.c.l.b16 %v356
    %v748 = vunpack.c.h.b16 %v356
    %v749 = vunpack.c.l.b16 %v357
    %v750 = vunpack.c.h.b16 %v357
    %v751 = vunpack.c.l.b16 %v358
    %v752 = vunpack.c.h.b16 %v358
    %v753 = vunpack.c.l.b16 %v359
    %v754 = vunpack.c.h.b16 %v359
    %v755 = vunpack.c.l.b16 %v360
    %v756 = vunpack.c.h.b16 %v360
    %v757 = vunpack.c.l.b16 %v361
    %v758 = vunpack.c.h.b16 %v361
    %v759 = vunpack.c.l.b16 %v362
    %v760 = vunpack.c.h.b16 %v362
    %v761 = vunpack.c.l.b16 %v363
    %v762 = vunpack.c.h.b16 %v363
    %v763 = vunpack.c.l.b16 %v364
    %v764 = vunpack.c.h.b16 %v364
    %v765 = vunpack.c.l.b16 %v365
    %v766 = vunpack.c.h.b16 %v365
    %v767 = vunpack.c.l.b16 %v366
    %v768 = vunpack.c.h.b16 %v366
    %v769 = vunpack.c.l.b16 %v367
    %v770 = vunpack.c.h.b16 %v367
    %v771 = vunpack.c.l.b16 %v368
    %v772 = vunpack.c.h.b16 %v368
    %v773 = vunpack.c.l.b16 %v369
    %v774 = vunpack.c.h.b16 %v369
    %v775 = vunpack.c.l.b16 %v370
    %v776 = vunpack.c.h.b16 %v370
    %v777 = vpack.c.b16 %v525, %v521
    %v778 = vpack.c.b16 %v526, %v522
    %v779 = vpack.c.b16 %v527, %v523
    %v780 = vpack.c.b16 %v528, %v524
    %v781 = vpack.c.b16 %v533, %v529
    %v782 = vpack.c.b16 %v534, %v530
    %v783 = vpack.c.b16 %v535, %v531
    %v784 = vpack.c.b16 %v536, %v532
    %v785 = vpack.c.b16 %v541, %v537
    %v786 = vpack.c.b16 %v542, %v538
    %v787 = vpack.c.b16 %v543, %v539
    %v788 = vpack.c.b16 %v544, %v540
    %v789 = vpack.c.b16 %v549, %v545
    %v790 = vpack.c.b16 %v550, %v546
    %v791 = vpack.c.b16 %v551, %v547
    %v792 = vpack.c.b16 %v552, %v548
    %v793 = vpack.c.b16 %v557, %v553
    %v794 = vpack.c.b16 %v558, %v554
    %v795 = vpack.c.b16 %v559, %v555
    %v796 = vpack.c.b16 %v560, %v556
    %v797 = vpack.c.b16 %v565, %v561
    %v798 = vpack.c.b16 %v566, %v562
    %v799 = vpack.c.b16 %v567, %v563
    %v800 = vpack.c.b16 %v568, %v564
    %v801 = vpack.c.b16 %v573, %v569
    %v802 = vpack.c.b16 %v574, %v570
    %v803 = vpack.c.b16 %v575, %v571
    %v804 = vpack.c.b16 %v576, %v572
    %v805 = vpack.c.b16 %v581, %v577
    %v806 = vpack.c.b16 %v582, %v578
    %v807 = vpack.c.b16 %v583, %v579
    %v808 = vpack.c.b16 %v584, %v580
    %v809 = vpack.c.b16 %v589, %v585
    %v810 = vpack.c.b16 %v590, %v586
    %v811 = vpack.c.b16 %v591, %v587
    %v812 = vpack.c.b16 %v592, %v588
    %v813 = vpack.c.b16 %v597, %v593
    %v814 = vpack.c.b16 %v598, %v594
    %v815 = vpack.c.b16 %v599, %v595
    %v816 = vpack.c.b16 %v600, %v596
    %v817 = vpack.c.b16 %v605, %v601
    %v818 = vpack.c.b16 %v606, %v602
    %v819 = vpack.c.b16 %v607, %v603
    %v820 = vpack.c.b16 %v608, %v604
    %v821 = vpack.c.b16 %v613, %v609
    %v822 = vpack.c.b16 %v614, %v610
    %v823 = vpack.c.b16 %v615, %v611
    %v824 = vpack.c.b16 %v616, %v612
    %v825 = vpack.c.b16 %v621, %v617
    %v826 = vpack.c.b16 %v622, %v618
    %v827 = vpack.c.b16 %v623, %v619
    %v828 = vpack.c.b16 %v624, %v620
    %v829 = vpack.c.b16 %v629, %v625
    %v830 = vpack.c.b16 %v630, %v626
    %v831 = vpack.c.b16 %v631, %v627
    %v832 = vpack.c.b16 %v632, %v628
    %v833 = vpack.c.b16 %v637, %v633
    %v834 = vpack.c.b16 %v638, %v634
    %v835 = vpack.c.b16 %v639, %v635
    %v836 = vpack.c.b16 %v640, %v636
    %v837 = vpack.c.b16 %v645, %v641
    %v838 = vpack.c.b16 %v646, %v642
    %v839 = vpack.c.b16 %v647, %v643
    %v840 = vpack.c.b16 %v648, %v644
    %v841 = vpack.c.b16 %v653, %v649
    %v842 = vpack.c.b16 %v654, %v650
    %v843 = vpack.c.b16 %v655, %v651
    %v844 = vpack.c.b16 %v656, %v652
    %v845 = vpack.c.b16 %v661, %v657
    %v846 = vpack.c.b16 %v662, %v658
    %v847 = vpack.c.b16 %v663, %v659
    %v848 = vpack.c.b16 %v664, %v660
    %v849 = vpack.c.b16 %v669, %v665
    %v850 = vpack.c.b16 %v670, %v666
    %v851 = vpack.c.b16 %v671, %v667
    %v852 = vpack.c.b16 %v672, %v668
    %v853 = vpack.c.b16 %v677, %v673
    %v854 = vpack.c.b16 %v678, %v674
    %v855 = vpack.c.b16 %v679, %v675
    %v856 = vpack.c.b16 %v680, %v676
    %v857 = vpack.c.b16 %v685, %v681
    %v858 = vpack.c.b16 %v686, %v682
    %v859 = vpack.c.b16 %v687, %v683
    %v860 = vpack.c.b16 %v688, %v684
    %v861 = vpack.c.b16 %v693, %v689
    %v862 = vpack.c.b16 %v694, %v690
    %v863 = vpack.c.b16 %v695, %v691
    %v864 = vpack.c.b16 %v696, %v692
    %v865 = vpack.c.b16 %v701, %v697
    %v866 = vpack.c.b16 %v702, %v698
    %v867 = vpack.c.b16 %v703, %v699
    %v868 = vpack.c.b16 %v704, %v700
    %v869 = vpack.c.b16 %v709, %v705
    %v870 = vpack.c.b16 %v710, %v706
    %v871 = vpack.c.b16 %v711, %v707
    %v872 = vpack.c.b16 %v712, %v708
    %v873 = vpack.c.b16 %v717, %v713
    %v874 = vpack.c.b16 %v718, %v714
    %v875 = vpack.c.b16 %v719, %v715
    %v876 = vpack.c.b16 %v720, %v716
    %v877 = vpack.c.b16 %v725, %v721
    %v878 = vpack.c.b16 %v726, %v722
    %v879 = vpack.c.b16 %v727, %v723
    %v880 = vpack.c.b16 %v728, %v724
    %v881 = vpack.c.b16 %v733, %v729
    %v882 = vpack.c.b16 %v734, %v730
    %v883 = vpack.c.b16 %v735, %v731
    %v884 = vpack.c.b16 %v736, %v732
    %v885 = vpack.c.b16 %v741, %v737
    %v886 = vpack.c.b16 %v742, %v738
    %v887 = vpack.c.b16 %v743, %v739
    %v888 = vpack.c.b16 %v744, %v740
    %v889 = vpack.c.b16 %v749, %v745
    %v890 = vpack.c.b16 %v750, %v746
    %v891 = vpack.c.b16 %v751, %v747
    %v892 = vpack.c.b16 %v752, %v748
    %v893 = vpack.c.b16 %v757, %v753
    %v894 = vpack.c.b16 %v758, %v754
    %v895 = vpack.c.b16 %v759, %v755
    %v896 = vpack.c.b16 %v760, %v756
    %v897 = vpack.c.b16 %v765, %v761
    %v898 = vpack.c.b16 %v766, %v762
    %v899 = vpack.c.b16 %v767, %v763
    %v900 = vpack.c.b16 %v768, %v764
    %v901 = vpack.c.b16 %v773, %v769
    %v902 = vpack.c.b16 %v774, %v770
    %v903 = vpack.c.b16 %v775, %v771
    %v904 = vpack.c.b16 %v776, %v772
    %1033 = vmatprep.subr.bf16.mxu0 %v778
    %1034 = vmatpush1.bf16.msra.mxu0 %v777
    %1035 = vmatprep.subr.bf16.mxu0 %v782
    %1036 = vmatpush1.bf16.msra.mxu0 %v781
    %1037 = vmatprep.subr.bf16.mxu0 %v786
    %1038 = vmatpush1.bf16.msra.mxu0 %v785
    %1039 = vmatprep.subr.bf16.mxu0 %v790
    %1040 = vmatpush1.bf16.msra.mxu0 %v789
    %1041 = vmatprep.subr.bf16.mxu0 %v794
    %1042 = vmatpush1.bf16.msra.mxu0 %v793
    %1043 = vmatprep.subr.bf16.mxu0 %v798
    %1044 = vmatpush1.bf16.msra.mxu0 %v797
    %1045 = vmatprep.subr.bf16.mxu0 %v802
    %1046 = vmatpush1.bf16.msra.mxu0 %v801
    %1047 = vmatprep.subr.bf16.mxu0 %v806
    %1048 = vmatpush1.bf16.msra.mxu0 %v805
    %1049 = vmatprep.subr.bf16.mxu0 %v810
    %1050 = vmatpush1.bf16.msra.mxu0 %v809
    %1051 = vmatprep.subr.bf16.mxu0 %v814
    %1052 = vmatpush1.bf16.msra.mxu0 %v813
    %1053 = vmatprep.subr.bf16.mxu0 %v818
    %1054 = vmatpush1.bf16.msra.mxu0 %v817
    %1055 = vmatprep.subr.bf16.mxu0 %v822
    %1056 = vmatpush1.bf16.msra.mxu0 %v821
    %1057 = vmatprep.subr.bf16.mxu0 %v826
    %1058 = vmatpush1.bf16.msra.mxu0 %v825
    %1059 = vmatprep.subr.bf16.mxu0 %v830
    %1060 = vmatpush1.bf16.msra.mxu0 %v829
    %1061 = vmatprep.subr.bf16.mxu0 %v834
    %1062 = vmatpush1.bf16.msra.mxu0 %v833
    %1063 = vmatprep.subr.bf16.mxu0 %v838
    %1064 = vmatpush1.bf16.msra.mxu0 %v837
    %1065 = vmatprep.mubr.bf16.mxu0 %v240
    %1066 = vmatmul.mubr.bf16.gmra.mrb[0].mxu0 %v239
    %v1067 = vpop.f32.mrb[0].mxu0
    %v1068 = vadd.f32 %v376, %v1067
    %v1069 = vpop.f32.mrb[0].mxu0
    %v1070 = vadd.f32 %v380, %v1069
    %v1071 = vpop.f32.mrb[0].mxu0
    %v1072 = vpop.f32.mrb[0].mxu0
    %1073 = vdwg.mxu0
    %1074 = vmatprep.subr.bf16.mxu0 %v842
    %1075 = vmatpush1.bf16.msra.mxu0 %v841
    %1076 = vmatprep.subr.bf16.mxu0 %v846
    %1077 = vmatpush1.bf16.msra.mxu0 %v845
    %1078 = vmatprep.subr.bf16.mxu0 %v850
    %1079 = vmatpush1.bf16.msra.mxu0 %v849
    %1080 = vmatprep.subr.bf16.mxu0 %v854
    %1081 = vmatpush1.bf16.msra.mxu0 %v853
    %1082 = vmatprep.subr.bf16.mxu0 %v858
    %1083 = vmatpush1.bf16.msra.mxu0 %v857
    %1084 = vmatprep.subr.bf16.mxu0 %v862
    %1085 = vmatpush1.bf16.msra.mxu0 %v861
    %1086 = vmatprep.subr.bf16.mxu0 %v866
    %1087 = vmatpush1.bf16.msra.mxu0 %v865
    %1088 = vmatprep.subr.bf16.mxu0 %v870
    %1089 = vmatpush1.bf16.msra.mxu0 %v869
    %1090 = vmatprep.subr.bf16.mxu0 %v874
    %1091 = vmatpush1.bf16.msra.mxu0 %v873
    %1092 = vmatprep.subr.bf16.mxu0 %v878
    %1093 = vmatpush1.bf16.msra.mxu0 %v877
    %1094 = vmatprep.subr.bf16.mxu0 %v882
    %1095 = vmatpush1.bf16.msra.mxu0 %v881
    %1096 = vmatprep.subr.bf16.mxu0 %v886
    %1097 = vmatpush1.bf16.msra.mxu0 %v885
    %1098 = vmatprep.subr.bf16.mxu0 %v890
    %1099 = vmatpush1.bf16.msra.mxu0 %v889
    %1100 = vmatprep.subr.bf16.mxu0 %v894
    %1101 = vmatpush1.bf16.msra.mxu0 %v893
    %1102 = vmatprep.subr.bf16.mxu0 %v898
    %1103 = vmatpush1.bf16.msra.mxu0 %v897
    %1104 = vmatprep.subr.bf16.mxu0 %v902
    %1105 = vmatpush1.bf16.msra.mxu0 %v901
    %1106 = vmatprep.mubr.bf16.mxu0 %v242
    %1107 = vmatmul.mubr.bf16.gmra.mrb[0].mxu0 %v241
    %v1108 = vpop.f32.mrb[0].mxu0
    %v1109 = vadd.f32 %v1068, %v1108
    %v1110 = vpop.f32.mrb[0].mxu0
    %v1111 = vadd.f32 %v1070, %v1110
    %v1112 = vpop.f32.mrb[0].mxu0
    %v1113 = vpop.f32.mrb[0].mxu0
    %1114 = vdwg.mxu0
    %1115 = vmatprep.subr.bf16.mxu0 %v780
    %1116 = vmatpush1.bf16.msra.mxu0 %v779
    %1117 = vmatprep.subr.bf16.mxu0 %v784
    %1118 = vmatpush1.bf16.msra.mxu0 %v783
    %1119 = vmatprep.subr.bf16.mxu0 %v788
    %1120 = vmatpush1.bf16.msra.mxu0 %v787
    %1121 = vmatprep.subr.bf16.mxu0 %v792
    %1122 = vmatpush1.bf16.msra.mxu0 %v791
    %1123 = vmatprep.subr.bf16.mxu0 %v796
    %1124 = vmatpush1.bf16.msra.mxu0 %v795
    %1125 = vmatprep.subr.bf16.mxu0 %v800
    %1126 = vmatpush1.bf16.msra.mxu0 %v799
    %1127 = vmatprep.subr.bf16.mxu0 %v804
    %1128 = vmatpush1.bf16.msra.mxu0 %v803
    %1129 = vmatprep.subr.bf16.mxu0 %v808
    %1130 = vmatpush1.bf16.msra.mxu0 %v807
    %1131 = vmatprep.subr.bf16.mxu0 %v812
    %1132 = vmatpush1.bf16.msra.mxu0 %v811
    %1133 = vmatprep.subr.bf16.mxu0 %v816
    %1134 = vmatpush1.bf16.msra.mxu0 %v815
    %1135 = vmatprep.subr.bf16.mxu0 %v820
    %1136 = vmatpush1.bf16.msra.mxu0 %v819
    %1137 = vmatprep.subr.bf16.mxu0 %v824
    %1138 = vmatpush1.bf16.msra.mxu0 %v823
    %1139 = vmatprep.subr.bf16.mxu0 %v828
    %1140 = vmatpush1.bf16.msra.mxu0 %v827
    %1141 = vmatprep.subr.bf16.mxu0 %v832
    %1142 = vmatpush1.bf16.msra.mxu0 %v831
    %1143 = vmatprep.subr.bf16.mxu0 %v836
    %1144 = vmatpush1.bf16.msra.mxu0 %v835
    %1145 = vmatprep.subr.bf16.mxu0 %v840
    %1146 = vmatpush1.bf16.msra.mxu0 %v839
    %1147 = vmatprep.mubr.bf16.mxu0 %v240
    %1148 = vmatmul.mubr.bf16.gmra.mrb[0].mxu0 %v239
    %v1149 = vpop.f32.mrb[0].mxu0
    %v1150 = vadd.f32 %v384, %v1149
    %v1151 = vpop.f32.mrb[0].mxu0
    %v1152 = vadd.f32 %v388, %v1151
    %v1153 = vpop.f32.mrb[0].mxu0
    %v1154 = vpop.f32.mrb[0].mxu0
    %1155 = vdwg.mxu0
    %1156 = vmatprep.subr.bf16.mxu0 %v844
    %1157 = vmatpush1.bf16.msra.mxu0 %v843
    %1158 = vmatprep.subr.bf16.mxu0 %v848
    %1159 = vmatpush1.bf16.msra.mxu0 %v847
    %1160 = vmatprep.subr.bf16.mxu0 %v852
    %1161 = vmatpush1.bf16.msra.mxu0 %v851
    %1162 = vmatprep.subr.bf16.mxu0 %v856
    %1163 = vmatpush1.bf16.msra.mxu0 %v855
    %1164 = vmatprep.subr.bf16.mxu0 %v860
    %1165 = vmatpush1.bf16.msra.mxu0 %v859
    %1166 = vmatprep.subr.bf16.mxu0 %v864
    %1167 = vmatpush1.bf16.msra.mxu0 %v863
    %1168 = vmatprep.subr.bf16.mxu0 %v868
    %1169 = vmatpush1.bf16.msra.mxu0 %v867
    %1170 = vmatprep.subr.bf16.mxu0 %v872
    %1171 = vmatpush1.bf16.msra.mxu0 %v871
    %1172 = vmatprep.subr.bf16.mxu0 %v876
    %1173 = vmatpush1.bf16.msra.mxu0 %v875
    %1174 = vmatprep.subr.bf16.mxu0 %v880
    %1175 = vmatpush1.bf16.msra.mxu0 %v879
    %1176 = vmatprep.subr.bf16.mxu0 %v884
    %1177 = vmatpush1.bf16.msra.mxu0 %v883
    %1178 = vmatprep.subr.bf16.mxu0 %v888
    %1179 = vmatpush1.bf16.msra.mxu0 %v887
    %1180 = vmatprep.subr.bf16.mxu0 %v892
    %1181 = vmatpush1.bf16.msra.mxu0 %v891
    %1182 = vmatprep.subr.bf16.mxu0 %v896
    %1183 = vmatpush1.bf16.msra.mxu0 %v895
    %1184 = vmatprep.subr.bf16.mxu0 %v900
    %1185 = vmatpush1.bf16.msra.mxu0 %v899
    %1186 = vmatprep.subr.bf16.mxu0 %v904
    %1187 = vmatpush1.bf16.msra.mxu0 %v903
    %1188 = vmatprep.mubr.bf16.mxu0 %v242
    %1189 = vmatmul.mubr.bf16.gmra.mrb[0].mxu0 %v241
    %v1190 = vpop.f32.mrb[0].mxu0
    %v1191 = vadd.f32 %v1150, %v1190
    %v1192 = vpop.f32.mrb[0].mxu0
    %v1193 = vadd.f32 %v1152, %v1192
    %v1194 = vpop.f32.mrb[0].mxu0
    %v1195 = vpop.f32.mrb[0].mxu0
    %1196 = vdwg.mxu0
    %v1197 = vmax.f32 %v1109, 0.0
    %v1198 = vmax.f32 %v1111, 0.0
    %v1199 = vmax.f32 %v1191, 0.0
    %v1200 = vmax.f32 %v1193, 0.0
    %v1201 = vpack.c.bf16 %v1197, %v1197
    %v1202 = vpack.c.bf16 %v1198, %v1198
    %v1203 = vpack.c.bf16 %v1199, %v1199
    %v1204 = vpack.c.bf16 %v1200, %v1200
    %v1205 = vld [vmem:[#allocation5] sm:$0xff]
    %v1206 = vld [vmem:[#allocation5 + $0x8] sm:$0xff]
    %v1207 = vld [vmem:[#allocation5 + $0x10] sm:$0xff]
    %v1208 = vld [vmem:[#allocation5 + $0x18] sm:$0xff]
    %v1209 = vld [vmem:[#allocation5 + $0x20] sm:$0xff]
    %v1210 = vld [vmem:[#allocation5 + $0x28] sm:$0xff]
    %v1211 = vld [vmem:[#allocation5 + $0x30] sm:$0xff]
    %v1212 = vld [vmem:[#allocation5 + $0x38] sm:$0xff]
    %v1213 = vld [vmem:[#allocation5 + $0x40] sm:$0xff]
    %v1214 = vld [vmem:[#allocation5 + $0x48] sm:$0xff]
    %v1215 = vld [vmem:[#allocation5 + $0x50] sm:$0xff]
    %v1216 = vld [vmem:[#allocation5 + $0x58] sm:$0xff]
    %v1217 = vld [vmem:[#allocation5 + $0x60] sm:$0xff]
    %v1218 = vld [vmem:[#allocation5 + $0x68] sm:$0xff]
    %v1219 = vld [vmem:[#allocation5 + $0x70] sm:$0xff]
    %v1220 = vld [vmem:[#allocation5 + $0x78] sm:$0xff]
    %v1221 = vld [vmem:[#allocation5 + $0x80] sm:$0xff]
    %v1222 = vld [vmem:[#allocation5 + $0x88] sm:$0xff]
    %v1223 = vld [vmem:[#allocation5 + $0x90] sm:$0xff]
    %v1224 = vld [vmem:[#allocation5 + $0x98] sm:$0xff]
    %v1225 = vld [vmem:[#allocation5 + $0xa0] sm:$0xff]
    %v1226 = vld [vmem:[#allocation5 + $0xa8] sm:$0xff]
    %v1227 = vld [vmem:[#allocation5 + $0xb0] sm:$0xff]
    %v1228 = vld [vmem:[#allocation5 + $0xb8] sm:$0xff]
    %v1229 = vld [vmem:[#allocation5 + $0xc0] sm:$0xff]
    %v1230 = vld [vmem:[#allocation5 + $0xc8] sm:$0xff]
    %v1231 = vld [vmem:[#allocation5 + $0xd0] sm:$0xff]
    %v1232 = vld [vmem:[#allocation5 + $0xd8] sm:$0xff]
    %v1233 = vld [vmem:[#allocation5 + $0xe0] sm:$0xff]
    %v1234 = vld [vmem:[#allocation5 + $0xe8] sm:$0xff]
    %v1235 = vld [vmem:[#allocation5 + $0xf0] sm:$0xff]
    %v1236 = vld [vmem:[#allocation5 + $0xf8] sm:$0xff]
    %v1237 = vld [vmem:[#allocation5 + $0x100] sm:$0xff]
    %v1238 = vld [vmem:[#allocation5 + $0x108] sm:$0xff]
    %v1239 = vld [vmem:[#allocation5 + $0x110] sm:$0xff]
    %v1240 = vld [vmem:[#allocation5 + $0x118] sm:$0xff]
    %v1241 = vld [vmem:[#allocation5 + $0x120] sm:$0xff]
    %v1242 = vld [vmem:[#allocation5 + $0x128] sm:$0xff]
    %v1243 = vld [vmem:[#allocation5 + $0x130] sm:$0xff]
    %v1244 = vld [vmem:[#allocation5 + $0x138] sm:$0xff]
    %v1245 = vld [vmem:[#allocation5 + $0x140] sm:$0xff]
    %v1246 = vld [vmem:[#allocation5 + $0x148] sm:$0xff]
    %v1247 = vld [vmem:[#allocation5 + $0x150] sm:$0xff]
    %v1248 = vld [vmem:[#allocation5 + $0x158] sm:$0xff]
    %v1249 = vld [vmem:[#allocation5 + $0x160] sm:$0xff]
    %v1250 = vld [vmem:[#allocation5 + $0x168] sm:$0xff]
    %v1251 = vld [vmem:[#allocation5 + $0x170] sm:$0xff]
    %v1252 = vld [vmem:[#allocation5 + $0x178] sm:$0xff]
    %v1253 = vld [vmem:[#allocation5 + $0x180] sm:$0xff]
    %v1254 = vld [vmem:[#allocation5 + $0x188] sm:$0xff]
    %v1255 = vld [vmem:[#allocation5 + $0x190] sm:$0xff]
    %v1256 = vld [vmem:[#allocation5 + $0x198] sm:$0xff]
    %v1257 = vld [vmem:[#allocation5 + $0x1a0] sm:$0xff]
    %v1258 = vld [vmem:[#allocation5 + $0x1a8] sm:$0xff]
    %v1259 = vld [vmem:[#allocation5 + $0x1b0] sm:$0xff]
    %v1260 = vld [vmem:[#allocation5 + $0x1b8] sm:$0xff]
    %v1261 = vld [vmem:[#allocation5 + $0x1c0] sm:$0xff]
    %v1262 = vld [vmem:[#allocation5 + $0x1c8] sm:$0xff]
    %v1263 = vld [vmem:[#allocation5 + $0x1d0] sm:$0xff]
    %v1264 = vld [vmem:[#allocation5 + $0x1d8] sm:$0xff]
    %v1265 = vld [vmem:[#allocation5 + $0x1e0] sm:$0xff]
    %v1266 = vld [vmem:[#allocation5 + $0x1e8] sm:$0xff]
    %v1267 = vld [vmem:[#allocation5 + $0x1f0] sm:$0xff]
    %v1268 = vld [vmem:[#allocation5 + $0x1f8] sm:$0xff]
    %v1269 = vld [vmem:[#allocation5 + $0x200] sm:$0xff]
    %v1270 = vld [vmem:[#allocation5 + $0x208] sm:$0xff]
    %v1271 = vld [vmem:[#allocation5 + $0x210] sm:$0xff]
    %v1272 = vld [vmem:[#allocation5 + $0x218] sm:$0xff]
    %v1273 = vld [vmem:[#allocation5 + $0x220] sm:$0xff]
    %v1274 = vld [vmem:[#allocation5 + $0x228] sm:$0xff]
    %v1275 = vld [vmem:[#allocation5 + $0x230] sm:$0xff]
    %v1276 = vld [vmem:[#allocation5 + $0x238] sm:$0xff]
    %v1277 = vld [vmem:[#allocation5 + $0x240] sm:$0xff]
    %v1278 = vld [vmem:[#allocation5 + $0x248] sm:$0xff]
    %v1279 = vld [vmem:[#allocation5 + $0x250] sm:$0xff]
    %v1280 = vld [vmem:[#allocation5 + $0x258] sm:$0xff]
    %v1281 = vld [vmem:[#allocation5 + $0x260] sm:$0xff]
    %v1282 = vld [vmem:[#allocation5 + $0x268] sm:$0xff]
    %v1283 = vld [vmem:[#allocation5 + $0x270] sm:$0xff]
    %v1284 = vld [vmem:[#allocation5 + $0x278] sm:$0xff]
    %v1285 = vld [vmem:[#allocation5 + $0x280] sm:$0xff]
    %v1286 = vld [vmem:[#allocation5 + $0x288] sm:$0xff]
    %v1287 = vld [vmem:[#allocation5 + $0x290] sm:$0xff]
    %v1288 = vld [vmem:[#allocation5 + $0x298] sm:$0xff]
    %v1289 = vld [vmem:[#allocation5 + $0x2a0] sm:$0xff]
    %v1290 = vld [vmem:[#allocation5 + $0x2a8] sm:$0xff]
    %v1291 = vld [vmem:[#allocation5 + $0x2b0] sm:$0xff]
    %v1292 = vld [vmem:[#allocation5 + $0x2b8] sm:$0xff]
    %v1293 = vld [vmem:[#allocation5 + $0x2c0] sm:$0xff]
    %v1294 = vld [vmem:[#allocation5 + $0x2c8] sm:$0xff]
    %v1295 = vld [vmem:[#allocation5 + $0x2d0] sm:$0xff]
    %v1296 = vld [vmem:[#allocation5 + $0x2d8] sm:$0xff]
    %v1297 = vld [vmem:[#allocation5 + $0x2e0] sm:$0xff]
    %v1298 = vld [vmem:[#allocation5 + $0x2e8] sm:$0xff]
    %v1299 = vld [vmem:[#allocation5 + $0x2f0] sm:$0xff]
    %v1300 = vld [vmem:[#allocation5 + $0x2f8] sm:$0xff]
    %v1301 = vld [vmem:[#allocation5 + $0x300] sm:$0xff]
    %v1302 = vld [vmem:[#allocation5 + $0x308] sm:$0xff]
    %v1303 = vld [vmem:[#allocation5 + $0x310] sm:$0xff]
    %v1304 = vld [vmem:[#allocation5 + $0x318] sm:$0xff]
    %v1305 = vld [vmem:[#allocation5 + $0x320] sm:$0xff]
    %v1306 = vld [vmem:[#allocation5 + $0x328] sm:$0xff]
    %v1307 = vld [vmem:[#allocation5 + $0x330] sm:$0xff]
    %v1308 = vld [vmem:[#allocation5 + $0x338] sm:$0xff]
    %v1309 = vld [vmem:[#allocation5 + $0x340] sm:$0xff]
    %v1310 = vld [vmem:[#allocation5 + $0x348] sm:$0xff]
    %v1311 = vld [vmem:[#allocation5 + $0x350] sm:$0xff]
    %v1312 = vld [vmem:[#allocation5 + $0x358] sm:$0xff]
    %v1313 = vld [vmem:[#allocation5 + $0x360] sm:$0xff]
    %v1314 = vld [vmem:[#allocation5 + $0x368] sm:$0xff]
    %v1315 = vld [vmem:[#allocation5 + $0x370] sm:$0xff]
    %v1316 = vld [vmem:[#allocation5 + $0x378] sm:$0xff]
    %v1317 = vld [vmem:[#allocation5 + $0x380] sm:$0xff]
    %v1318 = vld [vmem:[#allocation5 + $0x388] sm:$0xff]
    %v1319 = vld [vmem:[#allocation5 + $0x390] sm:$0xff]
    %v1320 = vld [vmem:[#allocation5 + $0x398] sm:$0xff]
    %v1321 = vld [vmem:[#allocation5 + $0x3a0] sm:$0xff]
    %v1322 = vld [vmem:[#allocation5 + $0x3a8] sm:$0xff]
    %v1323 = vld [vmem:[#allocation5 + $0x3b0] sm:$0xff]
    %v1324 = vld [vmem:[#allocation5 + $0x3b8] sm:$0xff]
    %v1325 = vld [vmem:[#allocation5 + $0x3c0] sm:$0xff]
    %v1326 = vld [vmem:[#allocation5 + $0x3c8] sm:$0xff]
    %v1327 = vld [vmem:[#allocation5 + $0x3d0] sm:$0xff]
    %v1328 = vld [vmem:[#allocation5 + $0x3d8] sm:$0xff]
    %v1329 = vld [vmem:[#allocation5 + $0x3e0] sm:$0xff]
    %v1330 = vld [vmem:[#allocation5 + $0x3e8] sm:$0xff]
    %v1331 = vld [vmem:[#allocation5 + $0x3f0] sm:$0xff]
    %v1332 = vld [vmem:[#allocation5 + $0x3f8] sm:$0xff]
    %v1333 = vld [vmem:[%s6] sm:$0xf]
    %v1335 = vlaneseq
    %v1336 = vshrl.u32 %v1335, 7
    %v1337 = vsub.s32 0, %v1336
    %v1338 = vrot.slane %v1333, %v1337
    %v1339 = vlaneseq
    %v1340 = vshrl.u32 %v1339, 7
    %v1341 = vsub.s32 1, %v1340
    %v1342 = vrot.slane %v1333, %v1341
    %v1343 = vlaneseq
    %v1344 = vshrl.u32 %v1343, 7
    %v1345 = vsub.s32 2, %v1344
    %v1346 = vrot.slane %v1333, %v1345
    %v1347 = vlaneseq
    %v1348 = vshrl.u32 %v1347, 7
    %v1349 = vsub.s32 3, %v1348
    %v1350 = vrot.slane %v1333, %v1349
    %v1483 = vunpack.c.l.b16 %v1205
    %v1484 = vunpack.c.h.b16 %v1205
    %v1485 = vunpack.c.l.b16 %v1206
    %v1486 = vunpack.c.h.b16 %v1206
    %v1487 = vunpack.c.l.b16 %v1207
    %v1488 = vunpack.c.h.b16 %v1207
    %v1489 = vunpack.c.l.b16 %v1208
    %v1490 = vunpack.c.h.b16 %v1208
    %v1491 = vunpack.c.l.b16 %v1209
    %v1492 = vunpack.c.h.b16 %v1209
    %v1493 = vunpack.c.l.b16 %v1210
    %v1494 = vunpack.c.h.b16 %v1210
    %v1495 = vunpack.c.l.b16 %v1211
    %v1496 = vunpack.c.h.b16 %v1211
    %v1497 = vunpack.c.l.b16 %v1212
    %v1498 = vunpack.c.h.b16 %v1212
    %v1499 = vunpack.c.l.b16 %v1213
    %v1500 = vunpack.c.h.b16 %v1213
    %v1501 = vunpack.c.l.b16 %v1214
    %v1502 = vunpack.c.h.b16 %v1214
    %v1503 = vunpack.c.l.b16 %v1215
    %v1504 = vunpack.c.h.b16 %v1215
    %v1505 = vunpack.c.l.b16 %v1216
    %v1506 = vunpack.c.h.b16 %v1216
    %v1507 = vunpack.c.l.b16 %v1217
    %v1508 = vunpack.c.h.b16 %v1217
    %v1509 = vunpack.c.l.b16 %v1218
    %v1510 = vunpack.c.h.b16 %v1218
    %v1511 = vunpack.c.l.b16 %v1219
    %v1512 = vunpack.c.h.b16 %v1219
    %v1513 = vunpack.c.l.b16 %v1220
    %v1514 = vunpack.c.h.b16 %v1220
    %v1515 = vunpack.c.l.b16 %v1221
    %v1516 = vunpack.c.h.b16 %v1221
    %v1517 = vunpack.c.l.b16 %v1222
    %v1518 = vunpack.c.h.b16 %v1222
    %v1519 = vunpack.c.l.b16 %v1223
    %v1520 = vunpack.c.h.b16 %v1223
    %v1521 = vunpack.c.l.b16 %v1224
    %v1522 = vunpack.c.h.b16 %v1224
    %v1523 = vunpack.c.l.b16 %v1225
    %v1524 = vunpack.c.h.b16 %v1225
    %v1525 = vunpack.c.l.b16 %v1226
    %v1526 = vunpack.c.h.b16 %v1226
    %v1527 = vunpack.c.l.b16 %v1227
    %v1528 = vunpack.c.h.b16 %v1227
    %v1529 = vunpack.c.l.b16 %v1228
    %v1530 = vunpack.c.h.b16 %v1228
    %v1531 = vunpack.c.l.b16 %v1229
    %v1532 = vunpack.c.h.b16 %v1229
    %v1533 = vunpack.c.l.b16 %v1230
    %v1534 = vunpack.c.h.b16 %v1230
    %v1535 = vunpack.c.l.b16 %v1231
    %v1536 = vunpack.c.h.b16 %v1231
    %v1537 = vunpack.c.l.b16 %v1232
    %v1538 = vunpack.c.h.b16 %v1232
    %v1539 = vunpack.c.l.b16 %v1233
    %v1540 = vunpack.c.h.b16 %v1233
    %v1541 = vunpack.c.l.b16 %v1234
    %v1542 = vunpack.c.h.b16 %v1234
    %v1543 = vunpack.c.l.b16 %v1235
    %v1544 = vunpack.c.h.b16 %v1235
    %v1545 = vunpack.c.l.b16 %v1236
    %v1546 = vunpack.c.h.b16 %v1236
    %v1547 = vunpack.c.l.b16 %v1237
    %v1548 = vunpack.c.h.b16 %v1237
    %v1549 = vunpack.c.l.b16 %v1238
    %v1550 = vunpack.c.h.b16 %v1238
    %v1551 = vunpack.c.l.b16 %v1239
    %v1552 = vunpack.c.h.b16 %v1239
    %v1553 = vunpack.c.l.b16 %v1240
    %v1554 = vunpack.c.h.b16 %v1240
    %v1555 = vunpack.c.l.b16 %v1241
    %v1556 = vunpack.c.h.b16 %v1241
    %v1557 = vunpack.c.l.b16 %v1242
    %v1558 = vunpack.c.h.b16 %v1242
    %v1559 = vunpack.c.l.b16 %v1243
    %v1560 = vunpack.c.h.b16 %v1243
    %v1561 = vunpack.c.l.b16 %v1244
    %v1562 = vunpack.c.h.b16 %v1244
    %v1563 = vunpack.c.l.b16 %v1245
    %v1564 = vunpack.c.h.b16 %v1245
    %v1565 = vunpack.c.l.b16 %v1246
    %v1566 = vunpack.c.h.b16 %v1246
    %v1567 = vunpack.c.l.b16 %v1247
    %v1568 = vunpack.c.h.b16 %v1247
    %v1569 = vunpack.c.l.b16 %v1248
    %v1570 = vunpack.c.h.b16 %v1248
    %v1571 = vunpack.c.l.b16 %v1249
    %v1572 = vunpack.c.h.b16 %v1249
    %v1573 = vunpack.c.l.b16 %v1250
    %v1574 = vunpack.c.h.b16 %v1250
    %v1575 = vunpack.c.l.b16 %v1251
    %v1576 = vunpack.c.h.b16 %v1251
    %v1577 = vunpack.c.l.b16 %v1252
    %v1578 = vunpack.c.h.b16 %v1252
    %v1579 = vunpack.c.l.b16 %v1253
    %v1580 = vunpack.c.h.b16 %v1253
    %v1581 = vunpack.c.l.b16 %v1254
    %v1582 = vunpack.c.h.b16 %v1254
    %v1583 = vunpack.c.l.b16 %v1255
    %v1584 = vunpack.c.h.b16 %v1255
    %v1585 = vunpack.c.l.b16 %v1256
    %v1586 = vunpack.c.h.b16 %v1256
    %v1587 = vunpack.c.l.b16 %v1257
    %v1588 = vunpack.c.h.b16 %v1257
    %v1589 = vunpack.c.l.b16 %v1258
    %v1590 = vunpack.c.h.b16 %v1258
    %v1591 = vunpack.c.l.b16 %v1259
    %v1592 = vunpack.c.h.b16 %v1259
    %v1593 = vunpack.c.l.b16 %v1260
    %v1594 = vunpack.c.h.b16 %v1260
    %v1595 = vunpack.c.l.b16 %v1261
    %v1596 = vunpack.c.h.b16 %v1261
    %v1597 = vunpack.c.l.b16 %v1262
    %v1598 = vunpack.c.h.b16 %v1262
    %v1599 = vunpack.c.l.b16 %v1263
    %v1600 = vunpack.c.h.b16 %v1263
    %v1601 = vunpack.c.l.b16 %v1264
    %v1602 = vunpack.c.h.b16 %v1264
    %v1603 = vunpack.c.l.b16 %v1265
    %v1604 = vunpack.c.h.b16 %v1265
    %v1605 = vunpack.c.l.b16 %v1266
    %v1606 = vunpack.c.h.b16 %v1266
    %v1607 = vunpack.c.l.b16 %v1267
    %v1608 = vunpack.c.h.b16 %v1267
    %v1609 = vunpack.c.l.b16 %v1268
    %v1610 = vunpack.c.h.b16 %v1268
    %v1611 = vunpack.c.l.b16 %v1269
    %v1612 = vunpack.c.h.b16 %v1269
    %v1613 = vunpack.c.l.b16 %v1270
    %v1614 = vunpack.c.h.b16 %v1270
    %v1615 = vunpack.c.l.b16 %v1271
    %v1616 = vunpack.c.h.b16 %v1271
    %v1617 = vunpack.c.l.b16 %v1272
    %v1618 = vunpack.c.h.b16 %v1272
    %v1619 = vunpack.c.l.b16 %v1273
    %v1620 = vunpack.c.h.b16 %v1273
    %v1621 = vunpack.c.l.b16 %v1274
    %v1622 = vunpack.c.h.b16 %v1274
    %v1623 = vunpack.c.l.b16 %v1275
    %v1624 = vunpack.c.h.b16 %v1275
    %v1625 = vunpack.c.l.b16 %v1276
    %v1626 = vunpack.c.h.b16 %v1276
    %v1627 = vunpack.c.l.b16 %v1277
    %v1628 = vunpack.c.h.b16 %v1277
    %v1629 = vunpack.c.l.b16 %v1278
    %v1630 = vunpack.c.h.b16 %v1278
    %v1631 = vunpack.c.l.b16 %v1279
    %v1632 = vunpack.c.h.b16 %v1279
    %v1633 = vunpack.c.l.b16 %v1280
    %v1634 = vunpack.c.h.b16 %v1280
    %v1635 = vunpack.c.l.b16 %v1281
    %v1636 = vunpack.c.h.b16 %v1281
    %v1637 = vunpack.c.l.b16 %v1282
    %v1638 = vunpack.c.h.b16 %v1282
    %v1639 = vunpack.c.l.b16 %v1283
    %v1640 = vunpack.c.h.b16 %v1283
    %v1641 = vunpack.c.l.b16 %v1284
    %v1642 = vunpack.c.h.b16 %v1284
    %v1643 = vunpack.c.l.b16 %v1285
    %v1644 = vunpack.c.h.b16 %v1285
    %v1645 = vunpack.c.l.b16 %v1286
    %v1646 = vunpack.c.h.b16 %v1286
    %v1647 = vunpack.c.l.b16 %v1287
    %v1648 = vunpack.c.h.b16 %v1287
    %v1649 = vunpack.c.l.b16 %v1288
    %v1650 = vunpack.c.h.b16 %v1288
    %v1651 = vunpack.c.l.b16 %v1289
    %v1652 = vunpack.c.h.b16 %v1289
    %v1653 = vunpack.c.l.b16 %v1290
    %v1654 = vunpack.c.h.b16 %v1290
    %v1655 = vunpack.c.l.b16 %v1291
    %v1656 = vunpack.c.h.b16 %v1291
    %v1657 = vunpack.c.l.b16 %v1292
    %v1658 = vunpack.c.h.b16 %v1292
    %v1659 = vunpack.c.l.b16 %v1293
    %v1660 = vunpack.c.h.b16 %v1293
    %v1661 = vunpack.c.l.b16 %v1294
    %v1662 = vunpack.c.h.b16 %v1294
    %v1663 = vunpack.c.l.b16 %v1295
    %v1664 = vunpack.c.h.b16 %v1295
    %v1665 = vunpack.c.l.b16 %v1296
    %v1666 = vunpack.c.h.b16 %v1296
    %v1667 = vunpack.c.l.b16 %v1297
    %v1668 = vunpack.c.h.b16 %v1297
    %v1669 = vunpack.c.l.b16 %v1298
    %v1670 = vunpack.c.h.b16 %v1298
    %v1671 = vunpack.c.l.b16 %v1299
    %v1672 = vunpack.c.h.b16 %v1299
    %v1673 = vunpack.c.l.b16 %v1300
    %v1674 = vunpack.c.h.b16 %v1300
    %v1675 = vunpack.c.l.b16 %v1301
    %v1676 = vunpack.c.h.b16 %v1301
    %v1677 = vunpack.c.l.b16 %v1302
    %v1678 = vunpack.c.h.b16 %v1302
    %v1679 = vunpack.c.l.b16 %v1303
    %v1680 = vunpack.c.h.b16 %v1303
    %v1681 = vunpack.c.l.b16 %v1304
    %v1682 = vunpack.c.h.b16 %v1304
    %v1683 = vunpack.c.l.b16 %v1305
    %v1684 = vunpack.c.h.b16 %v1305
    %v1685 = vunpack.c.l.b16 %v1306
    %v1686 = vunpack.c.h.b16 %v1306
    %v1687 = vunpack.c.l.b16 %v1307
    %v1688 = vunpack.c.h.b16 %v1307
    %v1689 = vunpack.c.l.b16 %v1308
    %v1690 = vunpack.c.h.b16 %v1308
    %v1691 = vunpack.c.l.b16 %v1309
    %v1692 = vunpack.c.h.b16 %v1309
    %v1693 = vunpack.c.l.b16 %v1310
    %v1694 = vunpack.c.h.b16 %v1310
    %v1695 = vunpack.c.l.b16 %v1311
    %v1696 = vunpack.c.h.b16 %v1311
    %v1697 = vunpack.c.l.b16 %v1312
    %v1698 = vunpack.c.h.b16 %v1312
    %v1699 = vunpack.c.l.b16 %v1313
    %v1700 = vunpack.c.h.b16 %v1313
    %v1701 = vunpack.c.l.b16 %v1314
    %v1702 = vunpack.c.h.b16 %v1314
    %v1703 = vunpack.c.l.b16 %v1315
    %v1704 = vunpack.c.h.b16 %v1315
    %v1705 = vunpack.c.l.b16 %v1316
    %v1706 = vunpack.c.h.b16 %v1316
    %v1707 = vunpack.c.l.b16 %v1317
    %v1708 = vunpack.c.h.b16 %v1317
    %v1709 = vunpack.c.l.b16 %v1318
    %v1710 = vunpack.c.h.b16 %v1318
    %v1711 = vunpack.c.l.b16 %v1319
    %v1712 = vunpack.c.h.b16 %v1319
    %v1713 = vunpack.c.l.b16 %v1320
    %v1714 = vunpack.c.h.b16 %v1320
    %v1715 = vunpack.c.l.b16 %v1321
    %v1716 = vunpack.c.h.b16 %v1321
    %v1717 = vunpack.c.l.b16 %v1322
    %v1718 = vunpack.c.h.b16 %v1322
    %v1719 = vunpack.c.l.b16 %v1323
    %v1720 = vunpack.c.h.b16 %v1323
    %v1721 = vunpack.c.l.b16 %v1324
    %v1722 = vunpack.c.h.b16 %v1324
    %v1723 = vunpack.c.l.b16 %v1325
    %v1724 = vunpack.c.h.b16 %v1325
    %v1725 = vunpack.c.l.b16 %v1326
    %v1726 = vunpack.c.h.b16 %v1326
    %v1727 = vunpack.c.l.b16 %v1327
    %v1728 = vunpack.c.h.b16 %v1327
    %v1729 = vunpack.c.l.b16 %v1328
    %v1730 = vunpack.c.h.b16 %v1328
    %v1731 = vunpack.c.l.b16 %v1329
    %v1732 = vunpack.c.h.b16 %v1329
    %v1733 = vunpack.c.l.b16 %v1330
    %v1734 = vunpack.c.h.b16 %v1330
    %v1735 = vunpack.c.l.b16 %v1331
    %v1736 = vunpack.c.h.b16 %v1331
    %v1737 = vunpack.c.l.b16 %v1332
    %v1738 = vunpack.c.h.b16 %v1332
    %v1739 = vpack.c.b16 %v1487, %v1483
    %v1740 = vpack.c.b16 %v1488, %v1484
    %v1741 = vpack.c.b16 %v1489, %v1485
    %v1742 = vpack.c.b16 %v1490, %v1486
    %v1743 = vpack.c.b16 %v1495, %v1491
    %v1744 = vpack.c.b16 %v1496, %v1492
    %v1745 = vpack.c.b16 %v1497, %v1493
    %v1746 = vpack.c.b16 %v1498, %v1494
    %v1747 = vpack.c.b16 %v1503, %v1499
    %v1748 = vpack.c.b16 %v1504, %v1500
    %v1749 = vpack.c.b16 %v1505, %v1501
    %v1750 = vpack.c.b16 %v1506, %v1502
    %v1751 = vpack.c.b16 %v1511, %v1507
    %v1752 = vpack.c.b16 %v1512, %v1508
    %v1753 = vpack.c.b16 %v1513, %v1509
    %v1754 = vpack.c.b16 %v1514, %v1510
    %v1755 = vpack.c.b16 %v1519, %v1515
    %v1756 = vpack.c.b16 %v1520, %v1516
    %v1757 = vpack.c.b16 %v1521, %v1517
    %v1758 = vpack.c.b16 %v1522, %v1518
    %v1759 = vpack.c.b16 %v1527, %v1523
    %v1760 = vpack.c.b16 %v1528, %v1524
    %v1761 = vpack.c.b16 %v1529, %v1525
    %v1762 = vpack.c.b16 %v1530, %v1526
    %v1763 = vpack.c.b16 %v1535, %v1531
    %v1764 = vpack.c.b16 %v1536, %v1532
    %v1765 = vpack.c.b16 %v1537, %v1533
    %v1766 = vpack.c.b16 %v1538, %v1534
    %v1767 = vpack.c.b16 %v1543, %v1539
    %v1768 = vpack.c.b16 %v1544, %v1540
    %v1769 = vpack.c.b16 %v1545, %v1541
    %v1770 = vpack.c.b16 %v1546, %v1542
    %v1771 = vpack.c.b16 %v1551, %v1547
    %v1772 = vpack.c.b16 %v1552, %v1548
    %v1773 = vpack.c.b16 %v1553, %v1549
    %v1774 = vpack.c.b16 %v1554, %v1550
    %v1775 = vpack.c.b16 %v1559, %v1555
    %v1776 = vpack.c.b16 %v1560, %v1556
    %v1777 = vpack.c.b16 %v1561, %v1557
    %v1778 = vpack.c.b16 %v1562, %v1558
    %v1779 = vpack.c.b16 %v1567, %v1563
    %v1780 = vpack.c.b16 %v1568, %v1564
    %v1781 = vpack.c.b16 %v1569, %v1565
    %v1782 = vpack.c.b16 %v1570, %v1566
    %v1783 = vpack.c.b16 %v1575, %v1571
    %v1784 = vpack.c.b16 %v1576, %v1572
    %v1785 = vpack.c.b16 %v1577, %v1573
    %v1786 = vpack.c.b16 %v1578, %v1574
    %v1787 = vpack.c.b16 %v1583, %v1579
    %v1788 = vpack.c.b16 %v1584, %v1580
    %v1789 = vpack.c.b16 %v1585, %v1581
    %v1790 = vpack.c.b16 %v1586, %v1582
    %v1791 = vpack.c.b16 %v1591, %v1587
    %v1792 = vpack.c.b16 %v1592, %v1588
    %v1793 = vpack.c.b16 %v1593, %v1589
    %v1794 = vpack.c.b16 %v1594, %v1590
    %v1795 = vpack.c.b16 %v1599, %v1595
    %v1796 = vpack.c.b16 %v1600, %v1596
    %v1797 = vpack.c.b16 %v1601, %v1597
    %v1798 = vpack.c.b16 %v1602, %v1598
    %v1799 = vpack.c.b16 %v1607, %v1603
    %v1800 = vpack.c.b16 %v1608, %v1604
    %v1801 = vpack.c.b16 %v1609, %v1605
    %v1802 = vpack.c.b16 %v1610, %v1606
    %v1803 = vpack.c.b16 %v1615, %v1611
    %v1804 = vpack.c.b16 %v1616, %v1612
    %v1805 = vpack.c.b16 %v1617, %v1613
    %v1806 = vpack.c.b16 %v1618, %v1614
    %v1807 = vpack.c.b16 %v1623, %v1619
    %v1808 = vpack.c.b16 %v1624, %v1620
    %v1809 = vpack.c.b16 %v1625, %v1621
    %v1810 = vpack.c.b16 %v1626, %v1622
    %v1811 = vpack.c.b16 %v1631, %v1627
    %v1812 = vpack.c.b16 %v1632, %v1628
    %v1813 = vpack.c.b16 %v1633, %v1629
    %v1814 = vpack.c.b16 %v1634, %v1630
    %v1815 = vpack.c.b16 %v1639, %v1635
    %v1816 = vpack.c.b16 %v1640, %v1636
    %v1817 = vpack.c.b16 %v1641, %v1637
    %v1818 = vpack.c.b16 %v1642, %v1638
    %v1819 = vpack.c.b16 %v1647, %v1643
    %v1820 = vpack.c.b16 %v1648, %v1644
    %v1821 = vpack.c.b16 %v1649, %v1645
    %v1822 = vpack.c.b16 %v1650, %v1646
    %v1823 = vpack.c.b16 %v1655, %v1651
    %v1824 = vpack.c.b16 %v1656, %v1652
    %v1825 = vpack.c.b16 %v1657, %v1653
    %v1826 = vpack.c.b16 %v1658, %v1654
    %v1827 = vpack.c.b16 %v1663, %v1659
    %v1828 = vpack.c.b16 %v1664, %v1660
    %v1829 = vpack.c.b16 %v1665, %v1661
    %v1830 = vpack.c.b16 %v1666, %v1662
    %v1831 = vpack.c.b16 %v1671, %v1667
    %v1832 = vpack.c.b16 %v1672, %v1668
    %v1833 = vpack.c.b16 %v1673, %v1669
    %v1834 = vpack.c.b16 %v1674, %v1670
    %v1835 = vpack.c.b16 %v1679, %v1675
    %v1836 = vpack.c.b16 %v1680, %v1676
    %v1837 = vpack.c.b16 %v1681, %v1677
    %v1838 = vpack.c.b16 %v1682, %v1678
    %v1839 = vpack.c.b16 %v1687, %v1683
    %v1840 = vpack.c.b16 %v1688, %v1684
    %v1841 = vpack.c.b16 %v1689, %v1685
    %v1842 = vpack.c.b16 %v1690, %v1686
    %v1843 = vpack.c.b16 %v1695, %v1691
    %v1844 = vpack.c.b16 %v1696, %v1692
    %v1845 = vpack.c.b16 %v1697, %v1693
    %v1846 = vpack.c.b16 %v1698, %v1694
    %v1847 = vpack.c.b16 %v1703, %v1699
    %v1848 = vpack.c.b16 %v1704, %v1700
    %v1849 = vpack.c.b16 %v1705, %v1701
    %v1850 = vpack.c.b16 %v1706, %v1702
    %v1851 = vpack.c.b16 %v1711, %v1707
    %v1852 = vpack.c.b16 %v1712, %v1708
    %v1853 = vpack.c.b16 %v1713, %v1709
    %v1854 = vpack.c.b16 %v1714, %v1710
    %v1855 = vpack.c.b16 %v1719, %v1715
    %v1856 = vpack.c.b16 %v1720, %v1716
    %v1857 = vpack.c.b16 %v1721, %v1717
    %v1858 = vpack.c.b16 %v1722, %v1718
    %v1859 = vpack.c.b16 %v1727, %v1723
    %v1860 = vpack.c.b16 %v1728, %v1724
    %v1861 = vpack.c.b16 %v1729, %v1725
    %v1862 = vpack.c.b16 %v1730, %v1726
    %v1863 = vpack.c.b16 %v1735, %v1731
    %v1864 = vpack.c.b16 %v1736, %v1732
    %v1865 = vpack.c.b16 %v1737, %v1733
    %v1866 = vpack.c.b16 %v1738, %v1734
    %1995 = vmatprep.subr.bf16.mxu0 %v1740
    %1996 = vmatpush1.bf16.msra.mxu0 %v1739
    %1997 = vmatprep.subr.bf16.mxu0 %v1744
    %1998 = vmatpush1.bf16.msra.mxu0 %v1743
    %1999 = vmatprep.subr.bf16.mxu0 %v1748
    %2000 = vmatpush1.bf16.msra.mxu0 %v1747
    %2001 = vmatprep.subr.bf16.mxu0 %v1752
    %2002 = vmatpush1.bf16.msra.mxu0 %v1751
    %2003 = vmatprep.subr.bf16.mxu0 %v1756
    %2004 = vmatpush1.bf16.msra.mxu0 %v1755
    %2005 = vmatprep.subr.bf16.mxu0 %v1760
    %2006 = vmatpush1.bf16.msra.mxu0 %v1759
    %2007 = vmatprep.subr.bf16.mxu0 %v1764
    %2008 = vmatpush1.bf16.msra.mxu0 %v1763
    %2009 = vmatprep.subr.bf16.mxu0 %v1768
    %2010 = vmatpush1.bf16.msra.mxu0 %v1767
    %2011 = vmatprep.subr.bf16.mxu0 %v1772
    %2012 = vmatpush1.bf16.msra.mxu0 %v1771
    %2013 = vmatprep.subr.bf16.mxu0 %v1776
    %2014 = vmatpush1.bf16.msra.mxu0 %v1775
    %2015 = vmatprep.subr.bf16.mxu0 %v1780
    %2016 = vmatpush1.bf16.msra.mxu0 %v1779
    %2017 = vmatprep.subr.bf16.mxu0 %v1784
    %2018 = vmatpush1.bf16.msra.mxu0 %v1783
    %2019 = vmatprep.subr.bf16.mxu0 %v1788
    %2020 = vmatpush1.bf16.msra.mxu0 %v1787
    %2021 = vmatprep.subr.bf16.mxu0 %v1792
    %2022 = vmatpush1.bf16.msra.mxu0 %v1791
    %2023 = vmatprep.subr.bf16.mxu0 %v1796
    %2024 = vmatpush1.bf16.msra.mxu0 %v1795
    %2025 = vmatprep.subr.bf16.mxu0 %v1800
    %2026 = vmatpush1.bf16.msra.mxu0 %v1799
    %2027 = vmatprep.mubr.bf16.mxu0 %v1202
    %2028 = vmatmul.mubr.bf16.gmra.mrb[0].mxu0 %v1201
    %v2029 = vpop.f32.mrb[0].mxu0
    %v2030 = vadd.f32 %v1338, %v2029
    %v2031 = vpop.f32.mrb[0].mxu0
    %v2032 = vadd.f32 %v1342, %v2031
    %v2033 = vpop.f32.mrb[0].mxu0
    %v2034 = vpop.f32.mrb[0].mxu0
    %2035 = vdwg.mxu0
    %2036 = vmatprep.subr.bf16.mxu0 %v1804
    %2037 = vmatpush1.bf16.msra.mxu0 %v1803
    %2038 = vmatprep.subr.bf16.mxu0 %v1808
    %2039 = vmatpush1.bf16.msra.mxu0 %v1807
    %2040 = vmatprep.subr.bf16.mxu0 %v1812
    %2041 = vmatpush1.bf16.msra.mxu0 %v1811
    %2042 = vmatprep.subr.bf16.mxu0 %v1816
    %2043 = vmatpush1.bf16.msra.mxu0 %v1815
    %2044 = vmatprep.subr.bf16.mxu0 %v1820
    %2045 = vmatpush1.bf16.msra.mxu0 %v1819
    %2046 = vmatprep.subr.bf16.mxu0 %v1824
    %2047 = vmatpush1.bf16.msra.mxu0 %v1823
    %2048 = vmatprep.subr.bf16.mxu0 %v1828
    %2049 = vmatpush1.bf16.msra.mxu0 %v1827
    %2050 = vmatprep.subr.bf16.mxu0 %v1832
    %2051 = vmatpush1.bf16.msra.mxu0 %v1831
    %2052 = vmatprep.subr.bf16.mxu0 %v1836
    %2053 = vmatpush1.bf16.msra.mxu0 %v1835
    %2054 = vmatprep.subr.bf16.mxu0 %v1840
    %2055 = vmatpush1.bf16.msra.mxu0 %v1839
    %2056 = vmatprep.subr.bf16.mxu0 %v1844
    %2057 = vmatpush1.bf16.msra.mxu0 %v1843
    %2058 = vmatprep.subr.bf16.mxu0 %v1848
    %2059 = vmatpush1.bf16.msra.mxu0 %v1847
    %2060 = vmatprep.subr.bf16.mxu0 %v1852
    %2061 = vmatpush1.bf16.msra.mxu0 %v1851
    %2062 = vmatprep.subr.bf16.mxu0 %v1856
    %2063 = vmatpush1.bf16.msra.mxu0 %v1855
    %2064 = vmatprep.subr.bf16.mxu0 %v1860
    %2065 = vmatpush1.bf16.msra.mxu0 %v1859
    %2066 = vmatprep.subr.bf16.mxu0 %v1864
    %2067 = vmatpush1.bf16.msra.mxu0 %v1863
    %2068 = vmatprep.mubr.bf16.mxu0 %v1204
    %2069 = vmatmul.mubr.bf16.gmra.mrb[0].mxu0 %v1203
    %v2070 = vpop.f32.mrb[0].mxu0
    %v2071 = vadd.f32 %v2030, %v2070
    %v2072 = vpop.f32.mrb[0].mxu0
    %v2073 = vadd.f32 %v2032, %v2072
    %v2074 = vpop.f32.mrb[0].mxu0
    %v2075 = vpop.f32.mrb[0].mxu0
    %2076 = vdwg.mxu0
    %2077 = vmatprep.subr.bf16.mxu0 %v1742
    %2078 = vmatpush1.bf16.msra.mxu0 %v1741
    %2079 = vmatprep.subr.bf16.mxu0 %v1746
    %2080 = vmatpush1.bf16.msra.mxu0 %v1745
    %2081 = vmatprep.subr.bf16.mxu0 %v1750
    %2082 = vmatpush1.bf16.msra.mxu0 %v1749
    %2083 = vmatprep.subr.bf16.mxu0 %v1754
    %2084 = vmatpush1.bf16.msra.mxu0 %v1753
    %2085 = vmatprep.subr.bf16.mxu0 %v1758
    %2086 = vmatpush1.bf16.msra.mxu0 %v1757
    %2087 = vmatprep.subr.bf16.mxu0 %v1762
    %2088 = vmatpush1.bf16.msra.mxu0 %v1761
    %2089 = vmatprep.subr.bf16.mxu0 %v1766
    %2090 = vmatpush1.bf16.msra.mxu0 %v1765
    %2091 = vmatprep.subr.bf16.mxu0 %v1770
    %2092 = vmatpush1.bf16.msra.mxu0 %v1769
    %2093 = vmatprep.subr.bf16.mxu0 %v1774
    %2094 = vmatpush1.bf16.msra.mxu0 %v1773
    %2095 = vmatprep.subr.bf16.mxu0 %v1778
    %2096 = vmatpush1.bf16.msra.mxu0 %v1777
    %2097 = vmatprep.subr.bf16.mxu0 %v1782
    %2098 = vmatpush1.bf16.msra.mxu0 %v1781
    %2099 = vmatprep.subr.bf16.mxu0 %v1786
    %2100 = vmatpush1.bf16.msra.mxu0 %v1785
    %2101 = vmatprep.subr.bf16.mxu0 %v1790
    %2102 = vmatpush1.bf16.msra.mxu0 %v1789
    %2103 = vmatprep.subr.bf16.mxu0 %v1794
    %2104 = vmatpush1.bf16.msra.mxu0 %v1793
    %2105 = vmatprep.subr.bf16.mxu0 %v1798
    %2106 = vmatpush1.bf16.msra.mxu0 %v1797
    %2107 = vmatprep.subr.bf16.mxu0 %v1802
    %2108 = vmatpush1.bf16.msra.mxu0 %v1801
    %2109 = vmatprep.mubr.bf16.mxu0 %v1202
    %2110 = vmatmul.mubr.bf16.gmra.mrb[0].mxu0 %v1201
    %v2111 = vpop.f32.mrb[0].mxu0
    %v2112 = vadd.f32 %v1346, %v2111
    %v2113 = vpop.f32.mrb[0].mxu0
    %v2114 = vadd.f32 %v1350, %v2113
    %v2115 = vpop.f32.mrb[0].mxu0
    %v2116 = vpop.f32.mrb[0].mxu0
    %2117 = vdwg.mxu0
    %2118 = vmatprep.subr.bf16.mxu0 %v1806
    %2119 = vmatpush1.bf16.msra.mxu0 %v1805
    %2120 = vmatprep.subr.bf16.mxu0 %v1810
    %2121 = vmatpush1.bf16.msra.mxu0 %v1809
    %2122 = vmatprep.subr.bf16.mxu0 %v1814
    %2123 = vmatpush1.bf16.msra.mxu0 %v1813
    %2124 = vmatprep.subr.bf16.mxu0 %v1818
    %2125 = vmatpush1.bf16.msra.mxu0 %v1817
    %2126 = vmatprep.subr.bf16.mxu0 %v1822
    %2127 = vmatpush1.bf16.msra.mxu0 %v1821
    %2128 = vmatprep.subr.bf16.mxu0 %v1826
    %2129 = vmatpush1.bf16.msra.mxu0 %v1825
    %2130 = vmatprep.subr.bf16.mxu0 %v1830
    %2131 = vmatpush1.bf16.msra.mxu0 %v1829
    %2132 = vmatprep.subr.bf16.mxu0 %v1834
    %2133 = vmatpush1.bf16.msra.mxu0 %v1833
    %2134 = vmatprep.subr.bf16.mxu0 %v1838
    %2135 = vmatpush1.bf16.msra.mxu0 %v1837
    %2136 = vmatprep.subr.bf16.mxu0 %v1842
    %2137 = vmatpush1.bf16.msra.mxu0 %v1841
    %2138 = vmatprep.subr.bf16.mxu0 %v1846
    %2139 = vmatpush1.bf16.msra.mxu0 %v1845
    %2140 = vmatprep.subr.bf16.mxu0 %v1850
    %2141 = vmatpush1.bf16.msra.mxu0 %v1849
    %2142 = vmatprep.subr.bf16.mxu0 %v1854
    %2143 = vmatpush1.bf16.msra.mxu0 %v1853
    %2144 = vmatprep.subr.bf16.mxu0 %v1858
    %2145 = vmatpush1.bf16.msra.mxu0 %v1857
    %2146 = vmatprep.subr.bf16.mxu0 %v1862
    %2147 = vmatpush1.bf16.msra.mxu0 %v1861
    %2148 = vmatprep.subr.bf16.mxu0 %v1866
    %2149 = vmatpush1.bf16.msra.mxu0 %v1865
    %2150 = vmatprep.mubr.bf16.mxu0 %v1204
    %2151 = vmatmul.mubr.bf16.gmra.mrb[0].mxu0 %v1203
    %v2152 = vpop.f32.mrb[0].mxu0
    %v2153 = vadd.f32 %v2112, %v2152
    %v2154 = vpop.f32.mrb[0].mxu0
    %v2155 = vadd.f32 %v2114, %v2154
    %v2156 = vpop.f32.mrb[0].mxu0
    %v2157 = vpop.f32.mrb[0].mxu0
    %2158 = vdwg.mxu0
    %v2159 = vmax.f32 %v2071, 0.0
    %v2160 = vmax.f32 %v2073, 0.0
    %v2161 = vmax.f32 %v2153, 0.0
    %v2162 = vmax.f32 %v2155, 0.0
    %v2163 = vpack.c.bf16 %v2159, %v2159
    %v2164 = vpack.c.bf16 %v2160, %v2160
    %v2165 = vpack.c.bf16 %v2161, %v2161
    %v2166 = vpack.c.bf16 %v2162, %v2162
    %v2167 = vld [vmem:[#allocation7] sm:$0xff]
    %v2168 = vld [vmem:[#allocation7 + $0x8] sm:$0xff]
    %v2169 = vld [vmem:[#allocation7 + $0x10] sm:$0xff]
    %v2170 = vld [vmem:[#allocation7 + $0x18] sm:$0xff]
    %v2171 = vld [vmem:[#allocation7 + $0x20] sm:$0xff]
    %v2172 = vld [vmem:[#allocation7 + $0x28] sm:$0xff]
    %v2173 = vld [vmem:[#allocation7 + $0x30] sm:$0xff]
    %v2174 = vld [vmem:[#allocation7 + $0x38] sm:$0xff]
    %v2175 = vld [vmem:[#allocation7 + $0x40] sm:$0xff]
    %v2176 = vld [vmem:[#allocation7 + $0x48] sm:$0xff]
    %v2177 = vld [vmem:[#allocation7 + $0x50] sm:$0xff]
    %v2178 = vld [vmem:[#allocation7 + $0x58] sm:$0xff]
    %v2179 = vld [vmem:[#allocation7 + $0x60] sm:$0xff]
    %v2180 = vld [vmem:[#allocation7 + $0x68] sm:$0xff]
    %v2181 = vld [vmem:[#allocation7 + $0x70] sm:$0xff]
    %v2182 = vld [vmem:[#allocation7 + $0x78] sm:$0xff]
    %v2183 = vld [vmem:[#allocation7 + $0x80] sm:$0xff]
    %v2184 = vld [vmem:[#allocation7 + $0x88] sm:$0xff]
    %v2185 = vld [vmem:[#allocation7 + $0x90] sm:$0xff]
    %v2186 = vld [vmem:[#allocation7 + $0x98] sm:$0xff]
    %v2187 = vld [vmem:[#allocation7 + $0xa0] sm:$0xff]
    %v2188 = vld [vmem:[#allocation7 + $0xa8] sm:$0xff]
    %v2189 = vld [vmem:[#allocation7 + $0xb0] sm:$0xff]
    %v2190 = vld [vmem:[#allocation7 + $0xb8] sm:$0xff]
    %v2191 = vld [vmem:[#allocation7 + $0xc0] sm:$0xff]
    %v2192 = vld [vmem:[#allocation7 + $0xc8] sm:$0xff]
    %v2193 = vld [vmem:[#allocation7 + $0xd0] sm:$0xff]
    %v2194 = vld [vmem:[#allocation7 + $0xd8] sm:$0xff]
    %v2195 = vld [vmem:[#allocation7 + $0xe0] sm:$0xff]
    %v2196 = vld [vmem:[#allocation7 + $0xe8] sm:$0xff]
    %v2197 = vld [vmem:[#allocation7 + $0xf0] sm:$0xff]
    %v2198 = vld [vmem:[#allocation7 + $0xf8] sm:$0xff]
    %v2199 = vld [vmem:[#allocation7 + $0x100] sm:$0xff]
    %v2200 = vld [vmem:[#allocation7 + $0x108] sm:$0xff]
    %v2201 = vld [vmem:[#allocation7 + $0x110] sm:$0xff]
    %v2202 = vld [vmem:[#allocation7 + $0x118] sm:$0xff]
    %v2203 = vld [vmem:[#allocation7 + $0x120] sm:$0xff]
    %v2204 = vld [vmem:[#allocation7 + $0x128] sm:$0xff]
    %v2205 = vld [vmem:[#allocation7 + $0x130] sm:$0xff]
    %v2206 = vld [vmem:[#allocation7 + $0x138] sm:$0xff]
    %v2207 = vld [vmem:[#allocation7 + $0x140] sm:$0xff]
    %v2208 = vld [vmem:[#allocation7 + $0x148] sm:$0xff]
    %v2209 = vld [vmem:[#allocation7 + $0x150] sm:$0xff]
    %v2210 = vld [vmem:[#allocation7 + $0x158] sm:$0xff]
    %v2211 = vld [vmem:[#allocation7 + $0x160] sm:$0xff]
    %v2212 = vld [vmem:[#allocation7 + $0x168] sm:$0xff]
    %v2213 = vld [vmem:[#allocation7 + $0x170] sm:$0xff]
    %v2214 = vld [vmem:[#allocation7 + $0x178] sm:$0xff]
    %v2215 = vld [vmem:[#allocation7 + $0x180] sm:$0xff]
    %v2216 = vld [vmem:[#allocation7 + $0x188] sm:$0xff]
    %v2217 = vld [vmem:[#allocation7 + $0x190] sm:$0xff]
    %v2218 = vld [vmem:[#allocation7 + $0x198] sm:$0xff]
    %v2219 = vld [vmem:[#allocation7 + $0x1a0] sm:$0xff]
    %v2220 = vld [vmem:[#allocation7 + $0x1a8] sm:$0xff]
    %v2221 = vld [vmem:[#allocation7 + $0x1b0] sm:$0xff]
    %v2222 = vld [vmem:[#allocation7 + $0x1b8] sm:$0xff]
    %v2223 = vld [vmem:[#allocation7 + $0x1c0] sm:$0xff]
    %v2224 = vld [vmem:[#allocation7 + $0x1c8] sm:$0xff]
    %v2225 = vld [vmem:[#allocation7 + $0x1d0] sm:$0xff]
    %v2226 = vld [vmem:[#allocation7 + $0x1d8] sm:$0xff]
    %v2227 = vld [vmem:[#allocation7 + $0x1e0] sm:$0xff]
    %v2228 = vld [vmem:[#allocation7 + $0x1e8] sm:$0xff]
    %v2229 = vld [vmem:[#allocation7 + $0x1f0] sm:$0xff]
    %v2230 = vld [vmem:[#allocation7 + $0x1f8] sm:$0xff]
    %v2231 = vld [vmem:[#allocation7 + $0x200] sm:$0xff]
    %v2232 = vld [vmem:[#allocation7 + $0x208] sm:$0xff]
    %v2233 = vld [vmem:[#allocation7 + $0x210] sm:$0xff]
    %v2234 = vld [vmem:[#allocation7 + $0x218] sm:$0xff]
    %v2235 = vld [vmem:[#allocation7 + $0x220] sm:$0xff]
    %v2236 = vld [vmem:[#allocation7 + $0x228] sm:$0xff]
    %v2237 = vld [vmem:[#allocation7 + $0x230] sm:$0xff]
    %v2238 = vld [vmem:[#allocation7 + $0x238] sm:$0xff]
    %v2239 = vld [vmem:[#allocation7 + $0x240] sm:$0xff]
    %v2240 = vld [vmem:[#allocation7 + $0x248] sm:$0xff]
    %v2241 = vld [vmem:[#allocation7 + $0x250] sm:$0xff]
    %v2242 = vld [vmem:[#allocation7 + $0x258] sm:$0xff]
    %v2243 = vld [vmem:[#allocation7 + $0x260] sm:$0xff]
    %v2244 = vld [vmem:[#allocation7 + $0x268] sm:$0xff]
    %v2245 = vld [vmem:[#allocation7 + $0x270] sm:$0xff]
    %v2246 = vld [vmem:[#allocation7 + $0x278] sm:$0xff]
    %v2247 = vld [vmem:[#allocation7 + $0x280] sm:$0xff]
    %v2248 = vld [vmem:[#allocation7 + $0x288] sm:$0xff]
    %v2249 = vld [vmem:[#allocation7 + $0x290] sm:$0xff]
    %v2250 = vld [vmem:[#allocation7 + $0x298] sm:$0xff]
    %v2251 = vld [vmem:[#allocation7 + $0x2a0] sm:$0xff]
    %v2252 = vld [vmem:[#allocation7 + $0x2a8] sm:$0xff]
    %v2253 = vld [vmem:[#allocation7 + $0x2b0] sm:$0xff]
    %v2254 = vld [vmem:[#allocation7 + $0x2b8] sm:$0xff]
    %v2255 = vld [vmem:[#allocation7 + $0x2c0] sm:$0xff]
    %v2256 = vld [vmem:[#allocation7 + $0x2c8] sm:$0xff]
    %v2257 = vld [vmem:[#allocation7 + $0x2d0] sm:$0xff]
    %v2258 = vld [vmem:[#allocation7 + $0x2d8] sm:$0xff]
    %v2259 = vld [vmem:[#allocation7 + $0x2e0] sm:$0xff]
    %v2260 = vld [vmem:[#allocation7 + $0x2e8] sm:$0xff]
    %v2261 = vld [vmem:[#allocation7 + $0x2f0] sm:$0xff]
    %v2262 = vld [vmem:[#allocation7 + $0x2f8] sm:$0xff]
    %v2263 = vld [vmem:[#allocation7 + $0x300] sm:$0xff]
    %v2264 = vld [vmem:[#allocation7 + $0x308] sm:$0xff]
    %v2265 = vld [vmem:[#allocation7 + $0x310] sm:$0xff]
    %v2266 = vld [vmem:[#allocation7 + $0x318] sm:$0xff]
    %v2267 = vld [vmem:[#allocation7 + $0x320] sm:$0xff]
    %v2268 = vld [vmem:[#allocation7 + $0x328] sm:$0xff]
    %v2269 = vld [vmem:[#allocation7 + $0x330] sm:$0xff]
    %v2270 = vld [vmem:[#allocation7 + $0x338] sm:$0xff]
    %v2271 = vld [vmem:[#allocation7 + $0x340] sm:$0xff]
    %v2272 = vld [vmem:[#allocation7 + $0x348] sm:$0xff]
    %v2273 = vld [vmem:[#allocation7 + $0x350] sm:$0xff]
    %v2274 = vld [vmem:[#allocation7 + $0x358] sm:$0xff]
    %v2275 = vld [vmem:[#allocation7 + $0x360] sm:$0xff]
    %v2276 = vld [vmem:[#allocation7 + $0x368] sm:$0xff]
    %v2277 = vld [vmem:[#allocation7 + $0x370] sm:$0xff]
    %v2278 = vld [vmem:[#allocation7 + $0x378] sm:$0xff]
    %v2279 = vld [vmem:[#allocation7 + $0x380] sm:$0xff]
    %v2280 = vld [vmem:[#allocation7 + $0x388] sm:$0xff]
    %v2281 = vld [vmem:[#allocation7 + $0x390] sm:$0xff]
    %v2282 = vld [vmem:[#allocation7 + $0x398] sm:$0xff]
    %v2283 = vld [vmem:[#allocation7 + $0x3a0] sm:$0xff]
    %v2284 = vld [vmem:[#allocation7 + $0x3a8] sm:$0xff]
    %v2285 = vld [vmem:[#allocation7 + $0x3b0] sm:$0xff]
    %v2286 = vld [vmem:[#allocation7 + $0x3b8] sm:$0xff]
    %v2287 = vld [vmem:[#allocation7 + $0x3c0] sm:$0xff]
    %v2288 = vld [vmem:[#allocation7 + $0x3c8] sm:$0xff]
    %v2289 = vld [vmem:[#allocation7 + $0x3d0] sm:$0xff]
    %v2290 = vld [vmem:[#allocation7 + $0x3d8] sm:$0xff]
    %v2291 = vld [vmem:[#allocation7 + $0x3e0] sm:$0xff]
    %v2292 = vld [vmem:[#allocation7 + $0x3e8] sm:$0xff]
    %v2293 = vld [vmem:[#allocation7 + $0x3f0] sm:$0xff]
    %v2294 = vld [vmem:[#allocation7 + $0x3f8] sm:$0xff]
    %v2295 = vld [vmem:[%s8] sm:$0xf]
    %v2297 = vlaneseq
    %v2298 = vshrl.u32 %v2297, 7
    %v2299 = vsub.s32 0, %v2298
    %v2300 = vrot.slane %v2295, %v2299
    %v2301 = vlaneseq
    %v2302 = vshrl.u32 %v2301, 7
    %v2303 = vsub.s32 1, %v2302
    %v2304 = vrot.slane %v2295, %v2303
    %v2305 = vlaneseq
    %v2306 = vshrl.u32 %v2305, 7
    %v2307 = vsub.s32 2, %v2306
    %v2308 = vrot.slane %v2295, %v2307
    %v2309 = vlaneseq
    %v2310 = vshrl.u32 %v2309, 7
    %v2311 = vsub.s32 3, %v2310
    %v2312 = vrot.slane %v2295, %v2311
    %v2445 = vunpack.c.l.b16 %v2167
    %v2446 = vunpack.c.h.b16 %v2167
    %v2447 = vunpack.c.l.b16 %v2168
    %v2448 = vunpack.c.h.b16 %v2168
    %v2449 = vunpack.c.l.b16 %v2169
    %v2450 = vunpack.c.h.b16 %v2169
    %v2451 = vunpack.c.l.b16 %v2170
    %v2452 = vunpack.c.h.b16 %v2170
    %v2453 = vunpack.c.l.b16 %v2171
    %v2454 = vunpack.c.h.b16 %v2171
    %v2455 = vunpack.c.l.b16 %v2172
    %v2456 = vunpack.c.h.b16 %v2172
    %v2457 = vunpack.c.l.b16 %v2173
    %v2458 = vunpack.c.h.b16 %v2173
    %v2459 = vunpack.c.l.b16 %v2174
    %v2460 = vunpack.c.h.b16 %v2174
    %v2461 = vunpack.c.l.b16 %v2175
    %v2462 = vunpack.c.h.b16 %v2175
    %v2463 = vunpack.c.l.b16 %v2176
    %v2464 = vunpack.c.h.b16 %v2176
    %v2465 = vunpack.c.l.b16 %v2177
    %v2466 = vunpack.c.h.b16 %v2177
    %v2467 = vunpack.c.l.b16 %v2178
    %v2468 = vunpack.c.h.b16 %v2178
    %v2469 = vunpack.c.l.b16 %v2179
    %v2470 = vunpack.c.h.b16 %v2179
    %v2471 = vunpack.c.l.b16 %v2180
    %v2472 = vunpack.c.h.b16 %v2180
    %v2473 = vunpack.c.l.b16 %v2181
    %v2474 = vunpack.c.h.b16 %v2181
    %v2475 = vunpack.c.l.b16 %v2182
    %v2476 = vunpack.c.h.b16 %v2182
    %v2477 = vunpack.c.l.b16 %v2183
    %v2478 = vunpack.c.h.b16 %v2183
    %v2479 = vunpack.c.l.b16 %v2184
    %v2480 = vunpack.c.h.b16 %v2184
    %v2481 = vunpack.c.l.b16 %v2185
    %v2482 = vunpack.c.h.b16 %v2185
    %v2483 = vunpack.c.l.b16 %v2186
    %v2484 = vunpack.c.h.b16 %v2186
    %v2485 = vunpack.c.l.b16 %v2187
    %v2486 = vunpack.c.h.b16 %v2187
    %v2487 = vunpack.c.l.b16 %v2188
    %v2488 = vunpack.c.h.b16 %v2188
    %v2489 = vunpack.c.l.b16 %v2189
    %v2490 = vunpack.c.h.b16 %v2189
    %v2491 = vunpack.c.l.b16 %v2190
    %v2492 = vunpack.c.h.b16 %v2190
    %v2493 = vunpack.c.l.b16 %v2191
    %v2494 = vunpack.c.h.b16 %v2191
    %v2495 = vunpack.c.l.b16 %v2192
    %v2496 = vunpack.c.h.b16 %v2192
    %v2497 = vunpack.c.l.b16 %v2193
    %v2498 = vunpack.c.h.b16 %v2193
    %v2499 = vunpack.c.l.b16 %v2194
    %v2500 = vunpack.c.h.b16 %v2194
    %v2501 = vunpack.c.l.b16 %v2195
    %v2502 = vunpack.c.h.b16 %v2195
    %v2503 = vunpack.c.l.b16 %v2196
    %v2504 = vunpack.c.h.b16 %v2196
    %v2505 = vunpack.c.l.b16 %v2197
    %v2506 = vunpack.c.h.b16 %v2197
    %v2507 = vunpack.c.l.b16 %v2198
    %v2508 = vunpack.c.h.b16 %v2198
    %v2509 = vunpack.c.l.b16 %v2199
    %v2510 = vunpack.c.h.b16 %v2199
    %v2511 = vunpack.c.l.b16 %v2200
    %v2512 = vunpack.c.h.b16 %v2200
    %v2513 = vunpack.c.l.b16 %v2201
    %v2514 = vunpack.c.h.b16 %v2201
    %v2515 = vunpack.c.l.b16 %v2202
    %v2516 = vunpack.c.h.b16 %v2202
    %v2517 = vunpack.c.l.b16 %v2203
    %v2518 = vunpack.c.h.b16 %v2203
    %v2519 = vunpack.c.l.b16 %v2204
    %v2520 = vunpack.c.h.b16 %v2204
    %v2521 = vunpack.c.l.b16 %v2205
    %v2522 = vunpack.c.h.b16 %v2205
    %v2523 = vunpack.c.l.b16 %v2206
    %v2524 = vunpack.c.h.b16 %v2206
    %v2525 = vunpack.c.l.b16 %v2207
    %v2526 = vunpack.c.h.b16 %v2207
    %v2527 = vunpack.c.l.b16 %v2208
    %v2528 = vunpack.c.h.b16 %v2208
    %v2529 = vunpack.c.l.b16 %v2209
    %v2530 = vunpack.c.h.b16 %v2209
    %v2531 = vunpack.c.l.b16 %v2210
    %v2532 = vunpack.c.h.b16 %v2210
    %v2533 = vunpack.c.l.b16 %v2211
    %v2534 = vunpack.c.h.b16 %v2211
    %v2535 = vunpack.c.l.b16 %v2212
    %v2536 = vunpack.c.h.b16 %v2212
    %v2537 = vunpack.c.l.b16 %v2213
    %v2538 = vunpack.c.h.b16 %v2213
    %v2539 = vunpack.c.l.b16 %v2214
    %v2540 = vunpack.c.h.b16 %v2214
    %v2541 = vunpack.c.l.b16 %v2215
    %v2542 = vunpack.c.h.b16 %v2215
    %v2543 = vunpack.c.l.b16 %v2216
    %v2544 = vunpack.c.h.b16 %v2216
    %v2545 = vunpack.c.l.b16 %v2217
    %v2546 = vunpack.c.h.b16 %v2217
    %v2547 = vunpack.c.l.b16 %v2218
    %v2548 = vunpack.c.h.b16 %v2218
    %v2549 = vunpack.c.l.b16 %v2219
    %v2550 = vunpack.c.h.b16 %v2219
    %v2551 = vunpack.c.l.b16 %v2220
    %v2552 = vunpack.c.h.b16 %v2220
    %v2553 = vunpack.c.l.b16 %v2221
    %v2554 = vunpack.c.h.b16 %v2221
    %v2555 = vunpack.c.l.b16 %v2222
    %v2556 = vunpack.c.h.b16 %v2222
    %v2557 = vunpack.c.l.b16 %v2223
    %v2558 = vunpack.c.h.b16 %v2223
    %v2559 = vunpack.c.l.b16 %v2224
    %v2560 = vunpack.c.h.b16 %v2224
    %v2561 = vunpack.c.l.b16 %v2225
    %v2562 = vunpack.c.h.b16 %v2225
    %v2563 = vunpack.c.l.b16 %v2226
    %v2564 = vunpack.c.h.b16 %v2226
    %v2565 = vunpack.c.l.b16 %v2227
    %v2566 = vunpack.c.h.b16 %v2227
    %v2567 = vunpack.c.l.b16 %v2228
    %v2568 = vunpack.c.h.b16 %v2228
    %v2569 = vunpack.c.l.b16 %v2229
    %v2570 = vunpack.c.h.b16 %v2229
    %v2571 = vunpack.c.l.b16 %v2230
    %v2572 = vunpack.c.h.b16 %v2230
    %v2573 = vunpack.c.l.b16 %v2231
    %v2574 = vunpack.c.h.b16 %v2231
    %v2575 = vunpack.c.l.b16 %v2232
    %v2576 = vunpack.c.h.b16 %v2232
    %v2577 = vunpack.c.l.b16 %v2233
    %v2578 = vunpack.c.h.b16 %v2233
    %v2579 = vunpack.c.l.b16 %v2234
    %v2580 = vunpack.c.h.b16 %v2234
    %v2581 = vunpack.c.l.b16 %v2235
    %v2582 = vunpack.c.h.b16 %v2235
    %v2583 = vunpack.c.l.b16 %v2236
    %v2584 = vunpack.c.h.b16 %v2236
    %v2585 = vunpack.c.l.b16 %v2237
    %v2586 = vunpack.c.h.b16 %v2237
    %v2587 = vunpack.c.l.b16 %v2238
    %v2588 = vunpack.c.h.b16 %v2238
    %v2589 = vunpack.c.l.b16 %v2239
    %v2590 = vunpack.c.h.b16 %v2239
    %v2591 = vunpack.c.l.b16 %v2240
    %v2592 = vunpack.c.h.b16 %v2240
    %v2593 = vunpack.c.l.b16 %v2241
    %v2594 = vunpack.c.h.b16 %v2241
    %v2595 = vunpack.c.l.b16 %v2242
    %v2596 = vunpack.c.h.b16 %v2242
    %v2597 = vunpack.c.l.b16 %v2243
    %v2598 = vunpack.c.h.b16 %v2243
    %v2599 = vunpack.c.l.b16 %v2244
    %v2600 = vunpack.c.h.b16 %v2244
    %v2601 = vunpack.c.l.b16 %v2245
    %v2602 = vunpack.c.h.b16 %v2245
    %v2603 = vunpack.c.l.b16 %v2246
    %v2604 = vunpack.c.h.b16 %v2246
    %v2605 = vunpack.c.l.b16 %v2247
    %v2606 = vunpack.c.h.b16 %v2247
    %v2607 = vunpack.c.l.b16 %v2248
    %v2608 = vunpack.c.h.b16 %v2248
    %v2609 = vunpack.c.l.b16 %v2249
    %v2610 = vunpack.c.h.b16 %v2249
    %v2611 = vunpack.c.l.b16 %v2250
    %v2612 = vunpack.c.h.b16 %v2250
    %v2613 = vunpack.c.l.b16 %v2251
    %v2614 = vunpack.c.h.b16 %v2251
    %v2615 = vunpack.c.l.b16 %v2252
    %v2616 = vunpack.c.h.b16 %v2252
    %v2617 = vunpack.c.l.b16 %v2253
    %v2618 = vunpack.c.h.b16 %v2253
    %v2619 = vunpack.c.l.b16 %v2254
    %v2620 = vunpack.c.h.b16 %v2254
    %v2621 = vunpack.c.l.b16 %v2255
    %v2622 = vunpack.c.h.b16 %v2255
    %v2623 = vunpack.c.l.b16 %v2256
    %v2624 = vunpack.c.h.b16 %v2256
    %v2625 = vunpack.c.l.b16 %v2257
    %v2626 = vunpack.c.h.b16 %v2257
    %v2627 = vunpack.c.l.b16 %v2258
    %v2628 = vunpack.c.h.b16 %v2258
    %v2629 = vunpack.c.l.b16 %v2259
    %v2630 = vunpack.c.h.b16 %v2259
    %v2631 = vunpack.c.l.b16 %v2260
    %v2632 = vunpack.c.h.b16 %v2260
    %v2633 = vunpack.c.l.b16 %v2261
    %v2634 = vunpack.c.h.b16 %v2261
    %v2635 = vunpack.c.l.b16 %v2262
    %v2636 = vunpack.c.h.b16 %v2262
    %v2637 = vunpack.c.l.b16 %v2263
    %v2638 = vunpack.c.h.b16 %v2263
    %v2639 = vunpack.c.l.b16 %v2264
    %v2640 = vunpack.c.h.b16 %v2264
    %v2641 = vunpack.c.l.b16 %v2265
    %v2642 = vunpack.c.h.b16 %v2265
    %v2643 = vunpack.c.l.b16 %v2266
    %v2644 = vunpack.c.h.b16 %v2266
    %v2645 = vunpack.c.l.b16 %v2267
    %v2646 = vunpack.c.h.b16 %v2267
    %v2647 = vunpack.c.l.b16 %v2268
    %v2648 = vunpack.c.h.b16 %v2268
    %v2649 = vunpack.c.l.b16 %v2269
    %v2650 = vunpack.c.h.b16 %v2269
    %v2651 = vunpack.c.l.b16 %v2270
    %v2652 = vunpack.c.h.b16 %v2270
    %v2653 = vunpack.c.l.b16 %v2271
    %v2654 = vunpack.c.h.b16 %v2271
    %v2655 = vunpack.c.l.b16 %v2272
    %v2656 = vunpack.c.h.b16 %v2272
    %v2657 = vunpack.c.l.b16 %v2273
    %v2658 = vunpack.c.h.b16 %v2273
    %v2659 = vunpack.c.l.b16 %v2274
    %v2660 = vunpack.c.h.b16 %v2274
    %v2661 = vunpack.c.l.b16 %v2275
    %v2662 = vunpack.c.h.b16 %v2275
    %v2663 = vunpack.c.l.b16 %v2276
    %v2664 = vunpack.c.h.b16 %v2276
    %v2665 = vunpack.c.l.b16 %v2277
    %v2666 = vunpack.c.h.b16 %v2277
    %v2667 = vunpack.c.l.b16 %v2278
    %v2668 = vunpack.c.h.b16 %v2278
    %v2669 = vunpack.c.l.b16 %v2279
    %v2670 = vunpack.c.h.b16 %v2279
    %v2671 = vunpack.c.l.b16 %v2280
    %v2672 = vunpack.c.h.b16 %v2280
    %v2673 = vunpack.c.l.b16 %v2281
    %v2674 = vunpack.c.h.b16 %v2281
    %v2675 = vunpack.c.l.b16 %v2282
    %v2676 = vunpack.c.h.b16 %v2282
    %v2677 = vunpack.c.l.b16 %v2283
    %v2678 = vunpack.c.h.b16 %v2283
    %v2679 = vunpack.c.l.b16 %v2284
    %v2680 = vunpack.c.h.b16 %v2284
    %v2681 = vunpack.c.l.b16 %v2285
    %v2682 = vunpack.c.h.b16 %v2285
    %v2683 = vunpack.c.l.b16 %v2286
    %v2684 = vunpack.c.h.b16 %v2286
    %v2685 = vunpack.c.l.b16 %v2287
    %v2686 = vunpack.c.h.b16 %v2287
    %v2687 = vunpack.c.l.b16 %v2288
    %v2688 = vunpack.c.h.b16 %v2288
    %v2689 = vunpack.c.l.b16 %v2289
    %v2690 = vunpack.c.h.b16 %v2289
    %v2691 = vunpack.c.l.b16 %v2290
    %v2692 = vunpack.c.h.b16 %v2290
    %v2693 = vunpack.c.l.b16 %v2291
    %v2694 = vunpack.c.h.b16 %v2291
    %v2695 = vunpack.c.l.b16 %v2292
    %v2696 = vunpack.c.h.b16 %v2292
    %v2697 = vunpack.c.l.b16 %v2293
    %v2698 = vunpack.c.h.b16 %v2293
    %v2699 = vunpack.c.l.b16 %v2294
    %v2700 = vunpack.c.h.b16 %v2294
    %v2701 = vpack.c.b16 %v2449, %v2445
    %v2702 = vpack.c.b16 %v2450, %v2446
    %v2703 = vpack.c.b16 %v2451, %v2447
    %v2704 = vpack.c.b16 %v2452, %v2448
    %v2705 = vpack.c.b16 %v2457, %v2453
    %v2706 = vpack.c.b16 %v2458, %v2454
    %v2707 = vpack.c.b16 %v2459, %v2455
    %v2708 = vpack.c.b16 %v2460, %v2456
    %v2709 = vpack.c.b16 %v2465, %v2461
    %v2710 = vpack.c.b16 %v2466, %v2462
    %v2711 = vpack.c.b16 %v2467, %v2463
    %v2712 = vpack.c.b16 %v2468, %v2464
    %v2713 = vpack.c.b16 %v2473, %v2469
    %v2714 = vpack.c.b16 %v2474, %v2470
    %v2715 = vpack.c.b16 %v2475, %v2471
    %v2716 = vpack.c.b16 %v2476, %v2472
    %v2717 = vpack.c.b16 %v2481, %v2477
    %v2718 = vpack.c.b16 %v2482, %v2478
    %v2719 = vpack.c.b16 %v2483, %v2479
    %v2720 = vpack.c.b16 %v2484, %v2480
    %v2721 = vpack.c.b16 %v2489, %v2485
    %v2722 = vpack.c.b16 %v2490, %v2486
    %v2723 = vpack.c.b16 %v2491, %v2487
    %v2724 = vpack.c.b16 %v2492, %v2488
    %v2725 = vpack.c.b16 %v2497, %v2493
    %v2726 = vpack.c.b16 %v2498, %v2494
    %v2727 = vpack.c.b16 %v2499, %v2495
    %v2728 = vpack.c.b16 %v2500, %v2496
    %v2729 = vpack.c.b16 %v2505, %v2501
    %v2730 = vpack.c.b16 %v2506, %v2502
    %v2731 = vpack.c.b16 %v2507, %v2503
    %v2732 = vpack.c.b16 %v2508, %v2504
    %v2733 = vpack.c.b16 %v2513, %v2509
    %v2734 = vpack.c.b16 %v2514, %v2510
    %v2735 = vpack.c.b16 %v2515, %v2511
    %v2736 = vpack.c.b16 %v2516, %v2512
    %v2737 = vpack.c.b16 %v2521, %v2517
    %v2738 = vpack.c.b16 %v2522, %v2518
    %v2739 = vpack.c.b16 %v2523, %v2519
    %v2740 = vpack.c.b16 %v2524, %v2520
    %v2741 = vpack.c.b16 %v2529, %v2525
    %v2742 = vpack.c.b16 %v2530, %v2526
    %v2743 = vpack.c.b16 %v2531, %v2527
    %v2744 = vpack.c.b16 %v2532, %v2528
    %v2745 = vpack.c.b16 %v2537, %v2533
    %v2746 = vpack.c.b16 %v2538, %v2534
    %v2747 = vpack.c.b16 %v2539, %v2535
    %v2748 = vpack.c.b16 %v2540, %v2536
    %v2749 = vpack.c.b16 %v2545, %v2541
    %v2750 = vpack.c.b16 %v2546, %v2542
    %v2751 = vpack.c.b16 %v2547, %v2543
    %v2752 = vpack.c.b16 %v2548, %v2544
    %v2753 = vpack.c.b16 %v2553, %v2549
    %v2754 = vpack.c.b16 %v2554, %v2550
    %v2755 = vpack.c.b16 %v2555, %v2551
    %v2756 = vpack.c.b16 %v2556, %v2552
    %v2757 = vpack.c.b16 %v2561, %v2557
    %v2758 = vpack.c.b16 %v2562, %v2558
    %v2759 = vpack.c.b16 %v2563, %v2559
    %v2760 = vpack.c.b16 %v2564, %v2560
    %v2761 = vpack.c.b16 %v2569, %v2565
    %v2762 = vpack.c.b16 %v2570, %v2566
    %v2763 = vpack.c.b16 %v2571, %v2567
    %v2764 = vpack.c.b16 %v2572, %v2568
    %v2765 = vpack.c.b16 %v2577, %v2573
    %v2766 = vpack.c.b16 %v2578, %v2574
    %v2767 = vpack.c.b16 %v2579, %v2575
    %v2768 = vpack.c.b16 %v2580, %v2576
    %v2769 = vpack.c.b16 %v2585, %v2581
    %v2770 = vpack.c.b16 %v2586, %v2582
    %v2771 = vpack.c.b16 %v2587, %v2583
    %v2772 = vpack.c.b16 %v2588, %v2584
    %v2773 = vpack.c.b16 %v2593, %v2589
    %v2774 = vpack.c.b16 %v2594, %v2590
    %v2775 = vpack.c.b16 %v2595, %v2591
    %v2776 = vpack.c.b16 %v2596, %v2592
    %v2777 = vpack.c.b16 %v2601, %v2597
    %v2778 = vpack.c.b16 %v2602, %v2598
    %v2779 = vpack.c.b16 %v2603, %v2599
    %v2780 = vpack.c.b16 %v2604, %v2600
    %v2781 = vpack.c.b16 %v2609, %v2605
    %v2782 = vpack.c.b16 %v2610, %v2606
    %v2783 = vpack.c.b16 %v2611, %v2607
    %v2784 = vpack.c.b16 %v2612, %v2608
    %v2785 = vpack.c.b16 %v2617, %v2613
    %v2786 = vpack.c.b16 %v2618, %v2614
    %v2787 = vpack.c.b16 %v2619, %v2615
    %v2788 = vpack.c.b16 %v2620, %v2616
    %v2789 = vpack.c.b16 %v2625, %v2621
    %v2790 = vpack.c.b16 %v2626, %v2622
    %v2791 = vpack.c.b16 %v2627, %v2623
    %v2792 = vpack.c.b16 %v2628, %v2624
    %v2793 = vpack.c.b16 %v2633, %v2629
    %v2794 = vpack.c.b16 %v2634, %v2630
    %v2795 = vpack.c.b16 %v2635, %v2631
    %v2796 = vpack.c.b16 %v2636, %v2632
    %v2797 = vpack.c.b16 %v2641, %v2637
    %v2798 = vpack.c.b16 %v2642, %v2638
    %v2799 = vpack.c.b16 %v2643, %v2639
    %v2800 = vpack.c.b16 %v2644, %v2640
    %v2801 = vpack.c.b16 %v2649, %v2645
    %v2802 = vpack.c.b16 %v2650, %v2646
    %v2803 = vpack.c.b16 %v2651, %v2647
    %v2804 = vpack.c.b16 %v2652, %v2648
    %v2805 = vpack.c.b16 %v2657, %v2653
    %v2806 = vpack.c.b16 %v2658, %v2654
    %v2807 = vpack.c.b16 %v2659, %v2655
    %v2808 = vpack.c.b16 %v2660, %v2656
    %v2809 = vpack.c.b16 %v2665, %v2661
    %v2810 = vpack.c.b16 %v2666, %v2662
    %v2811 = vpack.c.b16 %v2667, %v2663
    %v2812 = vpack.c.b16 %v2668, %v2664
    %v2813 = vpack.c.b16 %v2673, %v2669
    %v2814 = vpack.c.b16 %v2674, %v2670
    %v2815 = vpack.c.b16 %v2675, %v2671
    %v2816 = vpack.c.b16 %v2676, %v2672
    %v2817 = vpack.c.b16 %v2681, %v2677
    %v2818 = vpack.c.b16 %v2682, %v2678
    %v2819 = vpack.c.b16 %v2683, %v2679
    %v2820 = vpack.c.b16 %v2684, %v2680
    %v2821 = vpack.c.b16 %v2689, %v2685
    %v2822 = vpack.c.b16 %v2690, %v2686
    %v2823 = vpack.c.b16 %v2691, %v2687
    %v2824 = vpack.c.b16 %v2692, %v2688
    %v2825 = vpack.c.b16 %v2697, %v2693
    %v2826 = vpack.c.b16 %v2698, %v2694
    %v2827 = vpack.c.b16 %v2699, %v2695
    %v2828 = vpack.c.b16 %v2700, %v2696
    %2957 = vmatprep.subr.bf16.mxu0 %v2702
    %2958 = vmatpush1.bf16.msra.mxu0 %v2701
    %2959 = vmatprep.subr.bf16.mxu0 %v2706
    %2960 = vmatpush1.bf16.msra.mxu0 %v2705
    %2961 = vmatprep.subr.bf16.mxu0 %v2710
    %2962 = vmatpush1.bf16.msra.mxu0 %v2709
    %2963 = vmatprep.subr.bf16.mxu0 %v2714
    %2964 = vmatpush1.bf16.msra.mxu0 %v2713
    %2965 = vmatprep.subr.bf16.mxu0 %v2718
    %2966 = vmatpush1.bf16.msra.mxu0 %v2717
    %2967 = vmatprep.subr.bf16.mxu0 %v2722
    %2968 = vmatpush1.bf16.msra.mxu0 %v2721
    %2969 = vmatprep.subr.bf16.mxu0 %v2726
    %2970 = vmatpush1.bf16.msra.mxu0 %v2725
    %2971 = vmatprep.subr.bf16.mxu0 %v2730
    %2972 = vmatpush1.bf16.msra.mxu0 %v2729
    %2973 = vmatprep.subr.bf16.mxu0 %v2734
    %2974 = vmatpush1.bf16.msra.mxu0 %v2733
    %2975 = vmatprep.subr.bf16.mxu0 %v2738
    %2976 = vmatpush1.bf16.msra.mxu0 %v2737
    %2977 = vmatprep.subr.bf16.mxu0 %v2742
    %2978 = vmatpush1.bf16.msra.mxu0 %v2741
    %2979 = vmatprep.subr.bf16.mxu0 %v2746
    %2980 = vmatpush1.bf16.msra.mxu0 %v2745
    %2981 = vmatprep.subr.bf16.mxu0 %v2750
    %2982 = vmatpush1.bf16.msra.mxu0 %v2749
    %2983 = vmatprep.subr.bf16.mxu0 %v2754
    %2984 = vmatpush1.bf16.msra.mxu0 %v2753
    %2985 = vmatprep.subr.bf16.mxu0 %v2758
    %2986 = vmatpush1.bf16.msra.mxu0 %v2757
    %2987 = vmatprep.subr.bf16.mxu0 %v2762
    %2988 = vmatpush1.bf16.msra.mxu0 %v2761
    %2989 = vmatprep.mubr.bf16.mxu0 %v2164
    %2990 = vmatmul.mubr.bf16.gmra.mrb[0].mxu0 %v2163
    %v2991 = vpop.f32.mrb[0].mxu0
    %v2992 = vadd.f32 %v2300, %v2991
    %v2993 = vpop.f32.mrb[0].mxu0
    %v2994 = vadd.f32 %v2304, %v2993
    %v2995 = vpop.f32.mrb[0].mxu0
    %v2996 = vpop.f32.mrb[0].mxu0
    %2997 = vdwg.mxu0
    %2998 = vmatprep.subr.bf16.mxu0 %v2766
    %2999 = vmatpush1.bf16.msra.mxu0 %v2765
    %3000 = vmatprep.subr.bf16.mxu0 %v2770
    %3001 = vmatpush1.bf16.msra.mxu0 %v2769
    %3002 = vmatprep.subr.bf16.mxu0 %v2774
    %3003 = vmatpush1.bf16.msra.mxu0 %v2773
    %3004 = vmatprep.subr.bf16.mxu0 %v2778
    %3005 = vmatpush1.bf16.msra.mxu0 %v2777
    %3006 = vmatprep.subr.bf16.mxu0 %v2782
    %3007 = vmatpush1.bf16.msra.mxu0 %v2781
    %3008 = vmatprep.subr.bf16.mxu0 %v2786
    %3009 = vmatpush1.bf16.msra.mxu0 %v2785
    %3010 = vmatprep.subr.bf16.mxu0 %v2790
    %3011 = vmatpush1.bf16.msra.mxu0 %v2789
    %3012 = vmatprep.subr.bf16.mxu0 %v2794
    %3013 = vmatpush1.bf16.msra.mxu0 %v2793
    %3014 = vmatprep.subr.bf16.mxu0 %v2798
    %3015 = vmatpush1.bf16.msra.mxu0 %v2797
    %3016 = vmatprep.subr.bf16.mxu0 %v2802
    %3017 = vmatpush1.bf16.msra.mxu0 %v2801
    %3018 = vmatprep.subr.bf16.mxu0 %v2806
    %3019 = vmatpush1.bf16.msra.mxu0 %v2805
    %3020 = vmatprep.subr.bf16.mxu0 %v2810
    %3021 = vmatpush1.bf16.msra.mxu0 %v2809
    %3022 = vmatprep.subr.bf16.mxu0 %v2814
    %3023 = vmatpush1.bf16.msra.mxu0 %v2813
    %3024 = vmatprep.subr.bf16.mxu0 %v2818
    %3025 = vmatpush1.bf16.msra.mxu0 %v2817
    %3026 = vmatprep.subr.bf16.mxu0 %v2822
    %3027 = vmatpush1.bf16.msra.mxu0 %v2821
    %3028 = vmatprep.subr.bf16.mxu0 %v2826
    %3029 = vmatpush1.bf16.msra.mxu0 %v2825
    %3030 = vmatprep.mubr.bf16.mxu0 %v2166
    %3031 = vmatmul.mubr.bf16.gmra.mrb[0].mxu0 %v2165
    %v3032 = vpop.f32.mrb[0].mxu0
    %v3033 = vadd.f32 %v2992, %v3032
    %v3034 = vpop.f32.mrb[0].mxu0
    %v3035 = vadd.f32 %v2994, %v3034
    %v3036 = vpop.f32.mrb[0].mxu0
    %v3037 = vpop.f32.mrb[0].mxu0
    %3038 = vdwg.mxu0
    %3039 = vmatprep.subr.bf16.mxu0 %v2704
    %3040 = vmatpush1.bf16.msra.mxu0 %v2703
    %3041 = vmatprep.subr.bf16.mxu0 %v2708
    %3042 = vmatpush1.bf16.msra.mxu0 %v2707
    %3043 = vmatprep.subr.bf16.mxu0 %v2712
    %3044 = vmatpush1.bf16.msra.mxu0 %v2711
    %3045 = vmatprep.subr.bf16.mxu0 %v2716
    %3046 = vmatpush1.bf16.msra.mxu0 %v2715
    %3047 = vmatprep.subr.bf16.mxu0 %v2720
    %3048 = vmatpush1.bf16.msra.mxu0 %v2719
    %3049 = vmatprep.subr.bf16.mxu0 %v2724
    %3050 = vmatpush1.bf16.msra.mxu0 %v2723
    %3051 = vmatprep.subr.bf16.mxu0 %v2728
    %3052 = vmatpush1.bf16.msra.mxu0 %v2727
    %3053 = vmatprep.subr.bf16.mxu0 %v2732
    %3054 = vmatpush1.bf16.msra.mxu0 %v2731
    %3055 = vmatprep.subr.bf16.mxu0 %v2736
    %3056 = vmatpush1.bf16.msra.mxu0 %v2735
    %3057 = vmatprep.subr.bf16.mxu0 %v2740
    %3058 = vmatpush1.bf16.msra.mxu0 %v2739
    %3059 = vmatprep.subr.bf16.mxu0 %v2744
    %3060 = vmatpush1.bf16.msra.mxu0 %v2743
    %3061 = vmatprep.subr.bf16.mxu0 %v2748
    %3062 = vmatpush1.bf16.msra.mxu0 %v2747
    %3063 = vmatprep.subr.bf16.mxu0 %v2752
    %3064 = vmatpush1.bf16.msra.mxu0 %v2751
    %3065 = vmatprep.subr.bf16.mxu0 %v2756
    %3066 = vmatpush1.bf16.msra.mxu0 %v2755
    %3067 = vmatprep.subr.bf16.mxu0 %v2760
    %3068 = vmatpush1.bf16.msra.mxu0 %v2759
    %3069 = vmatprep.subr.bf16.mxu0 %v2764
    %3070 = vmatpush1.bf16.msra.mxu0 %v2763
    %3071 = vmatprep.mubr.bf16.mxu0 %v2164
    %3072 = vmatmul.mubr.bf16.gmra.mrb[0].mxu0 %v2163
    %v3073 = vpop.f32.mrb[0].mxu0
    %v3074 = vadd.f32 %v2308, %v3073
    %v3075 = vpop.f32.mrb[0].mxu0
    %v3076 = vadd.f32 %v2312, %v3075
    %v3077 = vpop.f32.mrb[0].mxu0
    %v3078 = vpop.f32.mrb[0].mxu0
    %3079 = vdwg.mxu0
    %3080 = vmatprep.subr.bf16.mxu0 %v2768
    %3081 = vmatpush1.bf16.msra.mxu0 %v2767
    %3082 = vmatprep.subr.bf16.mxu0 %v2772
    %3083 = vmatpush1.bf16.msra.mxu0 %v2771
    %3084 = vmatprep.subr.bf16.mxu0 %v2776
    %3085 = vmatpush1.bf16.msra.mxu0 %v2775
    %3086 = vmatprep.subr.bf16.mxu0 %v2780
    %3087 = vmatpush1.bf16.msra.mxu0 %v2779
    %3088 = vmatprep.subr.bf16.mxu0 %v2784
    %3089 = vmatpush1.bf16.msra.mxu0 %v2783
    %3090 = vmatprep.subr.bf16.mxu0 %v2788
    %3091 = vmatpush1.bf16.msra.mxu0 %v2787
    %3092 = vmatprep.subr.bf16.mxu0 %v2792
    %3093 = vmatpush1.bf16.msra.mxu0 %v2791
    %3094 = vmatprep.subr.bf16.mxu0 %v2796
    %3095 = vmatpush1.bf16.msra.mxu0 %v2795
    %3096 = vmatprep.subr.bf16.mxu0 %v2800
    %3097 = vmatpush1.bf16.msra.mxu0 %v2799
    %3098 = vmatprep.subr.bf16.mxu0 %v2804
    %3099 = vmatpush1.bf16.msra.mxu0 %v2803
    %3100 = vmatprep.subr.bf16.mxu0 %v2808
    %3101 = vmatpush1.bf16.msra.mxu0 %v2807
    %3102 = vmatprep.subr.bf16.mxu0 %v2812
    %3103 = vmatpush1.bf16.msra.mxu0 %v2811
    %3104 = vmatprep.subr.bf16.mxu0 %v2816
    %3105 = vmatpush1.bf16.msra.mxu0 %v2815
    %3106 = vmatprep.subr.bf16.mxu0 %v2820
    %3107 = vmatpush1.bf16.msra.mxu0 %v2819
    %3108 = vmatprep.subr.bf16.mxu0 %v2824
    %3109 = vmatpush1.bf16.msra.mxu0 %v2823
    %3110 = vmatprep.subr.bf16.mxu0 %v2828
    %3111 = vmatpush1.bf16.msra.mxu0 %v2827
    %3112 = vmatprep.mubr.bf16.mxu0 %v2166
    %3113 = vmatmul.mubr.bf16.gmra.mrb[0].mxu0 %v2165
    %v3114 = vpop.f32.mrb[0].mxu0
    %v3115 = vadd.f32 %v3074, %v3114
    %v3116 = vpop.f32.mrb[0].mxu0
    %v3117 = vadd.f32 %v3076, %v3116
    %v3118 = vpop.f32.mrb[0].mxu0
    %v3119 = vpop.f32.mrb[0].mxu0
    %3120 = vdwg.mxu0
    %v3121 = vmax.f32 %v3033, 0.0
    %v3122 = vmax.f32 %v3035, 0.0
    %v3123 = vmax.f32 %v3115, 0.0
    %v3124 = vmax.f32 %v3117, 0.0
    %v3125 = vpack.c.bf16 %v3121, %v3121
    %v3126 = vpack.c.bf16 %v3122, %v3122
    %v3127 = vpack.c.bf16 %v3123, %v3123
    %v3128 = vpack.c.bf16 %v3124, %v3124
    %v3129 = vld [vmem:[#allocation8] sm:$0xff]
    %v3130 = vld [vmem:[#allocation8 + $0x8] sm:$0xff]
    %v3131 = vld [vmem:[#allocation8 + $0x10] sm:$0xff]
    %v3132 = vld [vmem:[#allocation8 + $0x18] sm:$0xff]
    %v3133 = vld [vmem:[#allocation8 + $0x20] sm:$0xff]
    %v3134 = vld [vmem:[#allocation8 + $0x28] sm:$0xff]
    %v3135 = vld [vmem:[#allocation8 + $0x30] sm:$0xff]
    %v3136 = vld [vmem:[#allocation8 + $0x38] sm:$0xff]
    %v3137 = vld [vmem:[#allocation8 + $0x40] sm:$0xff]
    %v3138 = vld [vmem:[#allocation8 + $0x48] sm:$0xff]
    %v3139 = vld [vmem:[#allocation8 + $0x50] sm:$0xff]
    %v3140 = vld [vmem:[#allocation8 + $0x58] sm:$0xff]
    %v3141 = vld [vmem:[#allocation8 + $0x60] sm:$0xff]
    %v3142 = vld [vmem:[#allocation8 + $0x68] sm:$0xff]
    %v3143 = vld [vmem:[#allocation8 + $0x70] sm:$0xff]
    %v3144 = vld [vmem:[#allocation8 + $0x78] sm:$0xff]
    %v3145 = vld [vmem:[#allocation8 + $0x80] sm:$0xff]
    %v3146 = vld [vmem:[#allocation8 + $0x88] sm:$0xff]
    %v3147 = vld [vmem:[#allocation8 + $0x90] sm:$0xff]
    %v3148 = vld [vmem:[#allocation8 + $0x98] sm:$0xff]
    %v3149 = vld [vmem:[#allocation8 + $0xa0] sm:$0xff]
    %v3150 = vld [vmem:[#allocation8 + $0xa8] sm:$0xff]
    %v3151 = vld [vmem:[#allocation8 + $0xb0] sm:$0xff]
    %v3152 = vld [vmem:[#allocation8 + $0xb8] sm:$0xff]
    %v3153 = vld [vmem:[#allocation8 + $0xc0] sm:$0xff]
    %v3154 = vld [vmem:[#allocation8 + $0xc8] sm:$0xff]
    %v3155 = vld [vmem:[#allocation8 + $0xd0] sm:$0xff]
    %v3156 = vld [vmem:[#allocation8 + $0xd8] sm:$0xff]
    %v3157 = vld [vmem:[#allocation8 + $0xe0] sm:$0xff]
    %v3158 = vld [vmem:[#allocation8 + $0xe8] sm:$0xff]
    %v3159 = vld [vmem:[#allocation8 + $0xf0] sm:$0xff]
    %v3160 = vld [vmem:[#allocation8 + $0xf8] sm:$0xff]
    %v3161 = vld [vmem:[#allocation8 + $0x100] sm:$0xff]
    %v3162 = vld [vmem:[#allocation8 + $0x108] sm:$0xff]
    %v3163 = vld [vmem:[#allocation8 + $0x110] sm:$0xff]
    %v3164 = vld [vmem:[#allocation8 + $0x118] sm:$0xff]
    %v3165 = vld [vmem:[#allocation8 + $0x120] sm:$0xff]
    %v3166 = vld [vmem:[#allocation8 + $0x128] sm:$0xff]
    %v3167 = vld [vmem:[#allocation8 + $0x130] sm:$0xff]
    %v3168 = vld [vmem:[#allocation8 + $0x138] sm:$0xff]
    %v3169 = vld [vmem:[#allocation8 + $0x140] sm:$0xff]
    %v3170 = vld [vmem:[#allocation8 + $0x148] sm:$0xff]
    %v3171 = vld [vmem:[#allocation8 + $0x150] sm:$0xff]
    %v3172 = vld [vmem:[#allocation8 + $0x158] sm:$0xff]
    %v3173 = vld [vmem:[#allocation8 + $0x160] sm:$0xff]
    %v3174 = vld [vmem:[#allocation8 + $0x168] sm:$0xff]
    %v3175 = vld [vmem:[#allocation8 + $0x170] sm:$0xff]
    %v3176 = vld [vmem:[#allocation8 + $0x178] sm:$0xff]
    %v3177 = vld [vmem:[#allocation8 + $0x180] sm:$0xff]
    %v3178 = vld [vmem:[#allocation8 + $0x188] sm:$0xff]
    %v3179 = vld [vmem:[#allocation8 + $0x190] sm:$0xff]
    %v3180 = vld [vmem:[#allocation8 + $0x198] sm:$0xff]
    %v3181 = vld [vmem:[#allocation8 + $0x1a0] sm:$0xff]
    %v3182 = vld [vmem:[#allocation8 + $0x1a8] sm:$0xff]
    %v3183 = vld [vmem:[#allocation8 + $0x1b0] sm:$0xff]
    %v3184 = vld [vmem:[#allocation8 + $0x1b8] sm:$0xff]
    %v3185 = vld [vmem:[#allocation8 + $0x1c0] sm:$0xff]
    %v3186 = vld [vmem:[#allocation8 + $0x1c8] sm:$0xff]
    %v3187 = vld [vmem:[#allocation8 + $0x1d0] sm:$0xff]
    %v3188 = vld [vmem:[#allocation8 + $0x1d8] sm:$0xff]
    %v3189 = vld [vmem:[#allocation8 + $0x1e0] sm:$0xff]
    %v3190 = vld [vmem:[#allocation8 + $0x1e8] sm:$0xff]
    %v3191 = vld [vmem:[#allocation8 + $0x1f0] sm:$0xff]
    %v3192 = vld [vmem:[#allocation8 + $0x1f8] sm:$0xff]
    %v3193 = vld [vmem:[#allocation8 + $0x200] sm:$0xff]
    %v3194 = vld [vmem:[#allocation8 + $0x208] sm:$0xff]
    %v3195 = vld [vmem:[#allocation8 + $0x210] sm:$0xff]
    %v3196 = vld [vmem:[#allocation8 + $0x218] sm:$0xff]
    %v3197 = vld [vmem:[#allocation8 + $0x220] sm:$0xff]
    %v3198 = vld [vmem:[#allocation8 + $0x228] sm:$0xff]
    %v3199 = vld [vmem:[#allocation8 + $0x230] sm:$0xff]
    %v3200 = vld [vmem:[#allocation8 + $0x238] sm:$0xff]
    %v3201 = vld [vmem:[#allocation8 + $0x240] sm:$0xff]
    %v3202 = vld [vmem:[#allocation8 + $0x248] sm:$0xff]
    %v3203 = vld [vmem:[#allocation8 + $0x250] sm:$0xff]
    %v3204 = vld [vmem:[#allocation8 + $0x258] sm:$0xff]
    %v3205 = vld [vmem:[#allocation8 + $0x260] sm:$0xff]
    %v3206 = vld [vmem:[#allocation8 + $0x268] sm:$0xff]
    %v3207 = vld [vmem:[#allocation8 + $0x270] sm:$0xff]
    %v3208 = vld [vmem:[#allocation8 + $0x278] sm:$0xff]
    %v3209 = vld [vmem:[#allocation8 + $0x280] sm:$0xff]
    %v3210 = vld [vmem:[#allocation8 + $0x288] sm:$0xff]
    %v3211 = vld [vmem:[#allocation8 + $0x290] sm:$0xff]
    %v3212 = vld [vmem:[#allocation8 + $0x298] sm:$0xff]
    %v3213 = vld [vmem:[#allocation8 + $0x2a0] sm:$0xff]
    %v3214 = vld [vmem:[#allocation8 + $0x2a8] sm:$0xff]
    %v3215 = vld [vmem:[#allocation8 + $0x2b0] sm:$0xff]
    %v3216 = vld [vmem:[#allocation8 + $0x2b8] sm:$0xff]
    %v3217 = vld [vmem:[#allocation8 + $0x2c0] sm:$0xff]
    %v3218 = vld [vmem:[#allocation8 + $0x2c8] sm:$0xff]
    %v3219 = vld [vmem:[#allocation8 + $0x2d0] sm:$0xff]
    %v3220 = vld [vmem:[#allocation8 + $0x2d8] sm:$0xff]
    %v3221 = vld [vmem:[#allocation8 + $0x2e0] sm:$0xff]
    %v3222 = vld [vmem:[#allocation8 + $0x2e8] sm:$0xff]
    %v3223 = vld [vmem:[#allocation8 + $0x2f0] sm:$0xff]
    %v3224 = vld [vmem:[#allocation8 + $0x2f8] sm:$0xff]
    %v3225 = vld [vmem:[#allocation8 + $0x300] sm:$0xff]
    %v3226 = vld [vmem:[#allocation8 + $0x308] sm:$0xff]
    %v3227 = vld [vmem:[#allocation8 + $0x310] sm:$0xff]
    %v3228 = vld [vmem:[#allocation8 + $0x318] sm:$0xff]
    %v3229 = vld [vmem:[#allocation8 + $0x320] sm:$0xff]
    %v3230 = vld [vmem:[#allocation8 + $0x328] sm:$0xff]
    %v3231 = vld [vmem:[#allocation8 + $0x330] sm:$0xff]
    %v3232 = vld [vmem:[#allocation8 + $0x338] sm:$0xff]
    %v3233 = vld [vmem:[#allocation8 + $0x340] sm:$0xff]
    %v3234 = vld [vmem:[#allocation8 + $0x348] sm:$0xff]
    %v3235 = vld [vmem:[#allocation8 + $0x350] sm:$0xff]
    %v3236 = vld [vmem:[#allocation8 + $0x358] sm:$0xff]
    %v3237 = vld [vmem:[#allocation8 + $0x360] sm:$0xff]
    %v3238 = vld [vmem:[#allocation8 + $0x368] sm:$0xff]
    %v3239 = vld [vmem:[#allocation8 + $0x370] sm:$0xff]
    %v3240 = vld [vmem:[#allocation8 + $0x378] sm:$0xff]
    %v3241 = vld [vmem:[#allocation8 + $0x380] sm:$0xff]
    %v3242 = vld [vmem:[#allocation8 + $0x388] sm:$0xff]
    %v3243 = vld [vmem:[#allocation8 + $0x390] sm:$0xff]
    %v3244 = vld [vmem:[#allocation8 + $0x398] sm:$0xff]
    %v3245 = vld [vmem:[#allocation8 + $0x3a0] sm:$0xff]
    %v3246 = vld [vmem:[#allocation8 + $0x3a8] sm:$0xff]
    %v3247 = vld [vmem:[#allocation8 + $0x3b0] sm:$0xff]
    %v3248 = vld [vmem:[#allocation8 + $0x3b8] sm:$0xff]
    %v3249 = vld [vmem:[#allocation8 + $0x3c0] sm:$0xff]
    %v3250 = vld [vmem:[#allocation8 + $0x3c8] sm:$0xff]
    %v3251 = vld [vmem:[#allocation8 + $0x3d0] sm:$0xff]
    %v3252 = vld [vmem:[#allocation8 + $0x3d8] sm:$0xff]
    %v3253 = vld [vmem:[#allocation8 + $0x3e0] sm:$0xff]
    %v3254 = vld [vmem:[#allocation8 + $0x3e8] sm:$0xff]
    %v3255 = vld [vmem:[#allocation8 + $0x3f0] sm:$0xff]
    %v3256 = vld [vmem:[#allocation8 + $0x3f8] sm:$0xff]
    %v3257 = vld [vmem:[%s10] sm:$0xf]
    %v3259 = vlaneseq
    %v3260 = vshrl.u32 %v3259, 7
    %v3261 = vsub.s32 0, %v3260
    %v3262 = vrot.slane %v3257, %v3261
    %v3263 = vlaneseq
    %v3264 = vshrl.u32 %v3263, 7
    %v3265 = vsub.s32 1, %v3264
    %v3266 = vrot.slane %v3257, %v3265
    %v3267 = vlaneseq
    %v3268 = vshrl.u32 %v3267, 7
    %v3269 = vsub.s32 2, %v3268
    %v3270 = vrot.slane %v3257, %v3269
    %v3271 = vlaneseq
    %v3272 = vshrl.u32 %v3271, 7
    %v3273 = vsub.s32 3, %v3272
    %v3274 = vrot.slane %v3257, %v3273
    %v3407 = vunpack.c.l.b16 %v3129
    %v3408 = vunpack.c.h.b16 %v3129
    %v3409 = vunpack.c.l.b16 %v3130
    %v3410 = vunpack.c.h.b16 %v3130
    %v3411 = vunpack.c.l.b16 %v3131
    %v3412 = vunpack.c.h.b16 %v3131
    %v3413 = vunpack.c.l.b16 %v3132
    %v3414 = vunpack.c.h.b16 %v3132
    %v3415 = vunpack.c.l.b16 %v3133
    %v3416 = vunpack.c.h.b16 %v3133
    %v3417 = vunpack.c.l.b16 %v3134
    %v3418 = vunpack.c.h.b16 %v3134
    %v3419 = vunpack.c.l.b16 %v3135
    %v3420 = vunpack.c.h.b16 %v3135
    %v3421 = vunpack.c.l.b16 %v3136
    %v3422 = vunpack.c.h.b16 %v3136
    %v3423 = vunpack.c.l.b16 %v3137
    %v3424 = vunpack.c.h.b16 %v3137
    %v3425 = vunpack.c.l.b16 %v3138
    %v3426 = vunpack.c.h.b16 %v3138
    %v3427 = vunpack.c.l.b16 %v3139
    %v3428 = vunpack.c.h.b16 %v3139
    %v3429 = vunpack.c.l.b16 %v3140
    %v3430 = vunpack.c.h.b16 %v3140
    %v3431 = vunpack.c.l.b16 %v3141
    %v3432 = vunpack.c.h.b16 %v3141
    %v3433 = vunpack.c.l.b16 %v3142
    %v3434 = vunpack.c.h.b16 %v3142
    %v3435 = vunpack.c.l.b16 %v3143
    %v3436 = vunpack.c.h.b16 %v3143
    %v3437 = vunpack.c.l.b16 %v3144
    %v3438 = vunpack.c.h.b16 %v3144
    %v3439 = vunpack.c.l.b16 %v3145
    %v3440 = vunpack.c.h.b16 %v3145
    %v3441 = vunpack.c.l.b16 %v3146
    %v3442 = vunpack.c.h.b16 %v3146
    %v3443 = vunpack.c.l.b16 %v3147
    %v3444 = vunpack.c.h.b16 %v3147
    %v3445 = vunpack.c.l.b16 %v3148
    %v3446 = vunpack.c.h.b16 %v3148
    %v3447 = vunpack.c.l.b16 %v3149
    %v3448 = vunpack.c.h.b16 %v3149
    %v3449 = vunpack.c.l.b16 %v3150
    %v3450 = vunpack.c.h.b16 %v3150
    %v3451 = vunpack.c.l.b16 %v3151
    %v3452 = vunpack.c.h.b16 %v3151
    %v3453 = vunpack.c.l.b16 %v3152
    %v3454 = vunpack.c.h.b16 %v3152
    %v3455 = vunpack.c.l.b16 %v3153
    %v3456 = vunpack.c.h.b16 %v3153
    %v3457 = vunpack.c.l.b16 %v3154
    %v3458 = vunpack.c.h.b16 %v3154
    %v3459 = vunpack.c.l.b16 %v3155
    %v3460 = vunpack.c.h.b16 %v3155
    %v3461 = vunpack.c.l.b16 %v3156
    %v3462 = vunpack.c.h.b16 %v3156
    %v3463 = vunpack.c.l.b16 %v3157
    %v3464 = vunpack.c.h.b16 %v3157
    %v3465 = vunpack.c.l.b16 %v3158
    %v3466 = vunpack.c.h.b16 %v3158
    %v3467 = vunpack.c.l.b16 %v3159
    %v3468 = vunpack.c.h.b16 %v3159
    %v3469 = vunpack.c.l.b16 %v3160
    %v3470 = vunpack.c.h.b16 %v3160
    %v3471 = vunpack.c.l.b16 %v3161
    %v3472 = vunpack.c.h.b16 %v3161
    %v3473 = vunpack.c.l.b16 %v3162
    %v3474 = vunpack.c.h.b16 %v3162
    %v3475 = vunpack.c.l.b16 %v3163
    %v3476 = vunpack.c.h.b16 %v3163
    %v3477 = vunpack.c.l.b16 %v3164
    %v3478 = vunpack.c.h.b16 %v3164
    %v3479 = vunpack.c.l.b16 %v3165
    %v3480 = vunpack.c.h.b16 %v3165
    %v3481 = vunpack.c.l.b16 %v3166
    %v3482 = vunpack.c.h.b16 %v3166
    %v3483 = vunpack.c.l.b16 %v3167
    %v3484 = vunpack.c.h.b16 %v3167
    %v3485 = vunpack.c.l.b16 %v3168
    %v3486 = vunpack.c.h.b16 %v3168
    %v3487 = vunpack.c.l.b16 %v3169
    %v3488 = vunpack.c.h.b16 %v3169
    %v3489 = vunpack.c.l.b16 %v3170
    %v3490 = vunpack.c.h.b16 %v3170
    %v3491 = vunpack.c.l.b16 %v3171
    %v3492 = vunpack.c.h.b16 %v3171
    %v3493 = vunpack.c.l.b16 %v3172
    %v3494 = vunpack.c.h.b16 %v3172
    %v3495 = vunpack.c.l.b16 %v3173
    %v3496 = vunpack.c.h.b16 %v3173
    %v3497 = vunpack.c.l.b16 %v3174
    %v3498 = vunpack.c.h.b16 %v3174
    %v3499 = vunpack.c.l.b16 %v3175
    %v3500 = vunpack.c.h.b16 %v3175
    %v3501 = vunpack.c.l.b16 %v3176
    %v3502 = vunpack.c.h.b16 %v3176
    %v3503 = vunpack.c.l.b16 %v3177
    %v3504 = vunpack.c.h.b16 %v3177
    %v3505 = vunpack.c.l.b16 %v3178
    %v3506 = vunpack.c.h.b16 %v3178
    %v3507 = vunpack.c.l.b16 %v3179
    %v3508 = vunpack.c.h.b16 %v3179
    %v3509 = vunpack.c.l.b16 %v3180
    %v3510 = vunpack.c.h.b16 %v3180
    %v3511 = vunpack.c.l.b16 %v3181
    %v3512 = vunpack.c.h.b16 %v3181
    %v3513 = vunpack.c.l.b16 %v3182
    %v3514 = vunpack.c.h.b16 %v3182
    %v3515 = vunpack.c.l.b16 %v3183
    %v3516 = vunpack.c.h.b16 %v3183
    %v3517 = vunpack.c.l.b16 %v3184
    %v3518 = vunpack.c.h.b16 %v3184
    %v3519 = vunpack.c.l.b16 %v3185
    %v3520 = vunpack.c.h.b16 %v3185
    %v3521 = vunpack.c.l.b16 %v3186
    %v3522 = vunpack.c.h.b16 %v3186
    %v3523 = vunpack.c.l.b16 %v3187
    %v3524 = vunpack.c.h.b16 %v3187
    %v3525 = vunpack.c.l.b16 %v3188
    %v3526 = vunpack.c.h.b16 %v3188
    %v3527 = vunpack.c.l.b16 %v3189
    %v3528 = vunpack.c.h.b16 %v3189
    %v3529 = vunpack.c.l.b16 %v3190
    %v3530 = vunpack.c.h.b16 %v3190
    %v3531 = vunpack.c.l.b16 %v3191
    %v3532 = vunpack.c.h.b16 %v3191
    %v3533 = vunpack.c.l.b16 %v3192
    %v3534 = vunpack.c.h.b16 %v3192
    %v3535 = vunpack.c.l.b16 %v3193
    %v3536 = vunpack.c.h.b16 %v3193
    %v3537 = vunpack.c.l.b16 %v3194
    %v3538 = vunpack.c.h.b16 %v3194
    %v3539 = vunpack.c.l.b16 %v3195
    %v3540 = vunpack.c.h.b16 %v3195
    %v3541 = vunpack.c.l.b16 %v3196
    %v3542 = vunpack.c.h.b16 %v3196
    %v3543 = vunpack.c.l.b16 %v3197
    %v3544 = vunpack.c.h.b16 %v3197
    %v3545 = vunpack.c.l.b16 %v3198
    %v3546 = vunpack.c.h.b16 %v3198
    %v3547 = vunpack.c.l.b16 %v3199
    %v3548 = vunpack.c.h.b16 %v3199
    %v3549 = vunpack.c.l.b16 %v3200
    %v3550 = vunpack.c.h.b16 %v3200
    %v3551 = vunpack.c.l.b16 %v3201
    %v3552 = vunpack.c.h.b16 %v3201
    %v3553 = vunpack.c.l.b16 %v3202
    %v3554 = vunpack.c.h.b16 %v3202
    %v3555 = vunpack.c.l.b16 %v3203
    %v3556 = vunpack.c.h.b16 %v3203
    %v3557 = vunpack.c.l.b16 %v3204
    %v3558 = vunpack.c.h.b16 %v3204
    %v3559 = vunpack.c.l.b16 %v3205
    %v3560 = vunpack.c.h.b16 %v3205
    %v3561 = vunpack.c.l.b16 %v3206
    %v3562 = vunpack.c.h.b16 %v3206
    %v3563 = vunpack.c.l.b16 %v3207
    %v3564 = vunpack.c.h.b16 %v3207
    %v3565 = vunpack.c.l.b16 %v3208
    %v3566 = vunpack.c.h.b16 %v3208
    %v3567 = vunpack.c.l.b16 %v3209
    %v3568 = vunpack.c.h.b16 %v3209
    %v3569 = vunpack.c.l.b16 %v3210
    %v3570 = vunpack.c.h.b16 %v3210
    %v3571 = vunpack.c.l.b16 %v3211
    %v3572 = vunpack.c.h.b16 %v3211
    %v3573 = vunpack.c.l.b16 %v3212
    %v3574 = vunpack.c.h.b16 %v3212
    %v3575 = vunpack.c.l.b16 %v3213
    %v3576 = vunpack.c.h.b16 %v3213
    %v3577 = vunpack.c.l.b16 %v3214
    %v3578 = vunpack.c.h.b16 %v3214
    %v3579 = vunpack.c.l.b16 %v3215
    %v3580 = vunpack.c.h.b16 %v3215
    %v3581 = vunpack.c.l.b16 %v3216
    %v3582 = vunpack.c.h.b16 %v3216
    %v3583 = vunpack.c.l.b16 %v3217
    %v3584 = vunpack.c.h.b16 %v3217
    %v3585 = vunpack.c.l.b16 %v3218
    %v3586 = vunpack.c.h.b16 %v3218
    %v3587 = vunpack.c.l.b16 %v3219
    %v3588 = vunpack.c.h.b16 %v3219
    %v3589 = vunpack.c.l.b16 %v3220
    %v3590 = vunpack.c.h.b16 %v3220
    %v3591 = vunpack.c.l.b16 %v3221
    %v3592 = vunpack.c.h.b16 %v3221
    %v3593 = vunpack.c.l.b16 %v3222
    %v3594 = vunpack.c.h.b16 %v3222
    %v3595 = vunpack.c.l.b16 %v3223
    %v3596 = vunpack.c.h.b16 %v3223
    %v3597 = vunpack.c.l.b16 %v3224
    %v3598 = vunpack.c.h.b16 %v3224
    %v3599 = vunpack.c.l.b16 %v3225
    %v3600 = vunpack.c.h.b16 %v3225
    %v3601 = vunpack.c.l.b16 %v3226
    %v3602 = vunpack.c.h.b16 %v3226
    %v3603 = vunpack.c.l.b16 %v3227
    %v3604 = vunpack.c.h.b16 %v3227
    %v3605 = vunpack.c.l.b16 %v3228
    %v3606 = vunpack.c.h.b16 %v3228
    %v3607 = vunpack.c.l.b16 %v3229
    %v3608 = vunpack.c.h.b16 %v3229
    %v3609 = vunpack.c.l.b16 %v3230
    %v3610 = vunpack.c.h.b16 %v3230
    %v3611 = vunpack.c.l.b16 %v3231
    %v3612 = vunpack.c.h.b16 %v3231
    %v3613 = vunpack.c.l.b16 %v3232
    %v3614 = vunpack.c.h.b16 %v3232
    %v3615 = vunpack.c.l.b16 %v3233
    %v3616 = vunpack.c.h.b16 %v3233
    %v3617 = vunpack.c.l.b16 %v3234
    %v3618 = vunpack.c.h.b16 %v3234
    %v3619 = vunpack.c.l.b16 %v3235
    %v3620 = vunpack.c.h.b16 %v3235
    %v3621 = vunpack.c.l.b16 %v3236
    %v3622 = vunpack.c.h.b16 %v3236
    %v3623 = vunpack.c.l.b16 %v3237
    %v3624 = vunpack.c.h.b16 %v3237
    %v3625 = vunpack.c.l.b16 %v3238
    %v3626 = vunpack.c.h.b16 %v3238
    %v3627 = vunpack.c.l.b16 %v3239
    %v3628 = vunpack.c.h.b16 %v3239
    %v3629 = vunpack.c.l.b16 %v3240
    %v3630 = vunpack.c.h.b16 %v3240
    %v3631 = vunpack.c.l.b16 %v3241
    %v3632 = vunpack.c.h.b16 %v3241
    %v3633 = vunpack.c.l.b16 %v3242
    %v3634 = vunpack.c.h.b16 %v3242
    %v3635 = vunpack.c.l.b16 %v3243
    %v3636 = vunpack.c.h.b16 %v3243
    %v3637 = vunpack.c.l.b16 %v3244
    %v3638 = vunpack.c.h.b16 %v3244
    %v3639 = vunpack.c.l.b16 %v3245
    %v3640 = vunpack.c.h.b16 %v3245
    %v3641 = vunpack.c.l.b16 %v3246
    %v3642 = vunpack.c.h.b16 %v3246
    %v3643 = vunpack.c.l.b16 %v3247
    %v3644 = vunpack.c.h.b16 %v3247
    %v3645 = vunpack.c.l.b16 %v3248
    %v3646 = vunpack.c.h.b16 %v3248
    %v3647 = vunpack.c.l.b16 %v3249
    %v3648 = vunpack.c.h.b16 %v3249
    %v3649 = vunpack.c.l.b16 %v3250
    %v3650 = vunpack.c.h.b16 %v3250
    %v3651 = vunpack.c.l.b16 %v3251
    %v3652 = vunpack.c.h.b16 %v3251
    %v3653 = vunpack.c.l.b16 %v3252
    %v3654 = vunpack.c.h.b16 %v3252
    %v3655 = vunpack.c.l.b16 %v3253
    %v3656 = vunpack.c.h.b16 %v3253
    %v3657 = vunpack.c.l.b16 %v3254
    %v3658 = vunpack.c.h.b16 %v3254
    %v3659 = vunpack.c.l.b16 %v3255
    %v3660 = vunpack.c.h.b16 %v3255
    %v3661 = vunpack.c.l.b16 %v3256
    %v3662 = vunpack.c.h.b16 %v3256
    %v3663 = vpack.c.b16 %v3411, %v3407
    %v3664 = vpack.c.b16 %v3412, %v3408
    %v3665 = vpack.c.b16 %v3413, %v3409
    %v3666 = vpack.c.b16 %v3414, %v3410
    %v3667 = vpack.c.b16 %v3419, %v3415
    %v3668 = vpack.c.b16 %v3420, %v3416
    %v3669 = vpack.c.b16 %v3421, %v3417
    %v3670 = vpack.c.b16 %v3422, %v3418
    %v3671 = vpack.c.b16 %v3427, %v3423
    %v3672 = vpack.c.b16 %v3428, %v3424
    %v3673 = vpack.c.b16 %v3429, %v3425
    %v3674 = vpack.c.b16 %v3430, %v3426
    %v3675 = vpack.c.b16 %v3435, %v3431
    %v3676 = vpack.c.b16 %v3436, %v3432
    %v3677 = vpack.c.b16 %v3437, %v3433
    %v3678 = vpack.c.b16 %v3438, %v3434
    %v3679 = vpack.c.b16 %v3443, %v3439
    %v3680 = vpack.c.b16 %v3444, %v3440
    %v3681 = vpack.c.b16 %v3445, %v3441
    %v3682 = vpack.c.b16 %v3446, %v3442
    %v3683 = vpack.c.b16 %v3451, %v3447
    %v3684 = vpack.c.b16 %v3452, %v3448
    %v3685 = vpack.c.b16 %v3453, %v3449
    %v3686 = vpack.c.b16 %v3454, %v3450
    %v3687 = vpack.c.b16 %v3459, %v3455
    %v3688 = vpack.c.b16 %v3460, %v3456
    %v3689 = vpack.c.b16 %v3461, %v3457
    %v3690 = vpack.c.b16 %v3462, %v3458
    %v3691 = vpack.c.b16 %v3467, %v3463
    %v3692 = vpack.c.b16 %v3468, %v3464
    %v3693 = vpack.c.b16 %v3469, %v3465
    %v3694 = vpack.c.b16 %v3470, %v3466
    %v3695 = vpack.c.b16 %v3475, %v3471
    %v3696 = vpack.c.b16 %v3476, %v3472
    %v3697 = vpack.c.b16 %v3477, %v3473
    %v3698 = vpack.c.b16 %v3478, %v3474
    %v3699 = vpack.c.b16 %v3483, %v3479
    %v3700 = vpack.c.b16 %v3484, %v3480
    %v3701 = vpack.c.b16 %v3485, %v3481
    %v3702 = vpack.c.b16 %v3486, %v3482
    %v3703 = vpack.c.b16 %v3491, %v3487
    %v3704 = vpack.c.b16 %v3492, %v3488
    %v3705 = vpack.c.b16 %v3493, %v3489
    %v3706 = vpack.c.b16 %v3494, %v3490
    %v3707 = vpack.c.b16 %v3499, %v3495
    %v3708 = vpack.c.b16 %v3500, %v3496
    %v3709 = vpack.c.b16 %v3501, %v3497
    %v3710 = vpack.c.b16 %v3502, %v3498
    %v3711 = vpack.c.b16 %v3507, %v3503
    %v3712 = vpack.c.b16 %v3508, %v3504
    %v3713 = vpack.c.b16 %v3509, %v3505
    %v3714 = vpack.c.b16 %v3510, %v3506
    %v3715 = vpack.c.b16 %v3515, %v3511
    %v3716 = vpack.c.b16 %v3516, %v3512
    %v3717 = vpack.c.b16 %v3517, %v3513
    %v3718 = vpack.c.b16 %v3518, %v3514
    %v3719 = vpack.c.b16 %v3523, %v3519
    %v3720 = vpack.c.b16 %v3524, %v3520
    %v3721 = vpack.c.b16 %v3525, %v3521
    %v3722 = vpack.c.b16 %v3526, %v3522
    %v3723 = vpack.c.b16 %v3531, %v3527
    %v3724 = vpack.c.b16 %v3532, %v3528
    %v3725 = vpack.c.b16 %v3533, %v3529
    %v3726 = vpack.c.b16 %v3534, %v3530
    %v3727 = vpack.c.b16 %v3539, %v3535
    %v3728 = vpack.c.b16 %v3540, %v3536
    %v3729 = vpack.c.b16 %v3541, %v3537
    %v3730 = vpack.c.b16 %v3542, %v3538
    %v3731 = vpack.c.b16 %v3547, %v3543
    %v3732 = vpack.c.b16 %v3548, %v3544
    %v3733 = vpack.c.b16 %v3549, %v3545
    %v3734 = vpack.c.b16 %v3550, %v3546
    %v3735 = vpack.c.b16 %v3555, %v3551
    %v3736 = vpack.c.b16 %v3556, %v3552
    %v3737 = vpack.c.b16 %v3557, %v3553
    %v3738 = vpack.c.b16 %v3558, %v3554
    %v3739 = vpack.c.b16 %v3563, %v3559
    %v3740 = vpack.c.b16 %v3564, %v3560
    %v3741 = vpack.c.b16 %v3565, %v3561
    %v3742 = vpack.c.b16 %v3566, %v3562
    %v3743 = vpack.c.b16 %v3571, %v3567
    %v3744 = vpack.c.b16 %v3572, %v3568
    %v3745 = vpack.c.b16 %v3573, %v3569
    %v3746 = vpack.c.b16 %v3574, %v3570
    %v3747 = vpack.c.b16 %v3579, %v3575
    %v3748 = vpack.c.b16 %v3580, %v3576
    %v3749 = vpack.c.b16 %v3581, %v3577
    %v3750 = vpack.c.b16 %v3582, %v3578
    %v3751 = vpack.c.b16 %v3587, %v3583
    %v3752 = vpack.c.b16 %v3588, %v3584
    %v3753 = vpack.c.b16 %v3589, %v3585
    %v3754 = vpack.c.b16 %v3590, %v3586
    %v3755 = vpack.c.b16 %v3595, %v3591
    %v3756 = vpack.c.b16 %v3596, %v3592
    %v3757 = vpack.c.b16 %v3597, %v3593
    %v3758 = vpack.c.b16 %v3598, %v3594
    %v3759 = vpack.c.b16 %v3603, %v3599
    %v3760 = vpack.c.b16 %v3604, %v3600
    %v3761 = vpack.c.b16 %v3605, %v3601
    %v3762 = vpack.c.b16 %v3606, %v3602
    %v3763 = vpack.c.b16 %v3611, %v3607
    %v3764 = vpack.c.b16 %v3612, %v3608
    %v3765 = vpack.c.b16 %v3613, %v3609
    %v3766 = vpack.c.b16 %v3614, %v3610
    %v3767 = vpack.c.b16 %v3619, %v3615
    %v3768 = vpack.c.b16 %v3620, %v3616
    %v3769 = vpack.c.b16 %v3621, %v3617
    %v3770 = vpack.c.b16 %v3622, %v3618
    %v3771 = vpack.c.b16 %v3627, %v3623
    %v3772 = vpack.c.b16 %v3628, %v3624
    %v3773 = vpack.c.b16 %v3629, %v3625
    %v3774 = vpack.c.b16 %v3630, %v3626
    %v3775 = vpack.c.b16 %v3635, %v3631
    %v3776 = vpack.c.b16 %v3636, %v3632
    %v3777 = vpack.c.b16 %v3637, %v3633
    %v3778 = vpack.c.b16 %v3638, %v3634
    %v3779 = vpack.c.b16 %v3643, %v3639
    %v3780 = vpack.c.b16 %v3644, %v3640
    %v3781 = vpack.c.b16 %v3645, %v3641
    %v3782 = vpack.c.b16 %v3646, %v3642
    %v3783 = vpack.c.b16 %v3651, %v3647
    %v3784 = vpack.c.b16 %v3652, %v3648
    %v3785 = vpack.c.b16 %v3653, %v3649
    %v3786 = vpack.c.b16 %v3654, %v3650
    %v3787 = vpack.c.b16 %v3659, %v3655
    %v3788 = vpack.c.b16 %v3660, %v3656
    %v3789 = vpack.c.b16 %v3661, %v3657
    %v3790 = vpack.c.b16 %v3662, %v3658
    %3919 = vmatprep.subr.bf16.mxu0 %v3664
    %3920 = vmatpush1.bf16.msra.mxu0 %v3663
    %3921 = vmatprep.subr.bf16.mxu0 %v3668
    %3922 = vmatpush1.bf16.msra.mxu0 %v3667
    %3923 = vmatprep.subr.bf16.mxu0 %v3672
    %3924 = vmatpush1.bf16.msra.mxu0 %v3671
    %3925 = vmatprep.subr.bf16.mxu0 %v3676
    %3926 = vmatpush1.bf16.msra.mxu0 %v3675
    %3927 = vmatprep.subr.bf16.mxu0 %v3680
    %3928 = vmatpush1.bf16.msra.mxu0 %v3679
    %3929 = vmatprep.subr.bf16.mxu0 %v3684
    %3930 = vmatpush1.bf16.msra.mxu0 %v3683
    %3931 = vmatprep.subr.bf16.mxu0 %v3688
    %3932 = vmatpush1.bf16.msra.mxu0 %v3687
    %3933 = vmatprep.subr.bf16.mxu0 %v3692
    %3934 = vmatpush1.bf16.msra.mxu0 %v3691
    %3935 = vmatprep.subr.bf16.mxu0 %v3696
    %3936 = vmatpush1.bf16.msra.mxu0 %v3695
    %3937 = vmatprep.subr.bf16.mxu0 %v3700
    %3938 = vmatpush1.bf16.msra.mxu0 %v3699
    %3939 = vmatprep.subr.bf16.mxu0 %v3704
    %3940 = vmatpush1.bf16.msra.mxu0 %v3703
    %3941 = vmatprep.subr.bf16.mxu0 %v3708
    %3942 = vmatpush1.bf16.msra.mxu0 %v3707
    %3943 = vmatprep.subr.bf16.mxu0 %v3712
    %3944 = vmatpush1.bf16.msra.mxu0 %v3711
    %3945 = vmatprep.subr.bf16.mxu0 %v3716
    %3946 = vmatpush1.bf16.msra.mxu0 %v3715
    %3947 = vmatprep.subr.bf16.mxu0 %v3720
    %3948 = vmatpush1.bf16.msra.mxu0 %v3719
    %3949 = vmatprep.subr.bf16.mxu0 %v3724
    %3950 = vmatpush1.bf16.msra.mxu0 %v3723
    %3951 = vmatprep.mubr.bf16.mxu0 %v3126
    %3952 = vmatmul.mubr.bf16.gmra.mrb[0].mxu0 %v3125
    %v3953 = vpop.f32.mrb[0].mxu0
    %v3954 = vadd.f32 %v3262, %v3953
    %v3955 = vpop.f32.mrb[0].mxu0
    %v3956 = vadd.f32 %v3266, %v3955
    %v3957 = vpop.f32.mrb[0].mxu0
    %v3958 = vpop.f32.mrb[0].mxu0
    %3959 = vdwg.mxu0
    %3960 = vmatprep.subr.bf16.mxu0 %v3728
    %3961 = vmatpush1.bf16.msra.mxu0 %v3727
    %3962 = vmatprep.subr.bf16.mxu0 %v3732
    %3963 = vmatpush1.bf16.msra.mxu0 %v3731
    %3964 = vmatprep.subr.bf16.mxu0 %v3736
    %3965 = vmatpush1.bf16.msra.mxu0 %v3735
    %3966 = vmatprep.subr.bf16.mxu0 %v3740
    %3967 = vmatpush1.bf16.msra.mxu0 %v3739
    %3968 = vmatprep.subr.bf16.mxu0 %v3744
    %3969 = vmatpush1.bf16.msra.mxu0 %v3743
    %3970 = vmatprep.subr.bf16.mxu0 %v3748
    %3971 = vmatpush1.bf16.msra.mxu0 %v3747
    %3972 = vmatprep.subr.bf16.mxu0 %v3752
    %3973 = vmatpush1.bf16.msra.mxu0 %v3751
    %3974 = vmatprep.subr.bf16.mxu0 %v3756
    %3975 = vmatpush1.bf16.msra.mxu0 %v3755
    %3976 = vmatprep.subr.bf16.mxu0 %v3760
    %3977 = vmatpush1.bf16.msra.mxu0 %v3759
    %3978 = vmatprep.subr.bf16.mxu0 %v3764
    %3979 = vmatpush1.bf16.msra.mxu0 %v3763
    %3980 = vmatprep.subr.bf16.mxu0 %v3768
    %3981 = vmatpush1.bf16.msra.mxu0 %v3767
    %3982 = vmatprep.subr.bf16.mxu0 %v3772
    %3983 = vmatpush1.bf16.msra.mxu0 %v3771
    %3984 = vmatprep.subr.bf16.mxu0 %v3776
    %3985 = vmatpush1.bf16.msra.mxu0 %v3775
    %3986 = vmatprep.subr.bf16.mxu0 %v3780
    %3987 = vmatpush1.bf16.msra.mxu0 %v3779
    %3988 = vmatprep.subr.bf16.mxu0 %v3784
    %3989 = vmatpush1.bf16.msra.mxu0 %v3783
    %3990 = vmatprep.subr.bf16.mxu0 %v3788
    %3991 = vmatpush1.bf16.msra.mxu0 %v3787
    %3992 = vmatprep.mubr.bf16.mxu0 %v3128
    %3993 = vmatmul.mubr.bf16.gmra.mrb[0].mxu0 %v3127
    %v3994 = vpop.f32.mrb[0].mxu0
    %v3995 = vadd.f32 %v3954, %v3994
    %v3996 = vpop.f32.mrb[0].mxu0
    %v3997 = vadd.f32 %v3956, %v3996
    %v3998 = vpop.f32.mrb[0].mxu0
    %v3999 = vpop.f32.mrb[0].mxu0
    %4000 = vdwg.mxu0
    %4001 = vmatprep.subr.bf16.mxu0 %v3666
    %4002 = vmatpush1.bf16.msra.mxu0 %v3665
    %4003 = vmatprep.subr.bf16.mxu0 %v3670
    %4004 = vmatpush1.bf16.msra.mxu0 %v3669
    %4005 = vmatprep.subr.bf16.mxu0 %v3674
    %4006 = vmatpush1.bf16.msra.mxu0 %v3673
    %4007 = vmatprep.subr.bf16.mxu0 %v3678
    %4008 = vmatpush1.bf16.msra.mxu0 %v3677
    %4009 = vmatprep.subr.bf16.mxu0 %v3682
    %4010 = vmatpush1.bf16.msra.mxu0 %v3681
    %4011 = vmatprep.subr.bf16.mxu0 %v3686
    %4012 = vmatpush1.bf16.msra.mxu0 %v3685
    %4013 = vmatprep.subr.bf16.mxu0 %v3690
    %4014 = vmatpush1.bf16.msra.mxu0 %v3689
    %4015 = vmatprep.subr.bf16.mxu0 %v3694
    %4016 = vmatpush1.bf16.msra.mxu0 %v3693
    %4017 = vmatprep.subr.bf16.mxu0 %v3698
    %4018 = vmatpush1.bf16.msra.mxu0 %v3697
    %4019 = vmatprep.subr.bf16.mxu0 %v3702
    %4020 = vmatpush1.bf16.msra.mxu0 %v3701
    %4021 = vmatprep.subr.bf16.mxu0 %v3706
    %4022 = vmatpush1.bf16.msra.mxu0 %v3705
    %4023 = vmatprep.subr.bf16.mxu0 %v3710
    %4024 = vmatpush1.bf16.msra.mxu0 %v3709
    %4025 = vmatprep.subr.bf16.mxu0 %v3714
    %4026 = vmatpush1.bf16.msra.mxu0 %v3713
    %4027 = vmatprep.subr.bf16.mxu0 %v3718
    %4028 = vmatpush1.bf16.msra.mxu0 %v3717
    %4029 = vmatprep.subr.bf16.mxu0 %v3722
    %4030 = vmatpush1.bf16.msra.mxu0 %v3721
    %4031 = vmatprep.subr.bf16.mxu0 %v3726
    %4032 = vmatpush1.bf16.msra.mxu0 %v3725
    %4033 = vmatprep.mubr.bf16.mxu0 %v3126
    %4034 = vmatmul.mubr.bf16.gmra.mrb[0].mxu0 %v3125
    %v4035 = vpop.f32.mrb[0].mxu0
    %v4036 = vadd.f32 %v3270, %v4035
    %v4037 = vpop.f32.mrb[0].mxu0
    %v4038 = vadd.f32 %v3274, %v4037
    %v4039 = vpop.f32.mrb[0].mxu0
    %v4040 = vpop.f32.mrb[0].mxu0
    %4041 = vdwg.mxu0
    %4042 = vmatprep.subr.bf16.mxu0 %v3730
    %4043 = vmatpush1.bf16.msra.mxu0 %v3729
    %4044 = vmatprep.subr.bf16.mxu0 %v3734
    %4045 = vmatpush1.bf16.msra.mxu0 %v3733
    %4046 = vmatprep.subr.bf16.mxu0 %v3738
    %4047 = vmatpush1.bf16.msra.mxu0 %v3737
    %4048 = vmatprep.subr.bf16.mxu0 %v3742
    %4049 = vmatpush1.bf16.msra.mxu0 %v3741
    %4050 = vmatprep.subr.bf16.mxu0 %v3746
    %4051 = vmatpush1.bf16.msra.mxu0 %v3745
    %4052 = vmatprep.subr.bf16.mxu0 %v3750
    %4053 = vmatpush1.bf16.msra.mxu0 %v3749
    %4054 = vmatprep.subr.bf16.mxu0 %v3754
    %4055 = vmatpush1.bf16.msra.mxu0 %v3753
    %4056 = vmatprep.subr.bf16.mxu0 %v3758
    %4057 = vmatpush1.bf16.msra.mxu0 %v3757
    %4058 = vmatprep.subr.bf16.mxu0 %v3762
    %4059 = vmatpush1.bf16.msra.mxu0 %v3761
    %4060 = vmatprep.subr.bf16.mxu0 %v3766
    %4061 = vmatpush1.bf16.msra.mxu0 %v3765
    %4062 = vmatprep.subr.bf16.mxu0 %v3770
    %4063 = vmatpush1.bf16.msra.mxu0 %v3769
    %4064 = vmatprep.subr.bf16.mxu0 %v3774
    %4065 = vmatpush1.bf16.msra.mxu0 %v3773
    %4066 = vmatprep.subr.bf16.mxu0 %v3778
    %4067 = vmatpush1.bf16.msra.mxu0 %v3777
    %4068 = vmatprep.subr.bf16.mxu0 %v3782
    %4069 = vmatpush1.bf16.msra.mxu0 %v3781
    %4070 = vmatprep.subr.bf16.mxu0 %v3786
    %4071 = vmatpush1.bf16.msra.mxu0 %v3785
    %4072 = vmatprep.subr.bf16.mxu0 %v3790
    %4073 = vmatpush1.bf16.msra.mxu0 %v3789
    %4074 = vmatprep.mubr.bf16.mxu0 %v3128
    %4075 = vmatmul.mubr.bf16.gmra.mrb[0].mxu0 %v3127
    %v4076 = vpop.f32.mrb[0].mxu0
    %v4077 = vadd.f32 %v4036, %v4076
    %v4078 = vpop.f32.mrb[0].mxu0
    %v4079 = vadd.f32 %v4038, %v4078
    %v4080 = vpop.f32.mrb[0].mxu0
    %v4081 = vpop.f32.mrb[0].mxu0
    %4082 = vdwg.mxu0
    %v4083 = vmax.f32 %v3995, 0.0
    %v4084 = vmax.f32 %v3997, 0.0
    %v4085 = vmax.f32 %v4077, 0.0
    %v4086 = vmax.f32 %v4079, 0.0
    %v4087 = vpack.c.bf16 %v4083, %v4083
    %v4088 = vpack.c.bf16 %v4084, %v4084
    %v4089 = vpack.c.bf16 %v4085, %v4085
    %v4090 = vpack.c.bf16 %v4086, %v4086
    %v4091 = vld [vmem:[%s11] sm:$0xf]
    %v4092 = vld [vmem:[%s11 + $0x4] sm:$0xf]
    %v4093 = vld [vmem:[%s11 + $0x8] sm:$0xf]
    %v4094 = vld [vmem:[%s11 + $0xc] sm:$0xf]
    %v4095 = vld [vmem:[%s11 + $0x10] sm:$0xf]
    %v4096 = vld [vmem:[%s11 + $0x14] sm:$0xf]
    %v4097 = vld [vmem:[%s11 + $0x18] sm:$0xf]
    %v4098 = vld [vmem:[%s11 + $0x1c] sm:$0xf]
    %v4099 = vld [vmem:[%s11 + $0x20] sm:$0xf]
    %v4100 = vld [vmem:[%s11 + $0x24] sm:$0xf]
    %v4101 = vld [vmem:[%s11 + $0x28] sm:$0xf]
    %v4102 = vld [vmem:[%s11 + $0x2c] sm:$0xf]
    %v4103 = vld [vmem:[%s11 + $0x30] sm:$0xf]
    %v4104 = vld [vmem:[%s11 + $0x34] sm:$0xf]
    %v4105 = vld [vmem:[%s11 + $0x38] sm:$0xf]
    %v4106 = vld [vmem:[%s11 + $0x3c] sm:$0xf]
    %v4107 = vld [vmem:[%s11 + $0x40] sm:$0xf]
    %v4108 = vld [vmem:[%s11 + $0x44] sm:$0xf]
    %v4109 = vld [vmem:[%s11 + $0x48] sm:$0xf]
    %v4110 = vld [vmem:[%s11 + $0x4c] sm:$0xf]
    %v4111 = vld [vmem:[%s11 + $0x50] sm:$0xf]
    %v4112 = vld [vmem:[%s11 + $0x54] sm:$0xf]
    %v4113 = vld [vmem:[%s11 + $0x58] sm:$0xf]
    %v4114 = vld [vmem:[%s11 + $0x5c] sm:$0xf]
    %v4115 = vld [vmem:[%s11 + $0x60] sm:$0xf]
    %v4116 = vld [vmem:[%s11 + $0x64] sm:$0xf]
    %v4117 = vld [vmem:[%s11 + $0x68] sm:$0xf]
    %v4118 = vld [vmem:[%s11 + $0x6c] sm:$0xf]
    %v4119 = vld [vmem:[%s11 + $0x70] sm:$0xf]
    %v4120 = vld [vmem:[%s11 + $0x74] sm:$0xf]
    %v4121 = vld [vmem:[%s11 + $0x78] sm:$0xf]
    %v4122 = vld [vmem:[%s11 + $0x7c] sm:$0xf]
    %v4123 = vld [vmem:[%s11 + $0x80] sm:$0xf]
    %v4124 = vld [vmem:[%s11 + $0x84] sm:$0xf]
    %v4125 = vld [vmem:[%s11 + $0x88] sm:$0xf]
    %v4126 = vld [vmem:[%s11 + $0x8c] sm:$0xf]
    %v4127 = vld [vmem:[%s11 + $0x90] sm:$0xf]
    %v4128 = vld [vmem:[%s11 + $0x94] sm:$0xf]
    %v4129 = vld [vmem:[%s11 + $0x98] sm:$0xf]
    %v4130 = vld [vmem:[%s11 + $0x9c] sm:$0xf]
    %v4131 = vld [vmem:[%s11 + $0xa0] sm:$0xf]
    %v4132 = vld [vmem:[%s11 + $0xa4] sm:$0xf]
    %v4133 = vld [vmem:[%s11 + $0xa8] sm:$0xf]
    %v4134 = vld [vmem:[%s11 + $0xac] sm:$0xf]
    %v4135 = vld [vmem:[%s11 + $0xb0] sm:$0xf]
    %v4136 = vld [vmem:[%s11 + $0xb4] sm:$0xf]
    %v4137 = vld [vmem:[%s11 + $0xb8] sm:$0xf]
    %v4138 = vld [vmem:[%s11 + $0xbc] sm:$0xf]
    %v4139 = vld [vmem:[%s11 + $0xc0] sm:$0xf]
    %v4140 = vld [vmem:[%s11 + $0xc4] sm:$0xf]
    %v4141 = vld [vmem:[%s11 + $0xc8] sm:$0xf]
    %v4142 = vld [vmem:[%s11 + $0xcc] sm:$0xf]
    %v4143 = vld [vmem:[%s11 + $0xd0] sm:$0xf]
    %v4144 = vld [vmem:[%s11 + $0xd4] sm:$0xf]
    %v4145 = vld [vmem:[%s11 + $0xd8] sm:$0xf]
    %v4146 = vld [vmem:[%s11 + $0xdc] sm:$0xf]
    %v4147 = vld [vmem:[%s11 + $0xe0] sm:$0xf]
    %v4148 = vld [vmem:[%s11 + $0xe4] sm:$0xf]
    %v4149 = vld [vmem:[%s11 + $0xe8] sm:$0xf]
    %v4150 = vld [vmem:[%s11 + $0xec] sm:$0xf]
    %v4151 = vld [vmem:[%s11 + $0xf0] sm:$0xf]
    %v4152 = vld [vmem:[%s11 + $0xf4] sm:$0xf]
    %v4153 = vld [vmem:[%s11 + $0xf8] sm:$0xf]
    %v4154 = vld [vmem:[%s11 + $0xfc] sm:$0xf]
    %v4155 = vld [vmem:[%s12] sm:$0x1]
    %v4157 = vlaneseq
    %v4158 = vshrl.u32 %v4157, 7
    %v4159 = vsub.s32 0, %v4158
    %v4160 = vrot.slane %v4155, %v4159
    %v4226 = vunpack.c.l.b16 %v4091
    %v4227 = vunpack.c.l.b16 %v4092
    %v4228 = vunpack.c.l.b16 %v4093
    %v4229 = vunpack.c.l.b16 %v4094
    %v4230 = vunpack.c.l.b16 %v4095
    %v4231 = vunpack.c.l.b16 %v4096
    %v4232 = vunpack.c.l.b16 %v4097
    %v4233 = vunpack.c.l.b16 %v4098
    %v4234 = vunpack.c.l.b16 %v4099
    %v4235 = vunpack.c.l.b16 %v4100
    %v4236 = vunpack.c.l.b16 %v4101
    %v4237 = vunpack.c.l.b16 %v4102
    %v4238 = vunpack.c.l.b16 %v4103
    %v4239 = vunpack.c.l.b16 %v4104
    %v4240 = vunpack.c.l.b16 %v4105
    %v4241 = vunpack.c.l.b16 %v4106
    %v4242 = vunpack.c.l.b16 %v4107
    %v4243 = vunpack.c.l.b16 %v4108
    %v4244 = vunpack.c.l.b16 %v4109
    %v4245 = vunpack.c.l.b16 %v4110
    %v4246 = vunpack.c.l.b16 %v4111
    %v4247 = vunpack.c.l.b16 %v4112
    %v4248 = vunpack.c.l.b16 %v4113
    %v4249 = vunpack.c.l.b16 %v4114
    %v4250 = vunpack.c.l.b16 %v4115
    %v4251 = vunpack.c.l.b16 %v4116
    %v4252 = vunpack.c.l.b16 %v4117
    %v4253 = vunpack.c.l.b16 %v4118
    %v4254 = vunpack.c.l.b16 %v4119
    %v4255 = vunpack.c.l.b16 %v4120
    %v4256 = vunpack.c.l.b16 %v4121
    %v4257 = vunpack.c.l.b16 %v4122
    %v4258 = vunpack.c.l.b16 %v4123
    %v4259 = vunpack.c.l.b16 %v4124
    %v4260 = vunpack.c.l.b16 %v4125
    %v4261 = vunpack.c.l.b16 %v4126
    %v4262 = vunpack.c.l.b16 %v4127
    %v4263 = vunpack.c.l.b16 %v4128
    %v4264 = vunpack.c.l.b16 %v4129
    %v4265 = vunpack.c.l.b16 %v4130
    %v4266 = vunpack.c.l.b16 %v4131
    %v4267 = vunpack.c.l.b16 %v4132
    %v4268 = vunpack.c.l.b16 %v4133
    %v4269 = vunpack.c.l.b16 %v4134
    %v4270 = vunpack.c.l.b16 %v4135
    %v4271 = vunpack.c.l.b16 %v4136
    %v4272 = vunpack.c.l.b16 %v4137
    %v4273 = vunpack.c.l.b16 %v4138
    %v4274 = vunpack.c.l.b16 %v4139
    %v4275 = vunpack.c.l.b16 %v4140
    %v4276 = vunpack.c.l.b16 %v4141
    %v4277 = vunpack.c.l.b16 %v4142
    %v4278 = vunpack.c.l.b16 %v4143
    %v4279 = vunpack.c.l.b16 %v4144
    %v4280 = vunpack.c.l.b16 %v4145
    %v4281 = vunpack.c.l.b16 %v4146
    %v4282 = vunpack.c.l.b16 %v4147
    %v4283 = vunpack.c.l.b16 %v4148
    %v4284 = vunpack.c.l.b16 %v4149
    %v4285 = vunpack.c.l.b16 %v4150
    %v4286 = vunpack.c.l.b16 %v4151
    %v4287 = vunpack.c.l.b16 %v4152
    %v4288 = vunpack.c.l.b16 %v4153
    %v4289 = vunpack.c.l.b16 %v4154
    %v4290 = vpack.c.b16 %v4227, %v4226
    %v4291 = vpack.c.b16 %v4229, %v4228
    %v4292 = vpack.c.b16 %v4231, %v4230
    %v4293 = vpack.c.b16 %v4233, %v4232
    %v4294 = vpack.c.b16 %v4235, %v4234
    %v4295 = vpack.c.b16 %v4237, %v4236
    %v4296 = vpack.c.b16 %v4239, %v4238
    %v4297 = vpack.c.b16 %v4241, %v4240
    %v4298 = vpack.c.b16 %v4243, %v4242
    %v4299 = vpack.c.b16 %v4245, %v4244
    %v4300 = vpack.c.b16 %v4247, %v4246
    %v4301 = vpack.c.b16 %v4249, %v4248
    %v4302 = vpack.c.b16 %v4251, %v4250
    %v4303 = vpack.c.b16 %v4253, %v4252
    %v4304 = vpack.c.b16 %v4255, %v4254
    %v4305 = vpack.c.b16 %v4257, %v4256
    %v4306 = vpack.c.b16 %v4259, %v4258
    %v4307 = vpack.c.b16 %v4261, %v4260
    %v4308 = vpack.c.b16 %v4263, %v4262
    %v4309 = vpack.c.b16 %v4265, %v4264
    %v4310 = vpack.c.b16 %v4267, %v4266
    %v4311 = vpack.c.b16 %v4269, %v4268
    %v4312 = vpack.c.b16 %v4271, %v4270
    %v4313 = vpack.c.b16 %v4273, %v4272
    %v4314 = vpack.c.b16 %v4275, %v4274
    %v4315 = vpack.c.b16 %v4277, %v4276
    %v4316 = vpack.c.b16 %v4279, %v4278
    %v4317 = vpack.c.b16 %v4281, %v4280
    %v4318 = vpack.c.b16 %v4283, %v4282
    %v4319 = vpack.c.b16 %v4285, %v4284
    %v4320 = vpack.c.b16 %v4287, %v4286
    %v4321 = vpack.c.b16 %v4289, %v4288
    %4354 = vmatprep.subr.bf16.mxu0 0
    %4355 = vmatpush1.bf16.msra.mxu0 %v4290
    %4356 = vmatprep.subr.bf16.mxu0 0
    %4357 = vmatpush1.bf16.msra.mxu0 %v4291
    %4358 = vmatprep.subr.bf16.mxu0 0
    %4359 = vmatpush1.bf16.msra.mxu0 %v4292
    %4360 = vmatprep.subr.bf16.mxu0 0
    %4361 = vmatpush1.bf16.msra.mxu0 %v4293
    %4362 = vmatprep.subr.bf16.mxu0 0
    %4363 = vmatpush1.bf16.msra.mxu0 %v4294
    %4364 = vmatprep.subr.bf16.mxu0 0
    %4365 = vmatpush1.bf16.msra.mxu0 %v4295
    %4366 = vmatprep.subr.bf16.mxu0 0
    %4367 = vmatpush1.bf16.msra.mxu0 %v4296
    %4368 = vmatprep.subr.bf16.mxu0 0
    %4369 = vmatpush1.bf16.msra.mxu0 %v4297
    %4370 = vmatprep.subr.bf16.mxu0 0
    %4371 = vmatpush1.bf16.msra.mxu0 %v4298
    %4372 = vmatprep.subr.bf16.mxu0 0
    %4373 = vmatpush1.bf16.msra.mxu0 %v4299
    %4374 = vmatprep.subr.bf16.mxu0 0
    %4375 = vmatpush1.bf16.msra.mxu0 %v4300
    %4376 = vmatprep.subr.bf16.mxu0 0
    %4377 = vmatpush1.bf16.msra.mxu0 %v4301
    %4378 = vmatprep.subr.bf16.mxu0 0
    %4379 = vmatpush1.bf16.msra.mxu0 %v4302
    %4380 = vmatprep.subr.bf16.mxu0 0
    %4381 = vmatpush1.bf16.msra.mxu0 %v4303
    %4382 = vmatprep.subr.bf16.mxu0 0
    %4383 = vmatpush1.bf16.msra.mxu0 %v4304
    %4384 = vmatprep.subr.bf16.mxu0 0
    %4385 = vmatpush1.bf16.msra.mxu0 %v4305
    %4386 = vmatprep.mubr.bf16.mxu0 %v4088
    %4387 = vmatmul.mubr.bf16.gmra.mrb[0].mxu0 %v4087
    %v4388 = vpop.f32.mrb[0].mxu0
    %v4389 = vadd.f32 %v4160, %v4388
    %v4390 = vpop.f32.mrb[0].mxu0
    %v4391 = vpop.f32.mrb[0].mxu0
    %v4392 = vpop.f32.mrb[0].mxu0
    %4393 = vdwg.mxu0
    %4394 = vmatprep.subr.bf16.mxu0 0
    %4395 = vmatpush1.bf16.msra.mxu0 %v4306
    %4396 = vmatprep.subr.bf16.mxu0 0
    %4397 = vmatpush1.bf16.msra.mxu0 %v4307
    %4398 = vmatprep.subr.bf16.mxu0 0
    %4399 = vmatpush1.bf16.msra.mxu0 %v4308
    %4400 = vmatprep.subr.bf16.mxu0 0
    %4401 = vmatpush1.bf16.msra.mxu0 %v4309
    %4402 = vmatprep.subr.bf16.mxu0 0
    %4403 = vmatpush1.bf16.msra.mxu0 %v4310
    %4404 = vmatprep.subr.bf16.mxu0 0
    %4405 = vmatpush1.bf16.msra.mxu0 %v4311
    %4406 = vmatprep.subr.bf16.mxu0 0
    %4407 = vmatpush1.bf16.msra.mxu0 %v4312
    %4408 = vmatprep.subr.bf16.mxu0 0
    %4409 = vmatpush1.bf16.msra.mxu0 %v4313
    %4410 = vmatprep.subr.bf16.mxu0 0
    %4411 = vmatpush1.bf16.msra.mxu0 %v4314
    %4412 = vmatprep.subr.bf16.mxu0 0
    %4413 = vmatpush1.bf16.msra.mxu0 %v4315
    %4414 = vmatprep.subr.bf16.mxu0 0
    %4415 = vmatpush1.bf16.msra.mxu0 %v4316
    %4416 = vmatprep.subr.bf16.mxu0 0
    %4417 = vmatpush1.bf16.msra.mxu0 %v4317
    %4418 = vmatprep.subr.bf16.mxu0 0
    %4419 = vmatpush1.bf16.msra.mxu0 %v4318
    %4420 = vmatprep.subr.bf16.mxu0 0
    %4421 = vmatpush1.bf16.msra.mxu0 %v4319
    %4422 = vmatprep.subr.bf16.mxu0 0
    %4423 = vmatpush1.bf16.msra.mxu0 %v4320
    %4424 = vmatprep.subr.bf16.mxu0 0
    %4425 = vmatpush1.bf16.msra.mxu0 %v4321
    %4426 = vmatprep.mubr.bf16.mxu0 %v4090
    %4427 = vmatmul.mubr.bf16.gmra.mrb[0].mxu0 %v4089
    %v4428 = vpop.f32.mrb[0].mxu0
    %v4429 = vadd.f32 %v4389, %v4428
    %v4430 = vpop.f32.mrb[0].mxu0
    %v4431 = vpop.f32.mrb[0].mxu0
    %v4432 = vpop.f32.mrb[0].mxu0
    %4433 = vdwg.mxu0
    %vm4434 = vcmask 195584
    %4435 = vst.msk [vmem:[#allocation10] sm:$0xff] %vm4434, %v4429
    // Predicated region
    $region70: #{tpu_custom_call.1} parent=1 // pred_check
      _
    $region71: #{tpu_custom_call.1} parent=1 // pred_check_branch
      %4437 = sbr.rel (0) target = $region73
    $region72: #{tpu_custom_call.1} parent=1 // pred_region
      %s4439 = ssub.s32 128, 128
      %4440 = vsyncadd [#allocation4], %s4439
      %s4442 = sshll.u32 [#allocation10], 4
      %s4443 = int_to_ptr.vmem [resolvable:$true] %s4442
      %4445 = dma.vmem_to_hbm [thread:$0]  %s4443, 128, %s13, [#allocation4]
    $region73: #{tpu_custom_call.1} parent=1 // pred_fallthru
      _
    // Predicated region
    $region74: #{tpu_custom_call.1} parent=1 // pred_check
      _
    $region75: #{tpu_custom_call.1} parent=1 // pred_check_branch
      %4447 = sbr.rel (0) target = $region77
    $region76: #{tpu_custom_call.1} parent=1 // pred_region
      %4448 = dma.done [#allocation4], 128
    $region77: #{tpu_custom_call.1} parent=1 // pred_fallthru
      _
    %4449 = vsyncpa [#allocation3], 1
    %4450 = vsyncpa [#allocation6], 1
    %4451 = vsyncpa [#allocation9], 1
    %4452 = vsyncpa [#allocation4], 1

</llo_original>
